<compile_context>
chip_gen: v7x
topology: tpu7x:2x2x1
jax: 0.10.0
libtpu: 0.0.40
codegen_flags: <defaults>
</compile_context>

<pallas_src>
import functools

import jax
import jax.numpy as jnp
from jax.experimental import pallas as pl
from jax.experimental.pallas import tpu as pltpu


# ---------------------------- in-kernel helpers (pure jnp on VMEM values) ----------------------------

def _add_ln(a, b, g, beta):
    """LayerNorm(a + b) over the last dim, eps=1e-5 (biased variance, as in PyTorch)."""
    x = a + b
    mean = jnp.mean(x, axis=-1, keepdims=True)
    var = jnp.mean(jnp.square(x - mean), axis=-1, keepdims=True)
    return (x - mean) * jax.lax.rsqrt(var + 1e-5) * g + beta


def _mha(q_in, kv_in, bias, wq, wkv, wo, bo, *, heads, scale):
    """Multi-head attention on lane-dense (L, E) activations.

    q_in: (Lq, E) f32, kv_in: (Lk, E) f32, bias: (Lq, Lk) f32 additive (0 or -1e25).
    wq: (E, E) bf16 block-diag per-head query weight, wkv: (E, 2E) bf16 = [blockdiag Wk | Wv],
    wo: (E, E) bf16 output weight, bo: (1, E) f32 output bias.
    """
    Lq, E = q_in.shape
    D = E // heads
    # Fused lane-dense projections (bf16 operands, f32 accumulation on the MXU).
    # Scale (1/sqrt(embed_size), as in the reference) folded into q before QK^T.
    q = jnp.dot(q_in.astype(jnp.bfloat16), wq, preferred_element_type=jnp.float32) * scale
    kv = jnp.dot(kv_in.astype(jnp.bfloat16), wkv, preferred_element_type=jnp.float32)
    qb = q.astype(jnp.bfloat16)
    kb = kv[:, :E].astype(jnp.bfloat16)
    vb = kv[:, E:].astype(jnp.bfloat16)

    score_dims = (((1,), (1,)), ((), ()))   # q @ k.T without materializing a transpose
    acc = jnp.zeros((Lq, E), jnp.float32)
    # TODO(synk): for real head_dim (64/128) move heads onto the sublane axis and use the raw
    #             shared (D, D) weights (drop the block-diagonal kron) before scaling up (v7x VMEM).
    for h in range(heads):                  # statically unrolled
        sl = slice(h * D, (h + 1) * D)
        s = jax.lax.dot_general(qb[:, sl], kb[:, sl], score_dims,
                                preferred_element_type=jnp.float32) + bias      # (Lq, Lk)
        s = s - jnp.max(s, axis=-1, keepdims=True)
        p = jnp.exp(s)
        denom = jnp.sum(p, axis=-1, keepdims=True)
        r = pl.reciprocal(denom, approx=True)   # EUP slot
        r = r * (2.0 - denom * r)               # one Newton step -> near-exact normalization
        p = p * r
        ctx = jnp.dot(p.astype(jnp.bfloat16), vb[:, sl],
                      preferred_element_type=jnp.float32)                       # (Lq, D)
        acc = acc + jnp.dot(ctx.astype(jnp.bfloat16), wo[sl, :],
                            preferred_element_type=jnp.float32)                 # (Lq, E)
    return acc + bo


# ---------------------------- fused whole-decoder kernel ----------------------------

def _decoder_kernel(emb_ref, enc_ref, tbias_ref, sbias_ref,
                    sa_wq, sa_wkv, sa_wo,
                    ca_wq, ca_wkv, ca_wo,
                    ff_w1, ff_w2, ff_b1, vecs_ref,
                    fc_w, fc_b,
                    logits_ref, x_scr, *, heads, scale):
    l = pl.program_id(1)

    @pl.when(l == 0)
    def _():
        x_scr[...] = emb_ref[...]           # start of the layer stack for this batch element

    x = x_scr[...]                          # (L, E) f32, carried across the layer grid axis
    enc = enc_ref[...]                      # (Lenc, E)
    tbias = tbias_ref[...]                  # (L, L) additive causal-mask bias
    sbias = sbias_ref[...]                  # (L, Lenc) additive src-mask bias
    vecs = vecs_ref[...]                    # (9, E) packed per-layer vectors
    sa_bo, n_g, n_b = vecs[0:1], vecs[1:2], vecs[2:3]
    ca_bo, n1_g, n1_b = vecs[3:4], vecs[4:5], vecs[5:6]
    ff_b2, n2_g, n2_b = vecs[6:7], vecs[7:8], vecs[8:9]

    # masked self-attention + residual + LN
    attn = _mha(x, x, tbias, sa_wq[...], sa_wkv[...], sa_wo[...], sa_bo,
                heads=heads, scale=scale)
    query = _add_ln(attn, x, n_g, n_b)

    # cross-attention (value = key = enc_out) + residual + LN
    attn2 = _mha(query, enc, sbias, ca_wq[...], ca_wkv[...], ca_wo[...], ca_bo,
                 heads=heads, scale=scale)
    x2 = _add_ln(attn2, query, n1_g, n1_b)

    # feed-forward + residual + LN
    # TODO(synk): for scaled E / forward_expansion, tile the hidden dim with a f32 VMEM
    #             accumulator (pl.when init/finalize) to respect v7x's 64 MiB VMEM budget.
    h = jnp.maximum(jnp.dot(x2.astype(jnp.bfloat16), ff_w1[...],
                            preferred_element_type=jnp.float32) + ff_b1[...], 0.0)
    ff = jnp.dot(h.astype(jnp.bfloat16), ff_w2[...],
                 preferred_element_type=jnp.float32) + ff_b2
    out = _add_ln(ff, x2, n2_g, n2_b)
    x_scr[...] = out

    # vocab projection folded into the last layer step (lane-dense 128-padded output block)
    @pl.when(l == pl.num_programs(1) - 1)
    def _():
        logits_ref[...] = (jnp.dot(out.astype(jnp.bfloat16), fc_w[...],
                                   preferred_element_type=jnp.float32) + fc_b[...])


# ---------------------------- wrapper ----------------------------

def decoder_forward(packed, tokens, enc_out, src_mask, target_mask, *, heads, vocab):
    N, L = tokens.shape
    E = packed["embedding"].shape[1]
    Lenc = enc_out.shape[1]
    n_layers, _, hidden = packed["ff_w1"].shape
    vpad = packed["fc_w"].shape[1]
    scale = 1.0 / float(E) ** 0.5

    # Token + positional embedding (one XLA gather + add; dropout == identity in eval).
    emb = (jnp.take(packed["embedding"], tokens, axis=0)
           + packed["pos_embedding"][:L][None, :, :]).astype(jnp.float32)        # (N, L, E)
    # Masks -> additive score biases, computed ONCE (shared by every layer & head).
    tbias = jnp.where(target_mask[:, 0] == 0, -1e25, 0.0).astype(jnp.float32)    # (N, L, L)
    sbias = jnp.where(src_mask[:, 0] == 0, -1e25, 0.0).astype(jnp.float32)       # (N, L, Lenc)

    def batch_spec(*shape):
        return pl.BlockSpec((None,) + shape, lambda n, l: (n,) + (0,) * len(shape))

    def layer_spec(*shape):
        return pl.BlockSpec((None,) + shape, lambda n, l: (l,) + (0,) * len(shape))

    def const_spec(*shape):
        return pl.BlockSpec(shape, lambda n, l: (0,) * len(shape))

    kernel = functools.partial(_decoder_kernel, heads=heads, scale=scale)
    logits = pl.pallas_call(
        kernel,
        out_shape=jax.ShapeDtypeStruct((N, L, vpad), jnp.float32),
        grid=(N, n_layers),
        in_specs=[
            batch_spec(L, E),          # emb (fetched once per n; constant over l)
            batch_spec(Lenc, E),       # enc_out
            batch_spec(L, L),          # target-mask additive bias
            batch_spec(L, Lenc),       # src-mask additive bias
            layer_spec(E, E),          # sa_wq
            layer_spec(E, 2 * E),      # sa_wkv
            layer_spec(E, E),          # sa_wo
            layer_spec(E, E),          # ca_wq
            layer_spec(E, 2 * E),      # ca_wkv
            layer_spec(E, E),          # ca_wo
            layer_spec(E, hidden),     # ff_w1
            layer_spec(hidden, E),     # ff_w2
            layer_spec(1, hidden),     # ff_b1
            layer_spec(9, E),          # packed per-layer (1, E) vectors
            const_spec(E, vpad),       # fc_w (resident, fetched once)
            const_spec(1, vpad),       # fc_b
        ],
        out_specs=pl.BlockSpec((None, L, vpad), lambda n, l: (n, 0, 0)),
        scratch_shapes=[pltpu.VMEM((L, E), jnp.float32)],
        compiler_params=pltpu.CompilerParams(
            dimension_semantics=("parallel", "arbitrary")),
    )(emb, enc_out.astype(jnp.float32), tbias, sbias,
      packed["sa_wq"], packed["sa_wkv"], packed["sa_wo"],
      packed["ca_wq"], packed["ca_wkv"], packed["ca_wo"],
      packed["ff_w1"], packed["ff_w2"], packed["ff_b1"], packed["vecs"],
      packed["fc_w"], packed["fc_b"])
    return logits[:, :, :vocab]


# ---------------------------- parameter init & packing ----------------------------

def init_decoder_params(key, vocab, E, n_layers, heads, fe, max_len):
    D = E // heads
    ks = iter(jax.random.split(key, 256))

    def w(shape, scale=0.05):
        return (scale * jax.random.normal(next(ks), shape)).astype(jnp.float32)

    def attn_params():
        return dict(wv=w((D, D)), wk=w((D, D)), wq=w((D, D)),
                    wo=w((E, E)), bo=w((E,)))

    layers = []
    for _ in range(n_layers):
        layers.append(dict(
            self_attn=attn_params(),
            norm_g=jnp.ones((E,), jnp.float32), norm_b=jnp.zeros((E,), jnp.float32),
            tb_attn=attn_params(),
            norm1_g=jnp.ones((E,), jnp.float32), norm1_b=jnp.zeros((E,), jnp.float32),
            norm2_g=jnp.ones((E,), jnp.float32), norm2_b=jnp.zeros((E,), jnp.float32),
            ff_w1=w((E, fe * E)), ff_b1=w((fe * E,)),
            ff_w2=w((fe * E, E)), ff_b2=w((E,)),
        ))
    return dict(
        embedding=w((vocab, E), 0.1),
        pos_embedding=w((max_len, E), 0.1),
        layers=layers,
        fc_w=w((E, vocab)), fc_b=w((vocab,)),
    )


def pack_params(raw, heads):
    """One-time host-side repack for the fused kernel.

    * per-layer weights stacked on a leading layer dim (indexed by the layer grid axis),
    * shared per-head (D, D) Q/K/V weights folded into block-diagonal (E, E)/(E, 2E) bf16
      weights so each projection is a single wide MXU matmul,
    * the nine (E,) per-layer vectors packed into one (9, E) f32 array (fewer DMA streams),
    * vocab head zero-padded to a lane-dense multiple of 128, stored bf16.
    """
    E = raw["embedding"].shape[1]
    eye = jnp.eye(heads, dtype=jnp.float32)

    def bd(wdd):                       # shared (D, D) per-head -> (E, E) block-diagonal
        return jnp.kron(eye, wdd)

    def stack(fn, dtype):
        return jnp.stack([fn(p) for p in raw["layers"]]).astype(dtype)

    packed = dict(
        embedding=raw["embedding"],
        pos_embedding=raw["pos_embedding"],
        sa_wq=stack(lambda p: bd(p["self_attn"]["wq"]), jnp.bfloat16),
        sa_wkv=stack(lambda p: jnp.concatenate(
            [bd(p["self_attn"]["wk"]), bd(p["self_attn"]["wv"])], axis=1), jnp.bfloat16),
        sa_wo=stack(lambda p: p["self_attn"]["wo"], jnp.bfloat16),
        ca_wq=stack(lambda p: bd(p["tb_attn"]["wq"]), jnp.bfloat16),
        ca_wkv=stack(lambda p: jnp.concatenate(
            [bd(p["tb_attn"]["wk"]), bd(p["tb_attn"]["wv"])], axis=1), jnp.bfloat16),
        ca_wo=stack(lambda p: p["tb_attn"]["wo"], jnp.bfloat16),
        ff_w1=stack(lambda p: p["ff_w1"], jnp.bfloat16),
        ff_w2=stack(lambda p: p["ff_w2"], jnp.bfloat16),
        ff_b1=stack(lambda p: p["ff_b1"].reshape(1, -1), jnp.float32),
        vecs=stack(lambda p: jnp.stack([
            p["self_attn"]["bo"], p["norm_g"], p["norm_b"],
            p["tb_attn"]["bo"], p["norm1_g"], p["norm1_b"],
            p["ff_b2"], p["norm2_g"], p["norm2_b"]]), jnp.float32),
    )
    vocab = raw["fc_w"].shape[1]
    vpad = ((vocab + 127) // 128) * 128
    packed["fc_w"] = jnp.zeros((E, vpad), jnp.float32).at[:, :vocab].set(
        raw["fc_w"]).astype(jnp.bfloat16)
    packed["fc_b"] = jnp.zeros((1, vpad), jnp.float32).at[:, :vocab].set(
        raw["fc_b"].reshape(1, -1))
    return packed


# ---------------------------- pure-JAX reference (semantics check, f32) ----------------------------

def reference_forward(raw, tokens, enc_out, src_mask, target_mask, *, heads):
    E = raw["embedding"].shape[1]
    N, L = tokens.shape
    D = E // heads

    def mha(values, keys, query, mask, a):
        Lq, Lk = query.shape[1], keys.shape[1]
        v = values.reshape(N, Lk, heads, D) @ a["wv"]
        k = keys.reshape(N, Lk, heads, D) @ a["wk"]
        q = query.reshape(N, Lq, heads, D) @ a["wq"]
        s = jnp.einsum('nqhd,nkhd->nhqk', q, k)
        s = jnp.where(mask == 0, -1e25, s)
        p = jax.nn.softmax(s / jnp.sqrt(jnp.float32(E)), axis=3)
        o = jnp.einsum('nhqk,nkhd->nqhd', p, v).reshape(N, Lq, E)
        return o @ a["wo"] + a["bo"]

    def ln(x, g, b):
        m = x.mean(-1, keepdims=True)
        v = ((x - m) ** 2).mean(-1, keepdims=True)
        return (x - m) * jax.lax.rsqrt(v + 1e-5) * g + b

    out = raw["embedding"][tokens] + raw["pos_embedding"][:L][None]
    for p in raw["layers"]:
        attn = mha(out, out, out, target_mask, p["self_attn"])
        query = ln(attn + out, p["norm_g"], p["norm_b"])
        attn2 = mha(enc_out, enc_out, query, src_mask, p["tb_attn"])
        x2 = ln(attn2 + query, p["norm1_g"], p["norm1_b"])
        ff = jnp.maximum(x2 @ p["ff_w1"] + p["ff_b1"], 0.0) @ p["ff_w2"] + p["ff_b2"]
        out = ln(ff + x2, p["norm2_g"], p["norm2_b"])
    return out @ raw["fc_w"] + raw["fc_b"]


# ---------------------------- Main ----------------------------

if __name__ == "__main__":
    N, L, Lenc = 2, 8, 8
    vocab, E, n_layers, heads, fe, max_len = 50, 32, 2, 4, 2, 16

    key = jax.random.PRNGKey(0)
    kp, kt, ke = jax.random.split(key, 3)
    raw_params = init_decoder_params(kp, vocab, E, n_layers, heads, fe, max_len)
    packed = pack_params(raw_params, heads)

    tokens = jax.random.randint(kt, (N, L), 0, vocab, dtype=jnp.int32)        # x: (N, L) token ids
    enc_out = jax.random.normal(ke, (N, Lenc, E), jnp.float32)                # encoder output
    target_mask = jnp.broadcast_to(
        jnp.tril(jnp.ones((L, L), jnp.float32))[None, None], (N, 1, L, L))    # causal mask
    src_mask = jnp.ones((N, 1, L, Lenc), jnp.float32)                         # full visibility

    fwd = jax.jit(functools.partial(decoder_forward, heads=heads, vocab=vocab))
    out = fwd(packed, tokens, enc_out, src_mask, target_mask)
    jax.block_until_ready(out)

    assert out.shape == (N, L, vocab), out.shape
    assert bool(jnp.all(jnp.isfinite(out)))

    ref = reference_forward(raw_params, tokens, enc_out, src_mask, target_mask, heads=heads)
    max_err = float(jnp.max(jnp.abs(out - ref)))
    assert max_err < 5e-2, f"max abs err vs reference: {max_err}"

    print("KERNEL_OK")
</pallas_src>

<mosaic_0001>
module attributes {stable_mosaic.version = 11 : i64} {
  func.func @_decoder_kernel(%arg0: i32, %arg1: i32, %arg2: memref<1x8x32xf32, #tpu.memory_space<vmem>>, %arg3: memref<1x8x32xf32, #tpu.memory_space<vmem>>, %arg4: memref<1x8x8xf32, #tpu.memory_space<vmem>>, %arg5: memref<1x8x8xf32, #tpu.memory_space<vmem>>, %arg6: memref<1x32x32xbf16, #tpu.memory_space<vmem>>, %arg7: memref<1x32x64xbf16, #tpu.memory_space<vmem>>, %arg8: memref<1x32x32xbf16, #tpu.memory_space<vmem>>, %arg9: memref<1x32x32xbf16, #tpu.memory_space<vmem>>, %arg10: memref<1x32x64xbf16, #tpu.memory_space<vmem>>, %arg11: memref<1x32x32xbf16, #tpu.memory_space<vmem>>, %arg12: memref<1x32x64xbf16, #tpu.memory_space<vmem>>, %arg13: memref<1x64x32xbf16, #tpu.memory_space<vmem>>, %arg14: memref<1x1x64xf32, #tpu.memory_space<vmem>>, %arg15: memref<1x9x32xf32, #tpu.memory_space<vmem>>, %arg16: memref<32x128xbf16, #tpu.memory_space<vmem>>, %arg17: memref<1x128xf32, #tpu.memory_space<vmem>>, %arg18: memref<1x8x128xf32, #tpu.memory_space<vmem>>, %arg19: memref<8x32xf32, #tpu.memory_space<vmem>>) attributes {dimension_semantics = [#tpu.dimension_semantics<parallel>, #tpu.dimension_semantics<arbitrary>], iteration_bounds = array<i64: 2, 2>, scalar_prefetch = 0 : i64, scratch_operands = 1 : i64, tpu.core_type = #tpu.core_type<tc>, window_params = [{transform_indices = @transform_0, window_bounds = array<i64: 1, 8, 32>}, {transform_indices = @transform_1, window_bounds = array<i64: 1, 8, 32>}, {transform_indices = @transform_2, window_bounds = array<i64: 1, 8, 8>}, {transform_indices = @transform_3, window_bounds = array<i64: 1, 8, 8>}, {transform_indices = @transform_4, window_bounds = array<i64: 1, 32, 32>}, {transform_indices = @transform_5, window_bounds = array<i64: 1, 32, 64>}, {transform_indices = @transform_6, window_bounds = array<i64: 1, 32, 32>}, {transform_indices = @transform_7, window_bounds = array<i64: 1, 32, 32>}, {transform_indices = @transform_8, window_bounds = array<i64: 1, 32, 64>}, {transform_indices = @transform_9, window_bounds = array<i64: 1, 32, 32>}, {transform_indices = @transform_10, window_bounds = array<i64: 1, 32, 64>}, {transform_indices = @transform_11, window_bounds = array<i64: 1, 64, 32>}, {transform_indices = @transform_12, window_bounds = array<i64: 1, 1, 64>}, {transform_indices = @transform_13, window_bounds = array<i64: 1, 9, 32>}, {pipeline_mode = #tpu.pipeline_mode<synchronous>, transform_indices = @transform_14, window_bounds = array<i64: 32, 128>}, {pipeline_mode = #tpu.pipeline_mode<synchronous>, transform_indices = @transform_15, window_bounds = array<i64: 1, 128>}, {transform_indices = @transform_16, window_bounds = array<i64: 1, 8, 128>}]} {
    %c0_i32 = arith.constant 0 : i32
    %0 = arith.cmpi eq, %arg1, %c0_i32 : i32
    %1 = arith.extui %0 : i1 to i32
    %c0_i32_0 = arith.constant 0 : i32
    %2 = arith.cmpi ne, %1, %c0_i32_0 : i32
    scf.if %2 {
      %c0_117 = arith.constant 0 : index
      %c0_118 = arith.constant 0 : index
      %c0_119 = arith.constant 0 : index
      %350 = vector.load %arg2[%c0_117, %c0_118, %c0_119] : memref<1x8x32xf32, #tpu.memory_space<vmem>>, vector<1x8x32xf32>
      %351 = vector.shape_cast %350 : vector<1x8x32xf32> to vector<8x32xf32>
      %c0_120 = arith.constant 0 : index
      %c0_121 = arith.constant 0 : index
      %352 = vector.load %arg19[%c0_120, %c0_121] : memref<8x32xf32, #tpu.memory_space<vmem>>, vector<8x32xf32>
      tpu.vector_store %arg19[%c0_120, %c0_121], %351 {strides = array<i32>} : memref<8x32xf32, #tpu.memory_space<vmem>>, vector<8x32xf32>,
    } else {
    }
    %c0 = arith.constant 0 : index
    %c0_1 = arith.constant 0 : index
    %3 = vector.load %arg19[%c0, %c0_1] : memref<8x32xf32, #tpu.memory_space<vmem>>, vector<8x32xf32>
    %c0_2 = arith.constant 0 : index
    %c0_3 = arith.constant 0 : index
    %c0_4 = arith.constant 0 : index
    %4 = vector.load %arg3[%c0_2, %c0_3, %c0_4] : memref<1x8x32xf32, #tpu.memory_space<vmem>>, vector<1x8x32xf32>
    %5 = vector.shape_cast %4 : vector<1x8x32xf32> to vector<8x32xf32>
    %c0_5 = arith.constant 0 : index
    %c0_6 = arith.constant 0 : index
    %c0_7 = arith.constant 0 : index
    %6 = vector.load %arg4[%c0_5, %c0_6, %c0_7] : memref<1x8x8xf32, #tpu.memory_space<vmem>>, vector<1x8x8xf32>
    %7 = vector.shape_cast %6 : vector<1x8x8xf32> to vector<8x8xf32>
    %c0_8 = arith.constant 0 : index
    %c0_9 = arith.constant 0 : index
    %c0_10 = arith.constant 0 : index
    %8 = vector.load %arg5[%c0_8, %c0_9, %c0_10] : memref<1x8x8xf32, #tpu.memory_space<vmem>>, vector<1x8x8xf32>
    %9 = vector.shape_cast %8 : vector<1x8x8xf32> to vector<8x8xf32>
    %c0_11 = arith.constant 0 : index
    %c0_12 = arith.constant 0 : index
    %c0_13 = arith.constant 0 : index
    %10 = vector.load %arg15[%c0_11, %c0_12, %c0_13] : memref<1x9x32xf32, #tpu.memory_space<vmem>>, vector<1x9x32xf32>
    %11 = vector.shape_cast %10 : vector<1x9x32xf32> to vector<9x32xf32>
    %12 = vector.extract_strided_slice %11 {offsets = [0, 0], sizes = [1, 32], strides = [1, 1]} : vector<9x32xf32> to vector<1x32xf32>
    %13 = vector.extract_strided_slice %11 {offsets = [1, 0], sizes = [1, 32], strides = [1, 1]} : vector<9x32xf32> to vector<1x32xf32>
    %14 = vector.extract_strided_slice %11 {offsets = [2, 0], sizes = [1, 32], strides = [1, 1]} : vector<9x32xf32> to vector<1x32xf32>
    %15 = vector.extract_strided_slice %11 {offsets = [3, 0], sizes = [1, 32], strides = [1, 1]} : vector<9x32xf32> to vector<1x32xf32>
    %16 = vector.extract_strided_slice %11 {offsets = [4, 0], sizes = [1, 32], strides = [1, 1]} : vector<9x32xf32> to vector<1x32xf32>
    %17 = vector.extract_strided_slice %11 {offsets = [5, 0], sizes = [1, 32], strides = [1, 1]} : vector<9x32xf32> to vector<1x32xf32>
    %18 = vector.extract_strided_slice %11 {offsets = [6, 0], sizes = [1, 32], strides = [1, 1]} : vector<9x32xf32> to vector<1x32xf32>
    %19 = vector.extract_strided_slice %11 {offsets = [7, 0], sizes = [1, 32], strides = [1, 1]} : vector<9x32xf32> to vector<1x32xf32>
    %20 = vector.extract_strided_slice %11 {offsets = [8, 0], sizes = [1, 32], strides = [1, 1]} : vector<9x32xf32> to vector<1x32xf32>
    %c0_14 = arith.constant 0 : index
    %c0_15 = arith.constant 0 : index
    %c0_16 = arith.constant 0 : index
    %21 = vector.load %arg6[%c0_14, %c0_15, %c0_16] : memref<1x32x32xbf16, #tpu.memory_space<vmem>>, vector<1x32x32xbf16>
    %22 = vector.shape_cast %21 : vector<1x32x32xbf16> to vector<32x32xbf16>
    %c0_17 = arith.constant 0 : index
    %c0_18 = arith.constant 0 : index
    %c0_19 = arith.constant 0 : index
    %23 = vector.load %arg7[%c0_17, %c0_18, %c0_19] : memref<1x32x64xbf16, #tpu.memory_space<vmem>>, vector<1x32x64xbf16>
    %24 = vector.shape_cast %23 : vector<1x32x64xbf16> to vector<32x64xbf16>
    %c0_20 = arith.constant 0 : index
    %c0_21 = arith.constant 0 : index
    %c0_22 = arith.constant 0 : index
    %25 = vector.load %arg8[%c0_20, %c0_21, %c0_22] : memref<1x32x32xbf16, #tpu.memory_space<vmem>>, vector<1x32x32xbf16>
    %26 = vector.shape_cast %25 : vector<1x32x32xbf16> to vector<32x32xbf16>
    %27 = arith.truncf %3 : vector<8x32xf32> to vector<8x32xbf16>
    %cst = arith.constant dense<0.000000e+00> : vector<8x32xf32>
    %28 = tpu.matmul %27, %22, %cst {dimension_numbers = #tpu.dot_dimension_numbers<[1], [0], [0], [1], [0, 0, 1, 1], [], []>} : vector<8x32xbf16>, vector<32x32xbf16>, vector<8x32xf32> -> vector<8x32xf32>
    %cst_23 = arith.constant 0.176776692 : f32
    %29 = vector.broadcast %cst_23 : f32 to vector<8x32xf32>
    %30 = arith.mulf %28, %29 : vector<8x32xf32>
    %31 = arith.truncf %3 : vector<8x32xf32> to vector<8x32xbf16>
    %cst_24 = arith.constant dense<0.000000e+00> : vector<8x64xf32>
    %32 = tpu.matmul %31, %24, %cst_24 {dimension_numbers = #tpu.dot_dimension_numbers<[1], [0], [0], [1], [0, 0, 1, 1], [], []>} : vector<8x32xbf16>, vector<32x64xbf16>, vector<8x64xf32> -> vector<8x64xf32>
    %33 = arith.truncf %30 : vector<8x32xf32> to vector<8x32xbf16>
    %34 = vector.extract_strided_slice %32 {offsets = [0, 0], sizes = [8, 32], strides = [1, 1]} : vector<8x64xf32> to vector<8x32xf32>
    %35 = arith.truncf %34 : vector<8x32xf32> to vector<8x32xbf16>
    %36 = vector.extract_strided_slice %32 {offsets = [0, 32], sizes = [8, 32], strides = [1, 1]} : vector<8x64xf32> to vector<8x32xf32>
    %37 = arith.truncf %36 : vector<8x32xf32> to vector<8x32xbf16>
    %cst_25 = arith.constant 0.000000e+00 : f32
    %38 = vector.broadcast %cst_25 : f32 to vector<8x32xf32>
    %39 = vector.extract_strided_slice %33 {offsets = [0, 0], sizes = [8, 8], strides = [1, 1]} : vector<8x32xbf16> to vector<8x8xbf16>
    %40 = vector.extract_strided_slice %35 {offsets = [0, 0], sizes = [8, 8], strides = [1, 1]} : vector<8x32xbf16> to vector<8x8xbf16>
    %cst_26 = arith.constant dense<0.000000e+00> : vector<8x8xf32>
    %41 = tpu.matmul %39, %40, %cst_26 {dimension_numbers = #tpu.dot_dimension_numbers<[1], [1], [0], [0], [0, 0, 1, 0], [], []>} : vector<8x8xbf16>, vector<8x8xbf16>, vector<8x8xf32> -> vector<8x8xf32>
    %42 = arith.addf %41, %7 : vector<8x8xf32>
    %cst_27 = arith.constant dense<0xFF800000> : vector<8xf32>
    %43 = vector.multi_reduction <maximumf>, %42, %cst_27 [1] : vector<8x8xf32> to vector<8xf32>
    %44 = vector.shape_cast %43 : vector<8xf32> to vector<8x1xf32>
    %45 = vector.broadcast %44 : vector<8x1xf32> to vector<8x8xf32>
    %46 = arith.subf %42, %45 : vector<8x8xf32>
    %47 = math.exp %46 : vector<8x8xf32>
    %cst_28 = arith.constant dense<0.000000e+00> : vector<8xf32>
    %48 = vector.multi_reduction <add>, %47, %cst_28 [1] : vector<8x8xf32> to vector<8xf32>
    %49 = vector.shape_cast %48 : vector<8xf32> to vector<8x1xf32>
    %50 = tpu.reciprocal %49 {approx = true} : vector<8x1xf32> -> vector<8x1xf32>
    %51 = arith.mulf %49, %50 : vector<8x1xf32>
    %cst_29 = arith.constant 2.000000e+00 : f32
    %52 = vector.broadcast %cst_29 : f32 to vector<8x1xf32>
    %53 = arith.subf %52, %51 : vector<8x1xf32>
    %54 = arith.mulf %50, %53 : vector<8x1xf32>
    %55 = vector.broadcast %54 : vector<8x1xf32> to vector<8x8xf32>
    %56 = arith.mulf %47, %55 : vector<8x8xf32>
    %57 = arith.truncf %56 : vector<8x8xf32> to vector<8x8xbf16>
    %58 = vector.extract_strided_slice %37 {offsets = [0, 0], sizes = [8, 8], strides = [1, 1]} : vector<8x32xbf16> to vector<8x8xbf16>
    %cst_30 = arith.constant dense<0.000000e+00> : vector<8x8xf32>
    %59 = tpu.matmul %57, %58, %cst_30 {dimension_numbers = #tpu.dot_dimension_numbers<[1], [0], [0], [1], [0, 0, 1, 1], [], []>} : vector<8x8xbf16>, vector<8x8xbf16>, vector<8x8xf32> -> vector<8x8xf32>
    %60 = arith.truncf %59 : vector<8x8xf32> to vector<8x8xbf16>
    %61 = vector.extract_strided_slice %26 {offsets = [0, 0], sizes = [8, 32], strides = [1, 1]} : vector<32x32xbf16> to vector<8x32xbf16>
    %cst_31 = arith.constant dense<0.000000e+00> : vector<8x32xf32>
    %62 = tpu.matmul %60, %61, %cst_31 {dimension_numbers = #tpu.dot_dimension_numbers<[1], [0], [0], [1], [0, 0, 1, 1], [], []>} : vector<8x8xbf16>, vector<8x32xbf16>, vector<8x32xf32> -> vector<8x32xf32>
    %63 = arith.addf %38, %62 : vector<8x32xf32>
    %64 = vector.extract_strided_slice %33 {offsets = [0, 8], sizes = [8, 8], strides = [1, 1]} : vector<8x32xbf16> to vector<8x8xbf16>
    %65 = vector.extract_strided_slice %35 {offsets = [0, 8], sizes = [8, 8], strides = [1, 1]} : vector<8x32xbf16> to vector<8x8xbf16>
    %cst_32 = arith.constant dense<0.000000e+00> : vector<8x8xf32>
    %66 = tpu.matmul %64, %65, %cst_32 {dimension_numbers = #tpu.dot_dimension_numbers<[1], [1], [0], [0], [0, 0, 1, 0], [], []>} : vector<8x8xbf16>, vector<8x8xbf16>, vector<8x8xf32> -> vector<8x8xf32>
    %67 = arith.addf %66, %7 : vector<8x8xf32>
    %cst_33 = arith.constant dense<0xFF800000> : vector<8xf32>
    %68 = vector.multi_reduction <maximumf>, %67, %cst_33 [1] : vector<8x8xf32> to vector<8xf32>
    %69 = vector.shape_cast %68 : vector<8xf32> to vector<8x1xf32>
    %70 = vector.broadcast %69 : vector<8x1xf32> to vector<8x8xf32>
    %71 = arith.subf %67, %70 : vector<8x8xf32>
    %72 = math.exp %71 : vector<8x8xf32>
    %cst_34 = arith.constant dense<0.000000e+00> : vector<8xf32>
    %73 = vector.multi_reduction <add>, %72, %cst_34 [1] : vector<8x8xf32> to vector<8xf32>
    %74 = vector.shape_cast %73 : vector<8xf32> to vector<8x1xf32>
    %75 = tpu.reciprocal %74 {approx = true} : vector<8x1xf32> -> vector<8x1xf32>
    %76 = arith.mulf %74, %75 : vector<8x1xf32>
    %cst_35 = arith.constant 2.000000e+00 : f32
    %77 = vector.broadcast %cst_35 : f32 to vector<8x1xf32>
    %78 = arith.subf %77, %76 : vector<8x1xf32>
    %79 = arith.mulf %75, %78 : vector<8x1xf32>
    %80 = vector.broadcast %79 : vector<8x1xf32> to vector<8x8xf32>
    %81 = arith.mulf %72, %80 : vector<8x8xf32>
    %82 = arith.truncf %81 : vector<8x8xf32> to vector<8x8xbf16>
    %83 = vector.extract_strided_slice %37 {offsets = [0, 8], sizes = [8, 8], strides = [1, 1]} : vector<8x32xbf16> to vector<8x8xbf16>
    %cst_36 = arith.constant dense<0.000000e+00> : vector<8x8xf32>
    %84 = tpu.matmul %82, %83, %cst_36 {dimension_numbers = #tpu.dot_dimension_numbers<[1], [0], [0], [1], [0, 0, 1, 1], [], []>} : vector<8x8xbf16>, vector<8x8xbf16>, vector<8x8xf32> -> vector<8x8xf32>
    %85 = arith.truncf %84 : vector<8x8xf32> to vector<8x8xbf16>
    %86 = vector.extract_strided_slice %26 {offsets = [8, 0], sizes = [8, 32], strides = [1, 1]} : vector<32x32xbf16> to vector<8x32xbf16>
    %cst_37 = arith.constant dense<0.000000e+00> : vector<8x32xf32>
    %87 = tpu.matmul %85, %86, %cst_37 {dimension_numbers = #tpu.dot_dimension_numbers<[1], [0], [0], [1], [0, 0, 1, 1], [], []>} : vector<8x8xbf16>, vector<8x32xbf16>, vector<8x32xf32> -> vector<8x32xf32>
    %88 = arith.addf %63, %87 : vector<8x32xf32>
    %89 = vector.extract_strided_slice %33 {offsets = [0, 16], sizes = [8, 8], strides = [1, 1]} : vector<8x32xbf16> to vector<8x8xbf16>
    %90 = vector.extract_strided_slice %35 {offsets = [0, 16], sizes = [8, 8], strides = [1, 1]} : vector<8x32xbf16> to vector<8x8xbf16>
    %cst_38 = arith.constant dense<0.000000e+00> : vector<8x8xf32>
    %91 = tpu.matmul %89, %90, %cst_38 {dimension_numbers = #tpu.dot_dimension_numbers<[1], [1], [0], [0], [0, 0, 1, 0], [], []>} : vector<8x8xbf16>, vector<8x8xbf16>, vector<8x8xf32> -> vector<8x8xf32>
    %92 = arith.addf %91, %7 : vector<8x8xf32>
    %cst_39 = arith.constant dense<0xFF800000> : vector<8xf32>
    %93 = vector.multi_reduction <maximumf>, %92, %cst_39 [1] : vector<8x8xf32> to vector<8xf32>
    %94 = vector.shape_cast %93 : vector<8xf32> to vector<8x1xf32>
    %95 = vector.broadcast %94 : vector<8x1xf32> to vector<8x8xf32>
    %96 = arith.subf %92, %95 : vector<8x8xf32>
    %97 = math.exp %96 : vector<8x8xf32>
    %cst_40 = arith.constant dense<0.000000e+00> : vector<8xf32>
    %98 = vector.multi_reduction <add>, %97, %cst_40 [1] : vector<8x8xf32> to vector<8xf32>
    %99 = vector.shape_cast %98 : vector<8xf32> to vector<8x1xf32>
    %100 = tpu.reciprocal %99 {approx = true} : vector<8x1xf32> -> vector<8x1xf32>
    %101 = arith.mulf %99, %100 : vector<8x1xf32>
    %cst_41 = arith.constant 2.000000e+00 : f32
    %102 = vector.broadcast %cst_41 : f32 to vector<8x1xf32>
    %103 = arith.subf %102, %101 : vector<8x1xf32>
    %104 = arith.mulf %100, %103 : vector<8x1xf32>
    %105 = vector.broadcast %104 : vector<8x1xf32> to vector<8x8xf32>
    %106 = arith.mulf %97, %105 : vector<8x8xf32>
    %107 = arith.truncf %106 : vector<8x8xf32> to vector<8x8xbf16>
    %108 = vector.extract_strided_slice %37 {offsets = [0, 16], sizes = [8, 8], strides = [1, 1]} : vector<8x32xbf16> to vector<8x8xbf16>
    %cst_42 = arith.constant dense<0.000000e+00> : vector<8x8xf32>
    %109 = tpu.matmul %107, %108, %cst_42 {dimension_numbers = #tpu.dot_dimension_numbers<[1], [0], [0], [1], [0, 0, 1, 1], [], []>} : vector<8x8xbf16>, vector<8x8xbf16>, vector<8x8xf32> -> vector<8x8xf32>
    %110 = arith.truncf %109 : vector<8x8xf32> to vector<8x8xbf16>
    %111 = vector.extract_strided_slice %26 {offsets = [16, 0], sizes = [8, 32], strides = [1, 1]} : vector<32x32xbf16> to vector<8x32xbf16>
    %cst_43 = arith.constant dense<0.000000e+00> : vector<8x32xf32>
    %112 = tpu.matmul %110, %111, %cst_43 {dimension_numbers = #tpu.dot_dimension_numbers<[1], [0], [0], [1], [0, 0, 1, 1], [], []>} : vector<8x8xbf16>, vector<8x32xbf16>, vector<8x32xf32> -> vector<8x32xf32>
    %113 = arith.addf %88, %112 : vector<8x32xf32>
    %114 = vector.extract_strided_slice %33 {offsets = [0, 24], sizes = [8, 8], strides = [1, 1]} : vector<8x32xbf16> to vector<8x8xbf16>
    %115 = vector.extract_strided_slice %35 {offsets = [0, 24], sizes = [8, 8], strides = [1, 1]} : vector<8x32xbf16> to vector<8x8xbf16>
    %cst_44 = arith.constant dense<0.000000e+00> : vector<8x8xf32>
    %116 = tpu.matmul %114, %115, %cst_44 {dimension_numbers = #tpu.dot_dimension_numbers<[1], [1], [0], [0], [0, 0, 1, 0], [], []>} : vector<8x8xbf16>, vector<8x8xbf16>, vector<8x8xf32> -> vector<8x8xf32>
    %117 = arith.addf %116, %7 : vector<8x8xf32>
    %cst_45 = arith.constant dense<0xFF800000> : vector<8xf32>
    %118 = vector.multi_reduction <maximumf>, %117, %cst_45 [1] : vector<8x8xf32> to vector<8xf32>
    %119 = vector.shape_cast %118 : vector<8xf32> to vector<8x1xf32>
    %120 = vector.broadcast %119 : vector<8x1xf32> to vector<8x8xf32>
    %121 = arith.subf %117, %120 : vector<8x8xf32>
    %122 = math.exp %121 : vector<8x8xf32>
    %cst_46 = arith.constant dense<0.000000e+00> : vector<8xf32>
    %123 = vector.multi_reduction <add>, %122, %cst_46 [1] : vector<8x8xf32> to vector<8xf32>
    %124 = vector.shape_cast %123 : vector<8xf32> to vector<8x1xf32>
    %125 = tpu.reciprocal %124 {approx = true} : vector<8x1xf32> -> vector<8x1xf32>
    %126 = arith.mulf %124, %125 : vector<8x1xf32>
    %cst_47 = arith.constant 2.000000e+00 : f32
    %127 = vector.broadcast %cst_47 : f32 to vector<8x1xf32>
    %128 = arith.subf %127, %126 : vector<8x1xf32>
    %129 = arith.mulf %125, %128 : vector<8x1xf32>
    %130 = vector.broadcast %129 : vector<8x1xf32> to vector<8x8xf32>
    %131 = arith.mulf %122, %130 : vector<8x8xf32>
    %132 = arith.truncf %131 : vector<8x8xf32> to vector<8x8xbf16>
    %133 = vector.extract_strided_slice %37 {offsets = [0, 24], sizes = [8, 8], strides = [1, 1]} : vector<8x32xbf16> to vector<8x8xbf16>
    %cst_48 = arith.constant dense<0.000000e+00> : vector<8x8xf32>
    %134 = tpu.matmul %132, %133, %cst_48 {dimension_numbers = #tpu.dot_dimension_numbers<[1], [0], [0], [1], [0, 0, 1, 1], [], []>} : vector<8x8xbf16>, vector<8x8xbf16>, vector<8x8xf32> -> vector<8x8xf32>
    %135 = arith.truncf %134 : vector<8x8xf32> to vector<8x8xbf16>
    %136 = vector.extract_strided_slice %26 {offsets = [24, 0], sizes = [8, 32], strides = [1, 1]} : vector<32x32xbf16> to vector<8x32xbf16>
    %cst_49 = arith.constant dense<0.000000e+00> : vector<8x32xf32>
    %137 = tpu.matmul %135, %136, %cst_49 {dimension_numbers = #tpu.dot_dimension_numbers<[1], [0], [0], [1], [0, 0, 1, 1], [], []>} : vector<8x8xbf16>, vector<8x32xbf16>, vector<8x32xf32> -> vector<8x32xf32>
    %138 = arith.addf %113, %137 : vector<8x32xf32>
    %139 = vector.broadcast %12 : vector<1x32xf32> to vector<8x32xf32>
    %140 = arith.addf %138, %139 : vector<8x32xf32>
    %141 = arith.addf %140, %3 : vector<8x32xf32>
    %cst_50 = arith.constant dense<0.000000e+00> : vector<8xf32>
    %142 = vector.multi_reduction <add>, %141, %cst_50 [1] : vector<8x32xf32> to vector<8xf32>
    %143 = vector.shape_cast %142 : vector<8xf32> to vector<8x1xf32>
    %cst_51 = arith.constant 3.200000e+01 : f32
    %144 = vector.broadcast %cst_51 : f32 to vector<8x1xf32>
    %145 = arith.divf %143, %144 : vector<8x1xf32>
    %146 = vector.broadcast %145 : vector<8x1xf32> to vector<8x32xf32>
    %147 = arith.subf %141, %146 : vector<8x32xf32>
    %148 = arith.mulf %147, %147 : vector<8x32xf32>
    %cst_52 = arith.constant dense<0.000000e+00> : vector<8xf32>
    %149 = vector.multi_reduction <add>, %148, %cst_52 [1] : vector<8x32xf32> to vector<8xf32>
    %150 = vector.shape_cast %149 : vector<8xf32> to vector<8x1xf32>
    %cst_53 = arith.constant 3.200000e+01 : f32
    %151 = vector.broadcast %cst_53 : f32 to vector<8x1xf32>
    %152 = arith.divf %150, %151 : vector<8x1xf32>
    %153 = vector.broadcast %145 : vector<8x1xf32> to vector<8x32xf32>
    %154 = arith.subf %141, %153 : vector<8x32xf32>
    %cst_54 = arith.constant 9.99999974E-6 : f32
    %155 = vector.broadcast %cst_54 : f32 to vector<8x1xf32>
    %156 = arith.addf %152, %155 : vector<8x1xf32>
    %157 = math.rsqrt %156 : vector<8x1xf32>
    %158 = vector.broadcast %157 : vector<8x1xf32> to vector<8x32xf32>
    %159 = arith.mulf %154, %158 : vector<8x32xf32>
    %160 = vector.broadcast %13 : vector<1x32xf32> to vector<8x32xf32>
    %161 = arith.mulf %159, %160 : vector<8x32xf32>
    %162 = vector.broadcast %14 : vector<1x32xf32> to vector<8x32xf32>
    %163 = arith.addf %161, %162 : vector<8x32xf32>
    %c0_55 = arith.constant 0 : index
    %c0_56 = arith.constant 0 : index
    %c0_57 = arith.constant 0 : index
    %164 = vector.load %arg9[%c0_55, %c0_56, %c0_57] : memref<1x32x32xbf16, #tpu.memory_space<vmem>>, vector<1x32x32xbf16>
    %165 = vector.shape_cast %164 : vector<1x32x32xbf16> to vector<32x32xbf16>
    %c0_58 = arith.constant 0 : index
    %c0_59 = arith.constant 0 : index
    %c0_60 = arith.constant 0 : index
    %166 = vector.load %arg10[%c0_58, %c0_59, %c0_60] : memref<1x32x64xbf16, #tpu.memory_space<vmem>>, vector<1x32x64xbf16>
    %167 = vector.shape_cast %166 : vector<1x32x64xbf16> to vector<32x64xbf16>
    %c0_61 = arith.constant 0 : index
    %c0_62 = arith.constant 0 : index
    %c0_63 = arith.constant 0 : index
    %168 = vector.load %arg11[%c0_61, %c0_62, %c0_63] : memref<1x32x32xbf16, #tpu.memory_space<vmem>>, vector<1x32x32xbf16>
    %169 = vector.shape_cast %168 : vector<1x32x32xbf16> to vector<32x32xbf16>
    %170 = arith.truncf %163 : vector<8x32xf32> to vector<8x32xbf16>
    %cst_64 = arith.constant dense<0.000000e+00> : vector<8x32xf32>
    %171 = tpu.matmul %170, %165, %cst_64 {dimension_numbers = #tpu.dot_dimension_numbers<[1], [0], [0], [1], [0, 0, 1, 1], [], []>} : vector<8x32xbf16>, vector<32x32xbf16>, vector<8x32xf32> -> vector<8x32xf32>
    %cst_65 = arith.constant 0.176776692 : f32
    %172 = vector.broadcast %cst_65 : f32 to vector<8x32xf32>
    %173 = arith.mulf %171, %172 : vector<8x32xf32>
    %174 = arith.truncf %5 : vector<8x32xf32> to vector<8x32xbf16>
    %cst_66 = arith.constant dense<0.000000e+00> : vector<8x64xf32>
    %175 = tpu.matmul %174, %167, %cst_66 {dimension_numbers = #tpu.dot_dimension_numbers<[1], [0], [0], [1], [0, 0, 1, 1], [], []>} : vector<8x32xbf16>, vector<32x64xbf16>, vector<8x64xf32> -> vector<8x64xf32>
    %176 = arith.truncf %173 : vector<8x32xf32> to vector<8x32xbf16>
    %177 = vector.extract_strided_slice %175 {offsets = [0, 0], sizes = [8, 32], strides = [1, 1]} : vector<8x64xf32> to vector<8x32xf32>
    %178 = arith.truncf %177 : vector<8x32xf32> to vector<8x32xbf16>
    %179 = vector.extract_strided_slice %175 {offsets = [0, 32], sizes = [8, 32], strides = [1, 1]} : vector<8x64xf32> to vector<8x32xf32>
    %180 = arith.truncf %179 : vector<8x32xf32> to vector<8x32xbf16>
    %cst_67 = arith.constant 0.000000e+00 : f32
    %181 = vector.broadcast %cst_67 : f32 to vector<8x32xf32>
    %182 = vector.extract_strided_slice %176 {offsets = [0, 0], sizes = [8, 8], strides = [1, 1]} : vector<8x32xbf16> to vector<8x8xbf16>
    %183 = vector.extract_strided_slice %178 {offsets = [0, 0], sizes = [8, 8], strides = [1, 1]} : vector<8x32xbf16> to vector<8x8xbf16>
    %cst_68 = arith.constant dense<0.000000e+00> : vector<8x8xf32>
    %184 = tpu.matmul %182, %183, %cst_68 {dimension_numbers = #tpu.dot_dimension_numbers<[1], [1], [0], [0], [0, 0, 1, 0], [], []>} : vector<8x8xbf16>, vector<8x8xbf16>, vector<8x8xf32> -> vector<8x8xf32>
    %185 = arith.addf %184, %9 : vector<8x8xf32>
    %cst_69 = arith.constant dense<0xFF800000> : vector<8xf32>
    %186 = vector.multi_reduction <maximumf>, %185, %cst_69 [1] : vector<8x8xf32> to vector<8xf32>
    %187 = vector.shape_cast %186 : vector<8xf32> to vector<8x1xf32>
    %188 = vector.broadcast %187 : vector<8x1xf32> to vector<8x8xf32>
    %189 = arith.subf %185, %188 : vector<8x8xf32>
    %190 = math.exp %189 : vector<8x8xf32>
    %cst_70 = arith.constant dense<0.000000e+00> : vector<8xf32>
    %191 = vector.multi_reduction <add>, %190, %cst_70 [1] : vector<8x8xf32> to vector<8xf32>
    %192 = vector.shape_cast %191 : vector<8xf32> to vector<8x1xf32>
    %193 = tpu.reciprocal %192 {approx = true} : vector<8x1xf32> -> vector<8x1xf32>
    %194 = arith.mulf %192, %193 : vector<8x1xf32>
    %cst_71 = arith.constant 2.000000e+00 : f32
    %195 = vector.broadcast %cst_71 : f32 to vector<8x1xf32>
    %196 = arith.subf %195, %194 : vector<8x1xf32>
    %197 = arith.mulf %193, %196 : vector<8x1xf32>
    %198 = vector.broadcast %197 : vector<8x1xf32> to vector<8x8xf32>
    %199 = arith.mulf %190, %198 : vector<8x8xf32>
    %200 = arith.truncf %199 : vector<8x8xf32> to vector<8x8xbf16>
    %201 = vector.extract_strided_slice %180 {offsets = [0, 0], sizes = [8, 8], strides = [1, 1]} : vector<8x32xbf16> to vector<8x8xbf16>
    %cst_72 = arith.constant dense<0.000000e+00> : vector<8x8xf32>
    %202 = tpu.matmul %200, %201, %cst_72 {dimension_numbers = #tpu.dot_dimension_numbers<[1], [0], [0], [1], [0, 0, 1, 1], [], []>} : vector<8x8xbf16>, vector<8x8xbf16>, vector<8x8xf32> -> vector<8x8xf32>
    %203 = arith.truncf %202 : vector<8x8xf32> to vector<8x8xbf16>
    %204 = vector.extract_strided_slice %169 {offsets = [0, 0], sizes = [8, 32], strides = [1, 1]} : vector<32x32xbf16> to vector<8x32xbf16>
    %cst_73 = arith.constant dense<0.000000e+00> : vector<8x32xf32>
    %205 = tpu.matmul %203, %204, %cst_73 {dimension_numbers = #tpu.dot_dimension_numbers<[1], [0], [0], [1], [0, 0, 1, 1], [], []>} : vector<8x8xbf16>, vector<8x32xbf16>, vector<8x32xf32> -> vector<8x32xf32>
    %206 = arith.addf %181, %205 : vector<8x32xf32>
    %207 = vector.extract_strided_slice %176 {offsets = [0, 8], sizes = [8, 8], strides = [1, 1]} : vector<8x32xbf16> to vector<8x8xbf16>
    %208 = vector.extract_strided_slice %178 {offsets = [0, 8], sizes = [8, 8], strides = [1, 1]} : vector<8x32xbf16> to vector<8x8xbf16>
    %cst_74 = arith.constant dense<0.000000e+00> : vector<8x8xf32>
    %209 = tpu.matmul %207, %208, %cst_74 {dimension_numbers = #tpu.dot_dimension_numbers<[1], [1], [0], [0], [0, 0, 1, 0], [], []>} : vector<8x8xbf16>, vector<8x8xbf16>, vector<8x8xf32> -> vector<8x8xf32>
    %210 = arith.addf %209, %9 : vector<8x8xf32>
    %cst_75 = arith.constant dense<0xFF800000> : vector<8xf32>
    %211 = vector.multi_reduction <maximumf>, %210, %cst_75 [1] : vector<8x8xf32> to vector<8xf32>
    %212 = vector.shape_cast %211 : vector<8xf32> to vector<8x1xf32>
    %213 = vector.broadcast %212 : vector<8x1xf32> to vector<8x8xf32>
    %214 = arith.subf %210, %213 : vector<8x8xf32>
    %215 = math.exp %214 : vector<8x8xf32>
    %cst_76 = arith.constant dense<0.000000e+00> : vector<8xf32>
    %216 = vector.multi_reduction <add>, %215, %cst_76 [1] : vector<8x8xf32> to vector<8xf32>
    %217 = vector.shape_cast %216 : vector<8xf32> to vector<8x1xf32>
    %218 = tpu.reciprocal %217 {approx = true} : vector<8x1xf32> -> vector<8x1xf32>
    %219 = arith.mulf %217, %218 : vector<8x1xf32>
    %cst_77 = arith.constant 2.000000e+00 : f32
    %220 = vector.broadcast %cst_77 : f32 to vector<8x1xf32>
    %221 = arith.subf %220, %219 : vector<8x1xf32>
    %222 = arith.mulf %218, %221 : vector<8x1xf32>
    %223 = vector.broadcast %222 : vector<8x1xf32> to vector<8x8xf32>
    %224 = arith.mulf %215, %223 : vector<8x8xf32>
    %225 = arith.truncf %224 : vector<8x8xf32> to vector<8x8xbf16>
    %226 = vector.extract_strided_slice %180 {offsets = [0, 8], sizes = [8, 8], strides = [1, 1]} : vector<8x32xbf16> to vector<8x8xbf16>
    %cst_78 = arith.constant dense<0.000000e+00> : vector<8x8xf32>
    %227 = tpu.matmul %225, %226, %cst_78 {dimension_numbers = #tpu.dot_dimension_numbers<[1], [0], [0], [1], [0, 0, 1, 1], [], []>} : vector<8x8xbf16>, vector<8x8xbf16>, vector<8x8xf32> -> vector<8x8xf32>
    %228 = arith.truncf %227 : vector<8x8xf32> to vector<8x8xbf16>
    %229 = vector.extract_strided_slice %169 {offsets = [8, 0], sizes = [8, 32], strides = [1, 1]} : vector<32x32xbf16> to vector<8x32xbf16>
    %cst_79 = arith.constant dense<0.000000e+00> : vector<8x32xf32>
    %230 = tpu.matmul %228, %229, %cst_79 {dimension_numbers = #tpu.dot_dimension_numbers<[1], [0], [0], [1], [0, 0, 1, 1], [], []>} : vector<8x8xbf16>, vector<8x32xbf16>, vector<8x32xf32> -> vector<8x32xf32>
    %231 = arith.addf %206, %230 : vector<8x32xf32>
    %232 = vector.extract_strided_slice %176 {offsets = [0, 16], sizes = [8, 8], strides = [1, 1]} : vector<8x32xbf16> to vector<8x8xbf16>
    %233 = vector.extract_strided_slice %178 {offsets = [0, 16], sizes = [8, 8], strides = [1, 1]} : vector<8x32xbf16> to vector<8x8xbf16>
    %cst_80 = arith.constant dense<0.000000e+00> : vector<8x8xf32>
    %234 = tpu.matmul %232, %233, %cst_80 {dimension_numbers = #tpu.dot_dimension_numbers<[1], [1], [0], [0], [0, 0, 1, 0], [], []>} : vector<8x8xbf16>, vector<8x8xbf16>, vector<8x8xf32> -> vector<8x8xf32>
    %235 = arith.addf %234, %9 : vector<8x8xf32>
    %cst_81 = arith.constant dense<0xFF800000> : vector<8xf32>
    %236 = vector.multi_reduction <maximumf>, %235, %cst_81 [1] : vector<8x8xf32> to vector<8xf32>
    %237 = vector.shape_cast %236 : vector<8xf32> to vector<8x1xf32>
    %238 = vector.broadcast %237 : vector<8x1xf32> to vector<8x8xf32>
    %239 = arith.subf %235, %238 : vector<8x8xf32>
    %240 = math.exp %239 : vector<8x8xf32>
    %cst_82 = arith.constant dense<0.000000e+00> : vector<8xf32>
    %241 = vector.multi_reduction <add>, %240, %cst_82 [1] : vector<8x8xf32> to vector<8xf32>
    %242 = vector.shape_cast %241 : vector<8xf32> to vector<8x1xf32>
    %243 = tpu.reciprocal %242 {approx = true} : vector<8x1xf32> -> vector<8x1xf32>
    %244 = arith.mulf %242, %243 : vector<8x1xf32>
    %cst_83 = arith.constant 2.000000e+00 : f32
    %245 = vector.broadcast %cst_83 : f32 to vector<8x1xf32>
    %246 = arith.subf %245, %244 : vector<8x1xf32>
    %247 = arith.mulf %243, %246 : vector<8x1xf32>
    %248 = vector.broadcast %247 : vector<8x1xf32> to vector<8x8xf32>
    %249 = arith.mulf %240, %248 : vector<8x8xf32>
    %250 = arith.truncf %249 : vector<8x8xf32> to vector<8x8xbf16>
    %251 = vector.extract_strided_slice %180 {offsets = [0, 16], sizes = [8, 8], strides = [1, 1]} : vector<8x32xbf16> to vector<8x8xbf16>
    %cst_84 = arith.constant dense<0.000000e+00> : vector<8x8xf32>
    %252 = tpu.matmul %250, %251, %cst_84 {dimension_numbers = #tpu.dot_dimension_numbers<[1], [0], [0], [1], [0, 0, 1, 1], [], []>} : vector<8x8xbf16>, vector<8x8xbf16>, vector<8x8xf32> -> vector<8x8xf32>
    %253 = arith.truncf %252 : vector<8x8xf32> to vector<8x8xbf16>
    %254 = vector.extract_strided_slice %169 {offsets = [16, 0], sizes = [8, 32], strides = [1, 1]} : vector<32x32xbf16> to vector<8x32xbf16>
    %cst_85 = arith.constant dense<0.000000e+00> : vector<8x32xf32>
    %255 = tpu.matmul %253, %254, %cst_85 {dimension_numbers = #tpu.dot_dimension_numbers<[1], [0], [0], [1], [0, 0, 1, 1], [], []>} : vector<8x8xbf16>, vector<8x32xbf16>, vector<8x32xf32> -> vector<8x32xf32>
    %256 = arith.addf %231, %255 : vector<8x32xf32>
    %257 = vector.extract_strided_slice %176 {offsets = [0, 24], sizes = [8, 8], strides = [1, 1]} : vector<8x32xbf16> to vector<8x8xbf16>
    %258 = vector.extract_strided_slice %178 {offsets = [0, 24], sizes = [8, 8], strides = [1, 1]} : vector<8x32xbf16> to vector<8x8xbf16>
    %cst_86 = arith.constant dense<0.000000e+00> : vector<8x8xf32>
    %259 = tpu.matmul %257, %258, %cst_86 {dimension_numbers = #tpu.dot_dimension_numbers<[1], [1], [0], [0], [0, 0, 1, 0], [], []>} : vector<8x8xbf16>, vector<8x8xbf16>, vector<8x8xf32> -> vector<8x8xf32>
    %260 = arith.addf %259, %9 : vector<8x8xf32>
    %cst_87 = arith.constant dense<0xFF800000> : vector<8xf32>
    %261 = vector.multi_reduction <maximumf>, %260, %cst_87 [1] : vector<8x8xf32> to vector<8xf32>
    %262 = vector.shape_cast %261 : vector<8xf32> to vector<8x1xf32>
    %263 = vector.broadcast %262 : vector<8x1xf32> to vector<8x8xf32>
    %264 = arith.subf %260, %263 : vector<8x8xf32>
    %265 = math.exp %264 : vector<8x8xf32>
    %cst_88 = arith.constant dense<0.000000e+00> : vector<8xf32>
    %266 = vector.multi_reduction <add>, %265, %cst_88 [1] : vector<8x8xf32> to vector<8xf32>
    %267 = vector.shape_cast %266 : vector<8xf32> to vector<8x1xf32>
    %268 = tpu.reciprocal %267 {approx = true} : vector<8x1xf32> -> vector<8x1xf32>
    %269 = arith.mulf %267, %268 : vector<8x1xf32>
    %cst_89 = arith.constant 2.000000e+00 : f32
    %270 = vector.broadcast %cst_89 : f32 to vector<8x1xf32>
    %271 = arith.subf %270, %269 : vector<8x1xf32>
    %272 = arith.mulf %268, %271 : vector<8x1xf32>
    %273 = vector.broadcast %272 : vector<8x1xf32> to vector<8x8xf32>
    %274 = arith.mulf %265, %273 : vector<8x8xf32>
    %275 = arith.truncf %274 : vector<8x8xf32> to vector<8x8xbf16>
    %276 = vector.extract_strided_slice %180 {offsets = [0, 24], sizes = [8, 8], strides = [1, 1]} : vector<8x32xbf16> to vector<8x8xbf16>
    %cst_90 = arith.constant dense<0.000000e+00> : vector<8x8xf32>
    %277 = tpu.matmul %275, %276, %cst_90 {dimension_numbers = #tpu.dot_dimension_numbers<[1], [0], [0], [1], [0, 0, 1, 1], [], []>} : vector<8x8xbf16>, vector<8x8xbf16>, vector<8x8xf32> -> vector<8x8xf32>
    %278 = arith.truncf %277 : vector<8x8xf32> to vector<8x8xbf16>
    %279 = vector.extract_strided_slice %169 {offsets = [24, 0], sizes = [8, 32], strides = [1, 1]} : vector<32x32xbf16> to vector<8x32xbf16>
    %cst_91 = arith.constant dense<0.000000e+00> : vector<8x32xf32>
    %280 = tpu.matmul %278, %279, %cst_91 {dimension_numbers = #tpu.dot_dimension_numbers<[1], [0], [0], [1], [0, 0, 1, 1], [], []>} : vector<8x8xbf16>, vector<8x32xbf16>, vector<8x32xf32> -> vector<8x32xf32>
    %281 = arith.addf %256, %280 : vector<8x32xf32>
    %282 = vector.broadcast %15 : vector<1x32xf32> to vector<8x32xf32>
    %283 = arith.addf %281, %282 : vector<8x32xf32>
    %284 = arith.addf %283, %163 : vector<8x32xf32>
    %cst_92 = arith.constant dense<0.000000e+00> : vector<8xf32>
    %285 = vector.multi_reduction <add>, %284, %cst_92 [1] : vector<8x32xf32> to vector<8xf32>
    %286 = vector.shape_cast %285 : vector<8xf32> to vector<8x1xf32>
    %cst_93 = arith.constant 3.200000e+01 : f32
    %287 = vector.broadcast %cst_93 : f32 to vector<8x1xf32>
    %288 = arith.divf %286, %287 : vector<8x1xf32>
    %289 = vector.broadcast %288 : vector<8x1xf32> to vector<8x32xf32>
    %290 = arith.subf %284, %289 : vector<8x32xf32>
    %291 = arith.mulf %290, %290 : vector<8x32xf32>
    %cst_94 = arith.constant dense<0.000000e+00> : vector<8xf32>
    %292 = vector.multi_reduction <add>, %291, %cst_94 [1] : vector<8x32xf32> to vector<8xf32>
    %293 = vector.shape_cast %292 : vector<8xf32> to vector<8x1xf32>
    %cst_95 = arith.constant 3.200000e+01 : f32
    %294 = vector.broadcast %cst_95 : f32 to vector<8x1xf32>
    %295 = arith.divf %293, %294 : vector<8x1xf32>
    %296 = vector.broadcast %288 : vector<8x1xf32> to vector<8x32xf32>
    %297 = arith.subf %284, %296 : vector<8x32xf32>
    %cst_96 = arith.constant 9.99999974E-6 : f32
    %298 = vector.broadcast %cst_96 : f32 to vector<8x1xf32>
    %299 = arith.addf %295, %298 : vector<8x1xf32>
    %300 = math.rsqrt %299 : vector<8x1xf32>
    %301 = vector.broadcast %300 : vector<8x1xf32> to vector<8x32xf32>
    %302 = arith.mulf %297, %301 : vector<8x32xf32>
    %303 = vector.broadcast %16 : vector<1x32xf32> to vector<8x32xf32>
    %304 = arith.mulf %302, %303 : vector<8x32xf32>
    %305 = vector.broadcast %17 : vector<1x32xf32> to vector<8x32xf32>
    %306 = arith.addf %304, %305 : vector<8x32xf32>
    %307 = arith.truncf %306 : vector<8x32xf32> to vector<8x32xbf16>
    %c0_97 = arith.constant 0 : index
    %c0_98 = arith.constant 0 : index
    %c0_99 = arith.constant 0 : index
    %308 = vector.load %arg12[%c0_97, %c0_98, %c0_99] : memref<1x32x64xbf16, #tpu.memory_space<vmem>>, vector<1x32x64xbf16>
    %309 = vector.shape_cast %308 : vector<1x32x64xbf16> to vector<32x64xbf16>
    %cst_100 = arith.constant dense<0.000000e+00> : vector<8x64xf32>
    %310 = tpu.matmul %307, %309, %cst_100 {dimension_numbers = #tpu.dot_dimension_numbers<[1], [0], [0], [1], [0, 0, 1, 1], [], []>} : vector<8x32xbf16>, vector<32x64xbf16>, vector<8x64xf32> -> vector<8x64xf32>
    %c0_101 = arith.constant 0 : index
    %c0_102 = arith.constant 0 : index
    %c0_103 = arith.constant 0 : index
    %311 = vector.load %arg14[%c0_101, %c0_102, %c0_103] : memref<1x1x64xf32, #tpu.memory_space<vmem>>, vector<1x1x64xf32>
    %312 = vector.shape_cast %311 : vector<1x1x64xf32> to vector<1x64xf32>
    %313 = vector.broadcast %312 : vector<1x64xf32> to vector<8x64xf32>
    %314 = arith.addf %310, %313 : vector<8x64xf32>
    %cst_104 = arith.constant 0.000000e+00 : f32
    %315 = vector.broadcast %cst_104 : f32 to vector<8x64xf32>
    %316 = arith.maximumf %314, %315 : vector<8x64xf32>
    %317 = arith.truncf %316 : vector<8x64xf32> to vector<8x64xbf16>
    %c0_105 = arith.constant 0 : index
    %c0_106 = arith.constant 0 : index
    %c0_107 = arith.constant 0 : index
    %318 = vector.load %arg13[%c0_105, %c0_106, %c0_107] : memref<1x64x32xbf16, #tpu.memory_space<vmem>>, vector<1x64x32xbf16>
    %319 = vector.shape_cast %318 : vector<1x64x32xbf16> to vector<64x32xbf16>
    %cst_108 = arith.constant dense<0.000000e+00> : vector<8x32xf32>
    %320 = tpu.matmul %317, %319, %cst_108 {dimension_numbers = #tpu.dot_dimension_numbers<[1], [0], [0], [1], [0, 0, 1, 1], [], []>} : vector<8x64xbf16>, vector<64x32xbf16>, vector<8x32xf32> -> vector<8x32xf32>
    %321 = vector.broadcast %18 : vector<1x32xf32> to vector<8x32xf32>
    %322 = arith.addf %320, %321 : vector<8x32xf32>
    %323 = arith.addf %322, %306 : vector<8x32xf32>
    %cst_109 = arith.constant dense<0.000000e+00> : vector<8xf32>
    %324 = vector.multi_reduction <add>, %323, %cst_109 [1] : vector<8x32xf32> to vector<8xf32>
    %325 = vector.shape_cast %324 : vector<8xf32> to vector<8x1xf32>
    %cst_110 = arith.constant 3.200000e+01 : f32
    %326 = vector.broadcast %cst_110 : f32 to vector<8x1xf32>
    %327 = arith.divf %325, %326 : vector<8x1xf32>
    %328 = vector.broadcast %327 : vector<8x1xf32> to vector<8x32xf32>
    %329 = arith.subf %323, %328 : vector<8x32xf32>
    %330 = arith.mulf %329, %329 : vector<8x32xf32>
    %cst_111 = arith.constant dense<0.000000e+00> : vector<8xf32>
    %331 = vector.multi_reduction <add>, %330, %cst_111 [1] : vector<8x32xf32> to vector<8xf32>
    %332 = vector.shape_cast %331 : vector<8xf32> to vector<8x1xf32>
    %cst_112 = arith.constant 3.200000e+01 : f32
    %333 = vector.broadcast %cst_112 : f32 to vector<8x1xf32>
    %334 = arith.divf %332, %333 : vector<8x1xf32>
    %335 = vector.broadcast %327 : vector<8x1xf32> to vector<8x32xf32>
    %336 = arith.subf %323, %335 : vector<8x32xf32>
    %cst_113 = arith.constant 9.99999974E-6 : f32
    %337 = vector.broadcast %cst_113 : f32 to vector<8x1xf32>
    %338 = arith.addf %334, %337 : vector<8x1xf32>
    %339 = math.rsqrt %338 : vector<8x1xf32>
    %340 = vector.broadcast %339 : vector<8x1xf32> to vector<8x32xf32>
    %341 = arith.mulf %336, %340 : vector<8x32xf32>
    %342 = vector.broadcast %19 : vector<1x32xf32> to vector<8x32xf32>
    %343 = arith.mulf %341, %342 : vector<8x32xf32>
    %344 = vector.broadcast %20 : vector<1x32xf32> to vector<8x32xf32>
    %345 = arith.addf %343, %344 : vector<8x32xf32>
    %c0_114 = arith.constant 0 : index
    %c0_115 = arith.constant 0 : index
    %346 = vector.load %arg19[%c0_114, %c0_115] : memref<8x32xf32, #tpu.memory_space<vmem>>, vector<8x32xf32>
    tpu.vector_store %arg19[%c0_114, %c0_115], %345 {strides = array<i32>} : memref<8x32xf32, #tpu.memory_space<vmem>>, vector<8x32xf32>,
    %c1_i32 = arith.constant 1 : i32
    %347 = arith.cmpi eq, %arg1, %c1_i32 : i32
    %348 = arith.extui %347 : i1 to i32
    %c0_i32_116 = arith.constant 0 : i32
    %349 = arith.cmpi ne, %348, %c0_i32_116 : i32
    scf.if %349 {
      %350 = arith.truncf %345 : vector<8x32xf32> to vector<8x32xbf16>
      %c0_117 = arith.constant 0 : index
      %c0_118 = arith.constant 0 : index
      %351 = vector.load %arg16[%c0_117, %c0_118] : memref<32x128xbf16, #tpu.memory_space<vmem>>, vector<32x128xbf16>
      %cst_119 = arith.constant dense<0.000000e+00> : vector<8x128xf32>
      %352 = tpu.matmul %350, %351, %cst_119 {dimension_numbers = #tpu.dot_dimension_numbers<[1], [0], [0], [1], [0, 0, 1, 1], [], []>} : vector<8x32xbf16>, vector<32x128xbf16>, vector<8x128xf32> -> vector<8x128xf32>
      %c0_120 = arith.constant 0 : index
      %c0_121 = arith.constant 0 : index
      %353 = vector.load %arg17[%c0_120, %c0_121] : memref<1x128xf32, #tpu.memory_space<vmem>>, vector<1x128xf32>
      %354 = vector.broadcast %353 : vector<1x128xf32> to vector<8x128xf32>
      %355 = arith.addf %352, %354 : vector<8x128xf32>
      %c0_122 = arith.constant 0 : index
      %c0_123 = arith.constant 0 : index
      %c0_124 = arith.constant 0 : index
      %356 = vector.load %arg18[%c0_122, %c0_123, %c0_124] : memref<1x8x128xf32, #tpu.memory_space<vmem>>, vector<1x8x128xf32>
      %357 = vector.shape_cast %356 : vector<1x8x128xf32> to vector<8x128xf32>
      %358 = vector.shape_cast %355 : vector<8x128xf32> to vector<1x8x128xf32>
      tpu.vector_store %arg18[%c0_122, %c0_123, %c0_124], %358 {strides = array<i32>} : memref<1x8x128xf32, #tpu.memory_space<vmem>>, vector<1x8x128xf32>,
    } else {
    }
    return
  }
  func.func @transform_0(%arg0: i32, %arg1: i32) -> (i32, i32, i32) {
    %c0_i32 = arith.constant 0 : i32
    %c0_i32_0 = arith.constant 0 : i32
    %c0_i32_1 = arith.constant 0 : i32
    return %arg0, %c0_i32, %c0_i32_0 : i32, i32, i32
  }
  func.func @transform_1(%arg0: i32, %arg1: i32) -> (i32, i32, i32) {
    %c0_i32 = arith.constant 0 : i32
    %c0_i32_0 = arith.constant 0 : i32
    %c0_i32_1 = arith.constant 0 : i32
    return %arg0, %c0_i32, %c0_i32_0 : i32, i32, i32
  }
  func.func @transform_2(%arg0: i32, %arg1: i32) -> (i32, i32, i32) {
    %c0_i32 = arith.constant 0 : i32
    %c0_i32_0 = arith.constant 0 : i32
    %c0_i32_1 = arith.constant 0 : i32
    return %arg0, %c0_i32, %c0_i32_0 : i32, i32, i32
  }
  func.func @transform_3(%arg0: i32, %arg1: i32) -> (i32, i32, i32) {
    %c0_i32 = arith.constant 0 : i32
    %c0_i32_0 = arith.constant 0 : i32
    %c0_i32_1 = arith.constant 0 : i32
    return %arg0, %c0_i32, %c0_i32_0 : i32, i32, i32
  }
  func.func @transform_4(%arg0: i32, %arg1: i32) -> (i32, i32, i32) {
    %c0_i32 = arith.constant 0 : i32
    %c0_i32_0 = arith.constant 0 : i32
    %c0_i32_1 = arith.constant 0 : i32
    return %arg1, %c0_i32, %c0_i32_0 : i32, i32, i32
  }
  func.func @transform_5(%arg0: i32, %arg1: i32) -> (i32, i32, i32) {
    %c0_i32 = arith.constant 0 : i32
    %c0_i32_0 = arith.constant 0 : i32
    %c0_i32_1 = arith.constant 0 : i32
    return %arg1, %c0_i32, %c0_i32_0 : i32, i32, i32
  }
  func.func @transform_6(%arg0: i32, %arg1: i32) -> (i32, i32, i32) {
    %c0_i32 = arith.constant 0 : i32
    %c0_i32_0 = arith.constant 0 : i32
    %c0_i32_1 = arith.constant 0 : i32
    return %arg1, %c0_i32, %c0_i32_0 : i32, i32, i32
  }
  func.func @transform_7(%arg0: i32, %arg1: i32) -> (i32, i32, i32) {
    %c0_i32 = arith.constant 0 : i32
    %c0_i32_0 = arith.constant 0 : i32
    %c0_i32_1 = arith.constant 0 : i32
    return %arg1, %c0_i32, %c0_i32_0 : i32, i32, i32
  }
  func.func @transform_8(%arg0: i32, %arg1: i32) -> (i32, i32, i32) {
    %c0_i32 = arith.constant 0 : i32
    %c0_i32_0 = arith.constant 0 : i32
    %c0_i32_1 = arith.constant 0 : i32
    return %arg1, %c0_i32, %c0_i32_0 : i32, i32, i32
  }
  func.func @transform_9(%arg0: i32, %arg1: i32) -> (i32, i32, i32) {
    %c0_i32 = arith.constant 0 : i32
    %c0_i32_0 = arith.constant 0 : i32
    %c0_i32_1 = arith.constant 0 : i32
    return %arg1, %c0_i32, %c0_i32_0 : i32, i32, i32
  }
  func.func @transform_10(%arg0: i32, %arg1: i32) -> (i32, i32, i32) {
    %c0_i32 = arith.constant 0 : i32
    %c0_i32_0 = arith.constant 0 : i32
    %c0_i32_1 = arith.constant 0 : i32
    return %arg1, %c0_i32, %c0_i32_0 : i32, i32, i32
  }
  func.func @transform_11(%arg0: i32, %arg1: i32) -> (i32, i32, i32) {
    %c0_i32 = arith.constant 0 : i32
    %c0_i32_0 = arith.constant 0 : i32
    %c0_i32_1 = arith.constant 0 : i32
    return %arg1, %c0_i32, %c0_i32_0 : i32, i32, i32
  }
  func.func @transform_12(%arg0: i32, %arg1: i32) -> (i32, i32, i32) {
    %c0_i32 = arith.constant 0 : i32
    %c0_i32_0 = arith.constant 0 : i32
    %c0_i32_1 = arith.constant 0 : i32
    return %arg1, %c0_i32, %c0_i32_0 : i32, i32, i32
  }
  func.func @transform_13(%arg0: i32, %arg1: i32) -> (i32, i32, i32) {
    %c0_i32 = arith.constant 0 : i32
    %c0_i32_0 = arith.constant 0 : i32
    %c0_i32_1 = arith.constant 0 : i32
    return %arg1, %c0_i32, %c0_i32_0 : i32, i32, i32
  }
  func.func @transform_14(%arg0: i32, %arg1: i32) -> (i32, i32) {
    %c0_i32 = arith.constant 0 : i32
    %c0_i32_0 = arith.constant 0 : i32
    %c0_i32_1 = arith.constant 0 : i32
    return %c0_i32, %c0_i32_0 : i32, i32
  }
  func.func @transform_15(%arg0: i32, %arg1: i32) -> (i32, i32) {
    %c0_i32 = arith.constant 0 : i32
    %c0_i32_0 = arith.constant 0 : i32
    %c0_i32_1 = arith.constant 0 : i32
    return %c0_i32, %c0_i32_0 : i32, i32
  }
  func.func @transform_16(%arg0: i32, %arg1: i32) -> (i32, i32, i32) {
    %c0_i32 = arith.constant 0 : i32
    %c0_i32_0 = arith.constant 0 : i32
    %c0_i32_1 = arith.constant 0 : i32
    return %arg0, %c0_i32, %c0_i32_0 : i32, i32, i32
  }
}

</mosaic_0001>

<llo_original>
// kernel: decoder_forward.1
$region0: #{decoder_forward.1}
  #allocation0 [shape = 'u32[]', space=smem, size = 0x4, offset = 0x4, fixed_abs, tag = 'smem constant byte address 0x4 - core index']
  #allocation1 [shape = 'u32[144,128]{1,0:T(1,128)}', space=vmem, size = 0x12000, scoped, tag = 'internal scratch']
  #allocation2 [shape = 'f32[8,32]{1,0:T(8,128)}', space=vmem, size = 0x1000, scoped, tag = 'scratch operand']
  %s0 = inlined_call_operand.vmem [shape: f32[2,8,32], index: 0, kind: input, shape index: {}]
  %s1 = inlined_call_operand.vmem [shape: f32[2,8,32], index: 1, kind: input, shape index: {}]
  %s2 = inlined_call_operand.vmem [shape: f32[2,8,8], index: 2, kind: input, shape index: {}]
  %s3 = inlined_call_operand.vmem [shape: f32[2,8,8], index: 3, kind: input, shape index: {}]
  %s4 = inlined_call_operand.vmem [shape: bf16[2,32,32], index: 4, kind: input, shape index: {}]
  %s5 = inlined_call_operand.vmem [shape: bf16[2,32,64], index: 5, kind: input, shape index: {}]
  %s6 = inlined_call_operand.vmem [shape: bf16[2,32,32], index: 6, kind: input, shape index: {}]
  %s7 = inlined_call_operand.vmem [shape: bf16[2,32,32], index: 7, kind: input, shape index: {}]
  %s8 = inlined_call_operand.vmem [shape: bf16[2,32,64], index: 8, kind: input, shape index: {}]
  %s9 = inlined_call_operand.vmem [shape: bf16[2,32,32], index: 9, kind: input, shape index: {}]
  %s10 = inlined_call_operand.vmem [shape: bf16[2,32,64], index: 10, kind: input, shape index: {}]
  %s11 = inlined_call_operand.vmem [shape: bf16[2,64,32], index: 11, kind: input, shape index: {}]
  %s12 = inlined_call_operand.vmem [shape: f32[2,1,64], index: 12, kind: input, shape index: {}]
  %s13 = inlined_call_operand.vmem [shape: f32[2,9,32], index: 13, kind: input, shape index: {}]
  %s14 = inlined_call_operand.vmem [shape: bf16[32,128], index: 14, kind: input, shape index: {}]
  %s15 = inlined_call_operand.vmem [shape: f32[1,128], index: 15, kind: input, shape index: {}]
  %s16 = inlined_call_operand.hbm [shape: f32[2,8,128], index: 16, kind: output, shape index: {}]
  %s17 = sld [smem:[#allocation0]]
  $region105: #{decoder_forward.1} parent=0
    _
  %s19 = ssub.s32 1, %s17
  %s20 = scalar_select 0, %s19, %s17
  $region1: #{decoder_forward.1} parent=0
    #allocation3 [shape = 'u8[8192]{0}', space=vmem, size = 0x2000, scoped, tag = 'output window, operand 0']
    #allocation4 [shape = 's32[2]{0}', space=sflag, size = 0x8, scoped, tag = 'scoped memory for decoder_forward.1']
    %21 = vsyncpa [#allocation4], 0
    %s22 = scalar_lea.sflag [#allocation4], 1
    %23 = vsyncpa %s22, 0
    loop: start=0, step=1, limit=6
    $region2: #{decoder_forward.1} parent=1 // loop_pre_header
      _
    $region3: #{decoder_forward.1} parent=1 // loop_header
      %s25 = sphi 0, %s29
      %p26 = scmp.ge.s32.totalorder %s25, 6
      %s32 = sphi 0, %s44
      %s33 = sphi 0, %s40
      %s34 = sphi 0, %s32
      %s35 = sphi 0, %s33
      %s36 = sphi 0, %s34
      %s37 = sphi 0, %s35
      %s47 = sphi 0, %s49
      %s50 = sphi 0, %s47
      %s51 = sphi 0, %s50
      %s67 = sphi 0, %s51
      %s73 = sphi 0, %s75
      %s76 = sphi 0, %s73
      %s77 = sphi 0, %s76
      %s93 = sphi 0, %s77
      %s99 = sphi 0, %s101
      %s102 = sphi 0, %s99
      %s103 = sphi 0, %s102
      %s119 = sphi 0, %s103
      %s125 = sphi 0, %s127
      %s128 = sphi 0, %s125
      %s129 = sphi 0, %s128
      %s145 = sphi 0, %s129
      %s151 = sphi 0, %s153
      %s154 = sphi 0, %s151
      %s155 = sphi 0, %s154
      %s171 = sphi 0, %s155
      %s177 = sphi 0, %s179
      %s180 = sphi 0, %s177
      %s181 = sphi 0, %s180
      %s197 = sphi 0, %s181
      %s203 = sphi 0, %s205
      %s206 = sphi 0, %s203
      %s207 = sphi 0, %s206
      %s223 = sphi 0, %s207
      %s229 = sphi 0, %s231
      %s232 = sphi 0, %s229
      %s233 = sphi 0, %s232
      %s249 = sphi 0, %s233
      %s255 = sphi 0, %s257
      %s258 = sphi 0, %s255
      %s259 = sphi 0, %s258
      %s275 = sphi 0, %s259
      %s281 = sphi 0, %s283
      %s284 = sphi 0, %s281
      %s285 = sphi 0, %s284
      %s301 = sphi 0, %s285
      %s307 = sphi 0, %s309
      %s310 = sphi 0, %s307
      %s311 = sphi 0, %s310
      %s327 = sphi 0, %s311
      %s333 = sphi 0, %s335
      %s336 = sphi 0, %s333
      %s337 = sphi 0, %s336
      %s353 = sphi 0, %s337
      %s359 = sphi 0, %s361
      %s362 = sphi 0, %s359
      %s363 = sphi 0, %s362
      %s379 = sphi 0, %s363
      %s385 = sphi 0, %s387
      %s388 = sphi 0, %s385
      %s389 = sphi 0, %s388
      %s405 = sphi 0, %s389
      %s409 = sphi 0, %s409
      %s411 = sphi 0, %s409
      %s412 = sphi 0, %s411
      %s426 = sphi 0, %s412
      %s430 = sphi 0, %s430
      %s432 = sphi 0, %s430
      %s433 = sphi 0, %s432
      %s447 = sphi 0, %s433
      %s453 = sphi 0, %s455
      %s456 = sphi 0, %s453
      %s457 = sphi 0, %s456
      %s473 = sphi 0, %s457
    $region4: #{decoder_forward.1} parent=1 // loop_header_branch
      %28 = sbr.rel (%p26) target = $region8
    $region5: #{decoder_forward.1} parent=1 // loop_body
      %s30 = ssub.s32 %s25, 1
      %s31 = ssub.s32 %s25, 2
      %s38 = sadd.s32 1, %s33
      %p39 = scmp.ge.s32.totalorder %s38, 2
      %s40 = scalar_select %p39, 0, %s38
      %s41 = sadd.s32 1, %s32
      %s42 = scalar_select %p39, %s41, %s32
      %p43 = scmp.ge.s32.totalorder %s42, 2
      %s44 = scalar_select %p43, 0, %s42
      %s45 = ssub.s32 %s32, %s44
      %p46 = scmp.eq.s32.totalorder %s45, 0
      %s48 = sadd.s32 %s47, 1
      %s49 = scalar_select %p46, %s47, %s48
      %p52 = pneg %p46
      %p53 = scmp.eq.s32.totalorder %s25, 3
      %p54 = por %p52, %p53
      %p55 = scmp.ne.s32.totalorder %s47, %s50
      %p56 = scmp.eq.s32.totalorder %s25, 0
      %p57 = por %p55, %p56
      %p58 = scmp.ne.s32.totalorder %s47, %s50
      %p59 = scmp.eq.s32.totalorder %s30, 3
      %p60 = por %p58, %p59
      %p61 = scmp.ne.s32.totalorder %s50, %s51
      %p62 = scmp.eq.s32.totalorder %s30, 0
      %p63 = por %p61, %p62
      %p64 = scmp.ne.s32.totalorder %s50, %s51
      %p65 = scmp.eq.s32.totalorder %s31, 3
      %p66 = por %p64, %p65
      %p68 = scmp.ne.s32.totalorder %s51, %s67
      %p69 = scmp.eq.s32.totalorder %s31, 0
      %p70 = por %p68, %p69
      %s71 = ssub.s32 %s32, %s44
      %p72 = scmp.eq.s32.totalorder %s71, 0
      %s74 = sadd.s32 %s73, 1
      %s75 = scalar_select %p72, %s73, %s74
      %p78 = pneg %p72
      %p79 = scmp.eq.s32.totalorder %s25, 3
      %p80 = por %p78, %p79
      %p81 = scmp.ne.s32.totalorder %s73, %s76
      %p82 = scmp.eq.s32.totalorder %s25, 0
      %p83 = por %p81, %p82
      %p84 = scmp.ne.s32.totalorder %s73, %s76
      %p85 = scmp.eq.s32.totalorder %s30, 3
      %p86 = por %p84, %p85
      %p87 = scmp.ne.s32.totalorder %s76, %s77
      %p88 = scmp.eq.s32.totalorder %s30, 0
      %p89 = por %p87, %p88
      %p90 = scmp.ne.s32.totalorder %s76, %s77
      %p91 = scmp.eq.s32.totalorder %s31, 3
      %p92 = por %p90, %p91
      %p94 = scmp.ne.s32.totalorder %s77, %s93
      %p95 = scmp.eq.s32.totalorder %s31, 0
      %p96 = por %p94, %p95
      %s97 = ssub.s32 %s32, %s44
      %p98 = scmp.eq.s32.totalorder %s97, 0
      %s100 = sadd.s32 %s99, 1
      %s101 = scalar_select %p98, %s99, %s100
      %p104 = pneg %p98
      %p105 = scmp.eq.s32.totalorder %s25, 3
      %p106 = por %p104, %p105
      %p107 = scmp.ne.s32.totalorder %s99, %s102
      %p108 = scmp.eq.s32.totalorder %s25, 0
      %p109 = por %p107, %p108
      %p110 = scmp.ne.s32.totalorder %s99, %s102
      %p111 = scmp.eq.s32.totalorder %s30, 3
      %p112 = por %p110, %p111
      %p113 = scmp.ne.s32.totalorder %s102, %s103
      %p114 = scmp.eq.s32.totalorder %s30, 0
      %p115 = por %p113, %p114
      %p116 = scmp.ne.s32.totalorder %s102, %s103
      %p117 = scmp.eq.s32.totalorder %s31, 3
      %p118 = por %p116, %p117
      %p120 = scmp.ne.s32.totalorder %s103, %s119
      %p121 = scmp.eq.s32.totalorder %s31, 0
      %p122 = por %p120, %p121
      %s123 = ssub.s32 %s32, %s44
      %p124 = scmp.eq.s32.totalorder %s123, 0
      %s126 = sadd.s32 %s125, 1
      %s127 = scalar_select %p124, %s125, %s126
      %p130 = pneg %p124
      %p131 = scmp.eq.s32.totalorder %s25, 3
      %p132 = por %p130, %p131
      %p133 = scmp.ne.s32.totalorder %s125, %s128
      %p134 = scmp.eq.s32.totalorder %s25, 0
      %p135 = por %p133, %p134
      %p136 = scmp.ne.s32.totalorder %s125, %s128
      %p137 = scmp.eq.s32.totalorder %s30, 3
      %p138 = por %p136, %p137
      %p139 = scmp.ne.s32.totalorder %s128, %s129
      %p140 = scmp.eq.s32.totalorder %s30, 0
      %p141 = por %p139, %p140
      %p142 = scmp.ne.s32.totalorder %s128, %s129
      %p143 = scmp.eq.s32.totalorder %s31, 3
      %p144 = por %p142, %p143
      %p146 = scmp.ne.s32.totalorder %s129, %s145
      %p147 = scmp.eq.s32.totalorder %s31, 0
      %p148 = por %p146, %p147
      %s149 = ssub.s32 %s33, %s40
      %p150 = scmp.eq.s32.totalorder %s149, 0
      %s152 = sadd.s32 %s151, 1
      %s153 = scalar_select %p150, %s151, %s152
      %p156 = pneg %p150
      %p157 = scmp.eq.s32.totalorder %s25, 3
      %p158 = por %p156, %p157
      %p159 = scmp.ne.s32.totalorder %s151, %s154
      %p160 = scmp.eq.s32.totalorder %s25, 0
      %p161 = por %p159, %p160
      %p162 = scmp.ne.s32.totalorder %s151, %s154
      %p163 = scmp.eq.s32.totalorder %s30, 3
      %p164 = por %p162, %p163
      %p165 = scmp.ne.s32.totalorder %s154, %s155
      %p166 = scmp.eq.s32.totalorder %s30, 0
      %p167 = por %p165, %p166
      %p168 = scmp.ne.s32.totalorder %s154, %s155
      %p169 = scmp.eq.s32.totalorder %s31, 3
      %p170 = por %p168, %p169
      %p172 = scmp.ne.s32.totalorder %s155, %s171
      %p173 = scmp.eq.s32.totalorder %s31, 0
      %p174 = por %p172, %p173
      %s175 = ssub.s32 %s33, %s40
      %p176 = scmp.eq.s32.totalorder %s175, 0
      %s178 = sadd.s32 %s177, 1
      %s179 = scalar_select %p176, %s177, %s178
      %p182 = pneg %p176
      %p183 = scmp.eq.s32.totalorder %s25, 3
      %p184 = por %p182, %p183
      %p185 = scmp.ne.s32.totalorder %s177, %s180
      %p186 = scmp.eq.s32.totalorder %s25, 0
      %p187 = por %p185, %p186
      %p188 = scmp.ne.s32.totalorder %s177, %s180
      %p189 = scmp.eq.s32.totalorder %s30, 3
      %p190 = por %p188, %p189
      %p191 = scmp.ne.s32.totalorder %s180, %s181
      %p192 = scmp.eq.s32.totalorder %s30, 0
      %p193 = por %p191, %p192
      %p194 = scmp.ne.s32.totalorder %s180, %s181
      %p195 = scmp.eq.s32.totalorder %s31, 3
      %p196 = por %p194, %p195
      %p198 = scmp.ne.s32.totalorder %s181, %s197
      %p199 = scmp.eq.s32.totalorder %s31, 0
      %p200 = por %p198, %p199
      %s201 = ssub.s32 %s33, %s40
      %p202 = scmp.eq.s32.totalorder %s201, 0
      %s204 = sadd.s32 %s203, 1
      %s205 = scalar_select %p202, %s203, %s204
      %p208 = pneg %p202
      %p209 = scmp.eq.s32.totalorder %s25, 3
      %p210 = por %p208, %p209
      %p211 = scmp.ne.s32.totalorder %s203, %s206
      %p212 = scmp.eq.s32.totalorder %s25, 0
      %p213 = por %p211, %p212
      %p214 = scmp.ne.s32.totalorder %s203, %s206
      %p215 = scmp.eq.s32.totalorder %s30, 3
      %p216 = por %p214, %p215
      %p217 = scmp.ne.s32.totalorder %s206, %s207
      %p218 = scmp.eq.s32.totalorder %s30, 0
      %p219 = por %p217, %p218
      %p220 = scmp.ne.s32.totalorder %s206, %s207
      %p221 = scmp.eq.s32.totalorder %s31, 3
      %p222 = por %p220, %p221
      %p224 = scmp.ne.s32.totalorder %s207, %s223
      %p225 = scmp.eq.s32.totalorder %s31, 0
      %p226 = por %p224, %p225
      %s227 = ssub.s32 %s33, %s40
      %p228 = scmp.eq.s32.totalorder %s227, 0
      %s230 = sadd.s32 %s229, 1
      %s231 = scalar_select %p228, %s229, %s230
      %p234 = pneg %p228
      %p235 = scmp.eq.s32.totalorder %s25, 3
      %p236 = por %p234, %p235
      %p237 = scmp.ne.s32.totalorder %s229, %s232
      %p238 = scmp.eq.s32.totalorder %s25, 0
      %p239 = por %p237, %p238
      %p240 = scmp.ne.s32.totalorder %s229, %s232
      %p241 = scmp.eq.s32.totalorder %s30, 3
      %p242 = por %p240, %p241
      %p243 = scmp.ne.s32.totalorder %s232, %s233
      %p244 = scmp.eq.s32.totalorder %s30, 0
      %p245 = por %p243, %p244
      %p246 = scmp.ne.s32.totalorder %s232, %s233
      %p247 = scmp.eq.s32.totalorder %s31, 3
      %p248 = por %p246, %p247
      %p250 = scmp.ne.s32.totalorder %s233, %s249
      %p251 = scmp.eq.s32.totalorder %s31, 0
      %p252 = por %p250, %p251
      %s253 = ssub.s32 %s33, %s40
      %p254 = scmp.eq.s32.totalorder %s253, 0
      %s256 = sadd.s32 %s255, 1
      %s257 = scalar_select %p254, %s255, %s256
      %p260 = pneg %p254
      %p261 = scmp.eq.s32.totalorder %s25, 3
      %p262 = por %p260, %p261
      %p263 = scmp.ne.s32.totalorder %s255, %s258
      %p264 = scmp.eq.s32.totalorder %s25, 0
      %p265 = por %p263, %p264
      %p266 = scmp.ne.s32.totalorder %s255, %s258
      %p267 = scmp.eq.s32.totalorder %s30, 3
      %p268 = por %p266, %p267
      %p269 = scmp.ne.s32.totalorder %s258, %s259
      %p270 = scmp.eq.s32.totalorder %s30, 0
      %p271 = por %p269, %p270
      %p272 = scmp.ne.s32.totalorder %s258, %s259
      %p273 = scmp.eq.s32.totalorder %s31, 3
      %p274 = por %p272, %p273
      %p276 = scmp.ne.s32.totalorder %s259, %s275
      %p277 = scmp.eq.s32.totalorder %s31, 0
      %p278 = por %p276, %p277
      %s279 = ssub.s32 %s33, %s40
      %p280 = scmp.eq.s32.totalorder %s279, 0
      %s282 = sadd.s32 %s281, 1
      %s283 = scalar_select %p280, %s281, %s282
      %p286 = pneg %p280
      %p287 = scmp.eq.s32.totalorder %s25, 3
      %p288 = por %p286, %p287
      %p289 = scmp.ne.s32.totalorder %s281, %s284
      %p290 = scmp.eq.s32.totalorder %s25, 0
      %p291 = por %p289, %p290
      %p292 = scmp.ne.s32.totalorder %s281, %s284
      %p293 = scmp.eq.s32.totalorder %s30, 3
      %p294 = por %p292, %p293
      %p295 = scmp.ne.s32.totalorder %s284, %s285
      %p296 = scmp.eq.s32.totalorder %s30, 0
      %p297 = por %p295, %p296
      %p298 = scmp.ne.s32.totalorder %s284, %s285
      %p299 = scmp.eq.s32.totalorder %s31, 3
      %p300 = por %p298, %p299
      %p302 = scmp.ne.s32.totalorder %s285, %s301
      %p303 = scmp.eq.s32.totalorder %s31, 0
      %p304 = por %p302, %p303
      %s305 = ssub.s32 %s33, %s40
      %p306 = scmp.eq.s32.totalorder %s305, 0
      %s308 = sadd.s32 %s307, 1
      %s309 = scalar_select %p306, %s307, %s308
      %p312 = pneg %p306
      %p313 = scmp.eq.s32.totalorder %s25, 3
      %p314 = por %p312, %p313
      %p315 = scmp.ne.s32.totalorder %s307, %s310
      %p316 = scmp.eq.s32.totalorder %s25, 0
      %p317 = por %p315, %p316
      %p318 = scmp.ne.s32.totalorder %s307, %s310
      %p319 = scmp.eq.s32.totalorder %s30, 3
      %p320 = por %p318, %p319
      %p321 = scmp.ne.s32.totalorder %s310, %s311
      %p322 = scmp.eq.s32.totalorder %s30, 0
      %p323 = por %p321, %p322
      %p324 = scmp.ne.s32.totalorder %s310, %s311
      %p325 = scmp.eq.s32.totalorder %s31, 3
      %p326 = por %p324, %p325
      %p328 = scmp.ne.s32.totalorder %s311, %s327
      %p329 = scmp.eq.s32.totalorder %s31, 0
      %p330 = por %p328, %p329
      %s331 = ssub.s32 %s33, %s40
      %p332 = scmp.eq.s32.totalorder %s331, 0
      %s334 = sadd.s32 %s333, 1
      %s335 = scalar_select %p332, %s333, %s334
      %p338 = pneg %p332
      %p339 = scmp.eq.s32.totalorder %s25, 3
      %p340 = por %p338, %p339
      %p341 = scmp.ne.s32.totalorder %s333, %s336
      %p342 = scmp.eq.s32.totalorder %s25, 0
      %p343 = por %p341, %p342
      %p344 = scmp.ne.s32.totalorder %s333, %s336
      %p345 = scmp.eq.s32.totalorder %s30, 3
      %p346 = por %p344, %p345
      %p347 = scmp.ne.s32.totalorder %s336, %s337
      %p348 = scmp.eq.s32.totalorder %s30, 0
      %p349 = por %p347, %p348
      %p350 = scmp.ne.s32.totalorder %s336, %s337
      %p351 = scmp.eq.s32.totalorder %s31, 3
      %p352 = por %p350, %p351
      %p354 = scmp.ne.s32.totalorder %s337, %s353
      %p355 = scmp.eq.s32.totalorder %s31, 0
      %p356 = por %p354, %p355
      %s357 = ssub.s32 %s33, %s40
      %p358 = scmp.eq.s32.totalorder %s357, 0
      %s360 = sadd.s32 %s359, 1
      %s361 = scalar_select %p358, %s359, %s360
      %p364 = pneg %p358
      %p365 = scmp.eq.s32.totalorder %s25, 3
      %p366 = por %p364, %p365
      %p367 = scmp.ne.s32.totalorder %s359, %s362
      %p368 = scmp.eq.s32.totalorder %s25, 0
      %p369 = por %p367, %p368
      %p370 = scmp.ne.s32.totalorder %s359, %s362
      %p371 = scmp.eq.s32.totalorder %s30, 3
      %p372 = por %p370, %p371
      %p373 = scmp.ne.s32.totalorder %s362, %s363
      %p374 = scmp.eq.s32.totalorder %s30, 0
      %p375 = por %p373, %p374
      %p376 = scmp.ne.s32.totalorder %s362, %s363
      %p377 = scmp.eq.s32.totalorder %s31, 3
      %p378 = por %p376, %p377
      %p380 = scmp.ne.s32.totalorder %s363, %s379
      %p381 = scmp.eq.s32.totalorder %s31, 0
      %p382 = por %p380, %p381
      %s383 = ssub.s32 %s33, %s40
      %p384 = scmp.eq.s32.totalorder %s383, 0
      %s386 = sadd.s32 %s385, 1
      %s387 = scalar_select %p384, %s385, %s386
      %p390 = pneg %p384
      %p391 = scmp.eq.s32.totalorder %s25, 3
      %p392 = por %p390, %p391
      %p393 = scmp.ne.s32.totalorder %s385, %s388
      %p394 = scmp.eq.s32.totalorder %s25, 0
      %p395 = por %p393, %p394
      %p396 = scmp.ne.s32.totalorder %s385, %s388
      %p397 = scmp.eq.s32.totalorder %s30, 3
      %p398 = por %p396, %p397
      %p399 = scmp.ne.s32.totalorder %s388, %s389
      %p400 = scmp.eq.s32.totalorder %s30, 0
      %p401 = por %p399, %p400
      %p402 = scmp.ne.s32.totalorder %s388, %s389
      %p403 = scmp.eq.s32.totalorder %s31, 3
      %p404 = por %p402, %p403
      %p406 = scmp.ne.s32.totalorder %s389, %s405
      %p407 = scmp.eq.s32.totalorder %s31, 0
      %p408 = por %p406, %p407
      %s410 = sadd.s32 %s409, 1
      %p413 = scmp.eq.s32.totalorder %s25, 3
      %p414 = scmp.ne.s32.totalorder %s409, %s411
      %p415 = scmp.eq.s32.totalorder %s25, 0
      %p416 = por %p414, %p415
      %p417 = scmp.ne.s32.totalorder %s409, %s411
      %p418 = scmp.eq.s32.totalorder %s30, 3
      %p419 = por %p417, %p418
      %p420 = scmp.ne.s32.totalorder %s411, %s412
      %p421 = scmp.eq.s32.totalorder %s30, 0
      %p422 = por %p420, %p421
      %p423 = scmp.ne.s32.totalorder %s411, %s412
      %p424 = scmp.eq.s32.totalorder %s31, 3
      %p425 = por %p423, %p424
      %p427 = scmp.ne.s32.totalorder %s412, %s426
      %p428 = scmp.eq.s32.totalorder %s31, 0
      %p429 = por %p427, %p428
      %s431 = sadd.s32 %s430, 1
      %p434 = scmp.eq.s32.totalorder %s25, 3
      %p435 = scmp.ne.s32.totalorder %s430, %s432
      %p436 = scmp.eq.s32.totalorder %s25, 0
      %p437 = por %p435, %p436
      %p438 = scmp.ne.s32.totalorder %s430, %s432
      %p439 = scmp.eq.s32.totalorder %s30, 3
      %p440 = por %p438, %p439
      %p441 = scmp.ne.s32.totalorder %s432, %s433
      %p442 = scmp.eq.s32.totalorder %s30, 0
      %p443 = por %p441, %p442
      %p444 = scmp.ne.s32.totalorder %s432, %s433
      %p445 = scmp.eq.s32.totalorder %s31, 3
      %p446 = por %p444, %p445
      %p448 = scmp.ne.s32.totalorder %s433, %s447
      %p449 = scmp.eq.s32.totalorder %s31, 0
      %p450 = por %p448, %p449
      %s451 = ssub.s32 %s32, %s44
      %p452 = scmp.eq.s32.totalorder %s451, 0
      %s454 = sadd.s32 %s453, 1
      %s455 = scalar_select %p452, %s453, %s454
      %p458 = pneg %p452
      %p459 = scmp.eq.s32.totalorder %s25, 3
      %p460 = por %p458, %p459
      %p461 = scmp.ne.s32.totalorder %s453, %s456
      %p462 = scmp.eq.s32.totalorder %s25, 0
      %p463 = por %p461, %p462
      %p464 = scmp.ne.s32.totalorder %s453, %s456
      %p465 = scmp.eq.s32.totalorder %s30, 3
      %p466 = por %p464, %p465
      %p467 = scmp.ne.s32.totalorder %s456, %s457
      %p468 = scmp.eq.s32.totalorder %s30, 0
      %p469 = por %p467, %p468
      %p470 = scmp.ne.s32.totalorder %s456, %s457
      %p471 = scmp.eq.s32.totalorder %s31, 3
      %p472 = por %p470, %p471
      %p474 = scmp.ne.s32.totalorder %s457, %s473
      %p475 = scmp.eq.s32.totalorder %s31, 0
      %p476 = por %p474, %p475
      %p477 = scmp.le.s32.totalorder 1, %s25
      %p478 = scmp.lt.s32.totalorder %s25, 5
      %p479 = pnand %p477, %p478
      %p480 = pneg %p479
      // Predicated region
      $region9: #{decoder_forward.1} parent=5 // pred_check
        _
      $region10: #{decoder_forward.1} parent=5 // pred_check_branch
        %482 = sbr.rel (%p479) target = $region12
      $region11: #{decoder_forward.1} parent=5 // pred_region
        %s483 = ssub.s32 %s25, 1
        // Predicated region
        $region13: #{decoder_forward.1} parent=11 // pred_check
          %p484 = pneg %p422
        $region14: #{decoder_forward.1} parent=11 // pred_check_branch
          %486 = sbr.rel (%p484) target = $region16
        $region15: #{decoder_forward.1} parent=11 // pred_region
          _
        $region16: #{decoder_forward.1} parent=11 // pred_fallthru
          _
        // Predicated region
        $region17: #{decoder_forward.1} parent=11 // pred_check
          %p487 = pneg %p443
        $region18: #{decoder_forward.1} parent=11 // pred_check_branch
          %489 = sbr.rel (%p487) target = $region20
        $region19: #{decoder_forward.1} parent=11 // pred_region
          _
        $region20: #{decoder_forward.1} parent=11 // pred_fallthru
          _
      $region12: #{decoder_forward.1} parent=5 // pred_fallthru
        _
      %p490 = scmp.lt.s32.totalorder %s25, 4
      // Predicated region
      $region21: #{decoder_forward.1} parent=5 // pred_check
        %p491 = pneg %p490
      $region22: #{decoder_forward.1} parent=5 // pred_check_branch
        %493 = sbr.rel (%p491) target = $region24
      $region23: #{decoder_forward.1} parent=5 // pred_region
        // Predicated region
        $region25: #{decoder_forward.1} parent=23 // pred_check
          %p494 = pneg %p57
        $region26: #{decoder_forward.1} parent=23 // pred_check_branch
          %496 = sbr.rel (%p494) target = $region28
        $region27: #{decoder_forward.1} parent=23 // pred_region
          %p497 = scmp.lt.s32.totalorder %s32, 1
          %s498 = scalar_select %p497, %s32, 1
          %s499 = smul.addr %s498, 8
          %s500 = scalar_lea.vmem %s0, %s499
        $region28: #{decoder_forward.1} parent=23 // pred_fallthru
          _
        // Predicated region
        $region29: #{decoder_forward.1} parent=23 // pred_check
          %p501 = pneg %p83
        $region30: #{decoder_forward.1} parent=23 // pred_check_branch
          %503 = sbr.rel (%p501) target = $region32
        $region31: #{decoder_forward.1} parent=23 // pred_region
          %p504 = scmp.lt.s32.totalorder %s32, 1
          %s505 = scalar_select %p504, %s32, 1
          %s506 = smul.addr %s505, 8
          %s507 = scalar_lea.vmem %s1, %s506
        $region32: #{decoder_forward.1} parent=23 // pred_fallthru
          _
        // Predicated region
        $region33: #{decoder_forward.1} parent=23 // pred_check
          %p508 = pneg %p109
        $region34: #{decoder_forward.1} parent=23 // pred_check_branch
          %510 = sbr.rel (%p508) target = $region36
        $region35: #{decoder_forward.1} parent=23 // pred_region
          %p511 = scmp.lt.s32.totalorder %s32, 1
          %s512 = scalar_select %p511, %s32, 1
          %s513 = smul.addr %s512, 8
          %s514 = scalar_lea.vmem %s2, %s513
        $region36: #{decoder_forward.1} parent=23 // pred_fallthru
          _
        // Predicated region
        $region37: #{decoder_forward.1} parent=23 // pred_check
          %p515 = pneg %p135
        $region38: #{decoder_forward.1} parent=23 // pred_check_branch
          %517 = sbr.rel (%p515) target = $region40
        $region39: #{decoder_forward.1} parent=23 // pred_region
          %p518 = scmp.lt.s32.totalorder %s32, 1
          %s519 = scalar_select %p518, %s32, 1
          %s520 = smul.addr %s519, 8
          %s521 = scalar_lea.vmem %s3, %s520
        $region40: #{decoder_forward.1} parent=23 // pred_fallthru
          _
        // Predicated region
        $region41: #{decoder_forward.1} parent=23 // pred_check
          %p522 = pneg %p161
        $region42: #{decoder_forward.1} parent=23 // pred_check_branch
          %524 = sbr.rel (%p522) target = $region44
        $region43: #{decoder_forward.1} parent=23 // pred_region
          %p525 = scmp.lt.s32.totalorder %s33, 1
          %s526 = scalar_select %p525, %s33, 1
          %s527 = smul.addr %s526, 4
          %s528 = smul.addr %s527, 4
          %s529 = scalar_lea.vmem %s4, %s528
        $region44: #{decoder_forward.1} parent=23 // pred_fallthru
          _
        // Predicated region
        $region45: #{decoder_forward.1} parent=23 // pred_check
          %p530 = pneg %p187
        $region46: #{decoder_forward.1} parent=23 // pred_check_branch
          %532 = sbr.rel (%p530) target = $region48
        $region47: #{decoder_forward.1} parent=23 // pred_region
          %p533 = scmp.lt.s32.totalorder %s33, 1
          %s534 = scalar_select %p533, %s33, 1
          %s535 = smul.addr %s534, 4
          %s536 = smul.addr %s535, 4
          %s537 = scalar_lea.vmem %s5, %s536
        $region48: #{decoder_forward.1} parent=23 // pred_fallthru
          _
        // Predicated region
        $region49: #{decoder_forward.1} parent=23 // pred_check
          %p538 = pneg %p213
        $region50: #{decoder_forward.1} parent=23 // pred_check_branch
          %540 = sbr.rel (%p538) target = $region52
        $region51: #{decoder_forward.1} parent=23 // pred_region
          %p541 = scmp.lt.s32.totalorder %s33, 1
          %s542 = scalar_select %p541, %s33, 1
          %s543 = smul.addr %s542, 4
          %s544 = smul.addr %s543, 4
          %s545 = scalar_lea.vmem %s6, %s544
        $region52: #{decoder_forward.1} parent=23 // pred_fallthru
          _
        // Predicated region
        $region53: #{decoder_forward.1} parent=23 // pred_check
          %p546 = pneg %p239
        $region54: #{decoder_forward.1} parent=23 // pred_check_branch
          %548 = sbr.rel (%p546) target = $region56
        $region55: #{decoder_forward.1} parent=23 // pred_region
          %p549 = scmp.lt.s32.totalorder %s33, 1
          %s550 = scalar_select %p549, %s33, 1
          %s551 = smul.addr %s550, 4
          %s552 = smul.addr %s551, 4
          %s553 = scalar_lea.vmem %s7, %s552
        $region56: #{decoder_forward.1} parent=23 // pred_fallthru
          _
        // Predicated region
        $region57: #{decoder_forward.1} parent=23 // pred_check
          %p554 = pneg %p265
        $region58: #{decoder_forward.1} parent=23 // pred_check_branch
          %556 = sbr.rel (%p554) target = $region60
        $region59: #{decoder_forward.1} parent=23 // pred_region
          %p557 = scmp.lt.s32.totalorder %s33, 1
          %s558 = scalar_select %p557, %s33, 1
          %s559 = smul.addr %s558, 4
          %s560 = smul.addr %s559, 4
          %s561 = scalar_lea.vmem %s8, %s560
        $region60: #{decoder_forward.1} parent=23 // pred_fallthru
          _
        // Predicated region
        $region61: #{decoder_forward.1} parent=23 // pred_check
          %p562 = pneg %p291
        $region62: #{decoder_forward.1} parent=23 // pred_check_branch
          %564 = sbr.rel (%p562) target = $region64
        $region63: #{decoder_forward.1} parent=23 // pred_region
          %p565 = scmp.lt.s32.totalorder %s33, 1
          %s566 = scalar_select %p565, %s33, 1
          %s567 = smul.addr %s566, 4
          %s568 = smul.addr %s567, 4
          %s569 = scalar_lea.vmem %s9, %s568
        $region64: #{decoder_forward.1} parent=23 // pred_fallthru
          _
        // Predicated region
        $region65: #{decoder_forward.1} parent=23 // pred_check
          %p570 = pneg %p317
        $region66: #{decoder_forward.1} parent=23 // pred_check_branch
          %572 = sbr.rel (%p570) target = $region68
        $region67: #{decoder_forward.1} parent=23 // pred_region
          %p573 = scmp.lt.s32.totalorder %s33, 1
          %s574 = scalar_select %p573, %s33, 1
          %s575 = smul.addr %s574, 4
          %s576 = smul.addr %s575, 4
          %s577 = scalar_lea.vmem %s10, %s576
        $region68: #{decoder_forward.1} parent=23 // pred_fallthru
          _
        // Predicated region
        $region69: #{decoder_forward.1} parent=23 // pred_check
          %p578 = pneg %p343
        $region70: #{decoder_forward.1} parent=23 // pred_check_branch
          %580 = sbr.rel (%p578) target = $region72
        $region71: #{decoder_forward.1} parent=23 // pred_region
          %p581 = scmp.lt.s32.totalorder %s33, 1
          %s582 = scalar_select %p581, %s33, 1
          %s583 = smul.addr %s582, 8
          %s584 = smul.addr %s583, 4
          %s585 = scalar_lea.vmem %s11, %s584
        $region72: #{decoder_forward.1} parent=23 // pred_fallthru
          _
        // Predicated region
        $region73: #{decoder_forward.1} parent=23 // pred_check
          %p586 = pneg %p369
        $region74: #{decoder_forward.1} parent=23 // pred_check_branch
          %588 = sbr.rel (%p586) target = $region76
        $region75: #{decoder_forward.1} parent=23 // pred_region
          %p589 = scmp.lt.s32.totalorder %s33, 1
          %s590 = scalar_select %p589, %s33, 1
          %s591 = scalar_lea.vmem %s12, %s590
        $region76: #{decoder_forward.1} parent=23 // pred_fallthru
          _
        // Predicated region
        $region77: #{decoder_forward.1} parent=23 // pred_check
          %p592 = pneg %p395
        $region78: #{decoder_forward.1} parent=23 // pred_check_branch
          %594 = sbr.rel (%p592) target = $region80
        $region79: #{decoder_forward.1} parent=23 // pred_region
          %p595 = scmp.lt.s32.totalorder %s33, 1
          %s596 = scalar_select %p595, %s33, 1
          %s597 = smul.addr %s596, 2
          %s598 = smul.addr %s597, 8
          %s599 = scalar_lea.vmem %s13, %s598
        $region80: #{decoder_forward.1} parent=23 // pred_fallthru
          _
      $region24: #{decoder_forward.1} parent=5 // pred_fallthru
        _
      %p600 = scmp.le.s32.totalorder 1, %s25
      %p601 = scmp.lt.s32.totalorder %s25, 5
      %p602 = pnand %p600, %p601
      %p603 = pneg %p602
      // Predicated region
      $region81: #{decoder_forward.1} parent=5 // pred_check
        _
      $region82: #{decoder_forward.1} parent=5 // pred_check_branch
        %605 = sbr.rel (%p602) target = $region84
      $region83: #{decoder_forward.1} parent=5 // pred_region
        %s606 = ssub.s32 %s25, 1
        %p607 = scmp.lt.s32.totalorder %s34, 1
        %s608 = scalar_select %p607, %s34, 1
        %s609 = smul.addr %s608, 8
        %s610 = scalar_lea.vmem %s0, %s609
        %p611 = pneg %p63
        %p612 = pneg %p60
        %p613 = scmp.lt.s32.totalorder %s34, 1
        %s614 = scalar_select %p613, %s34, 1
        %s615 = smul.addr %s614, 8
        %s616 = scalar_lea.vmem %s1, %s615
        %p617 = pneg %p89
        %p618 = pneg %p86
        %p619 = scmp.lt.s32.totalorder %s34, 1
        %s620 = scalar_select %p619, %s34, 1
        %s621 = smul.addr %s620, 8
        %s622 = scalar_lea.vmem %s2, %s621
        %p623 = pneg %p115
        %p624 = pneg %p112
        %p625 = scmp.lt.s32.totalorder %s34, 1
        %s626 = scalar_select %p625, %s34, 1
        %s627 = smul.addr %s626, 8
        %s628 = scalar_lea.vmem %s3, %s627
        %p629 = pneg %p141
        %p630 = pneg %p138
        %p631 = scmp.lt.s32.totalorder %s35, 1
        %s632 = scalar_select %p631, %s35, 1
        %s633 = smul.addr %s632, 4
        %s634 = smul.addr %s633, 4
        %s635 = scalar_lea.vmem %s4, %s634
        %p636 = pneg %p167
        %p637 = pneg %p164
        %p638 = scmp.lt.s32.totalorder %s35, 1
        %s639 = scalar_select %p638, %s35, 1
        %s640 = smul.addr %s639, 4
        %s641 = smul.addr %s640, 4
        %s642 = scalar_lea.vmem %s5, %s641
        %p643 = pneg %p193
        %p644 = pneg %p190
        %p645 = scmp.lt.s32.totalorder %s35, 1
        %s646 = scalar_select %p645, %s35, 1
        %s647 = smul.addr %s646, 4
        %s648 = smul.addr %s647, 4
        %s649 = scalar_lea.vmem %s6, %s648
        %p650 = pneg %p219
        %p651 = pneg %p216
        %p652 = scmp.lt.s32.totalorder %s35, 1
        %s653 = scalar_select %p652, %s35, 1
        %s654 = smul.addr %s653, 4
        %s655 = smul.addr %s654, 4
        %s656 = scalar_lea.vmem %s7, %s655
        %p657 = pneg %p245
        %p658 = pneg %p242
        %p659 = scmp.lt.s32.totalorder %s35, 1
        %s660 = scalar_select %p659, %s35, 1
        %s661 = smul.addr %s660, 4
        %s662 = smul.addr %s661, 4
        %s663 = scalar_lea.vmem %s8, %s662
        %p664 = pneg %p271
        %p665 = pneg %p268
        %p666 = scmp.lt.s32.totalorder %s35, 1
        %s667 = scalar_select %p666, %s35, 1
        %s668 = smul.addr %s667, 4
        %s669 = smul.addr %s668, 4
        %s670 = scalar_lea.vmem %s9, %s669
        %p671 = pneg %p297
        %p672 = pneg %p294
        %p673 = scmp.lt.s32.totalorder %s35, 1
        %s674 = scalar_select %p673, %s35, 1
        %s675 = smul.addr %s674, 4
        %s676 = smul.addr %s675, 4
        %s677 = scalar_lea.vmem %s10, %s676
        %p678 = pneg %p323
        %p679 = pneg %p320
        %p680 = scmp.lt.s32.totalorder %s35, 1
        %s681 = scalar_select %p680, %s35, 1
        %s682 = smul.addr %s681, 8
        %s683 = smul.addr %s682, 4
        %s684 = scalar_lea.vmem %s11, %s683
        %p685 = pneg %p349
        %p686 = pneg %p346
        %p687 = scmp.lt.s32.totalorder %s35, 1
        %s688 = scalar_select %p687, %s35, 1
        %s689 = scalar_lea.vmem %s12, %s688
        %p690 = pneg %p375
        %p691 = pneg %p372
        %p692 = scmp.lt.s32.totalorder %s35, 1
        %s693 = scalar_select %p692, %s35, 1
        %s694 = smul.addr %s693, 2
        %s695 = smul.addr %s694, 8
        %s696 = scalar_lea.vmem %s13, %s695
        %p697 = pneg %p401
        %p698 = pneg %p398
        %p699 = pneg %p422
        %p700 = pneg %p419
        %p701 = pneg %p443
        %p702 = pneg %p440
        %p703 = pneg %p469
        %p704 = pneg %p466
        %s705 = sand.u32 %s456, 1
        %s706 = scalar_lea.sflag [#allocation4], %s705
        %s707 = sand.u32 %s456, 1
        %s708 = smul.addr %s707, 8
        %s709 = scalar_lea.vmem [#allocation3], %s708
        %p710 = scmp.lt.s32.totalorder %s34, 1
        %s711 = scalar_select %p710, %s34, 1
        %s712 = smul.addr %s711, 8
        %s713 = scalar_lea.vmem %s0, %s712
        %p714 = scmp.lt.s32.totalorder %s34, 1
        %s715 = scalar_select %p714, %s34, 1
        %s716 = smul.addr %s715, 8
        %s717 = scalar_lea.vmem %s1, %s716
        %p718 = scmp.lt.s32.totalorder %s34, 1
        %s719 = scalar_select %p718, %s34, 1
        %s720 = smul.addr %s719, 8
        %s721 = scalar_lea.vmem %s2, %s720
        %p722 = scmp.lt.s32.totalorder %s34, 1
        %s723 = scalar_select %p722, %s34, 1
        %s724 = smul.addr %s723, 8
        %s725 = scalar_lea.vmem %s3, %s724
        %p726 = scmp.lt.s32.totalorder %s35, 1
        %s727 = scalar_select %p726, %s35, 1
        %s728 = smul.addr %s727, 4
        %s729 = smul.addr %s728, 4
        %s730 = scalar_lea.vmem %s4, %s729
        %p731 = scmp.lt.s32.totalorder %s35, 1
        %s732 = scalar_select %p731, %s35, 1
        %s733 = smul.addr %s732, 4
        %s734 = smul.addr %s733, 4
        %s735 = scalar_lea.vmem %s5, %s734
        %p736 = scmp.lt.s32.totalorder %s35, 1
        %s737 = scalar_select %p736, %s35, 1
        %s738 = smul.addr %s737, 4
        %s739 = smul.addr %s738, 4
        %s740 = scalar_lea.vmem %s6, %s739
        %p741 = scmp.lt.s32.totalorder %s35, 1
        %s742 = scalar_select %p741, %s35, 1
        %s743 = smul.addr %s742, 4
        %s744 = smul.addr %s743, 4
        %s745 = scalar_lea.vmem %s7, %s744
        %p746 = scmp.lt.s32.totalorder %s35, 1
        %s747 = scalar_select %p746, %s35, 1
        %s748 = smul.addr %s747, 4
        %s749 = smul.addr %s748, 4
        %s750 = scalar_lea.vmem %s8, %s749
        %p751 = scmp.lt.s32.totalorder %s35, 1
        %s752 = scalar_select %p751, %s35, 1
        %s753 = smul.addr %s752, 4
        %s754 = smul.addr %s753, 4
        %s755 = scalar_lea.vmem %s9, %s754
        %p756 = scmp.lt.s32.totalorder %s35, 1
        %s757 = scalar_select %p756, %s35, 1
        %s758 = smul.addr %s757, 4
        %s759 = smul.addr %s758, 4
        %s760 = scalar_lea.vmem %s10, %s759
        %p761 = scmp.lt.s32.totalorder %s35, 1
        %s762 = scalar_select %p761, %s35, 1
        %s763 = smul.addr %s762, 8
        %s764 = smul.addr %s763, 4
        %s765 = scalar_lea.vmem %s11, %s764
        %p766 = scmp.lt.s32.totalorder %s35, 1
        %s767 = scalar_select %p766, %s35, 1
        %s768 = scalar_lea.vmem %s12, %s767
        %p769 = scmp.lt.s32.totalorder %s35, 1
        %s770 = scalar_select %p769, %s35, 1
        %s771 = smul.addr %s770, 2
        %s772 = smul.addr %s771, 8
        %s773 = scalar_lea.vmem %s13, %s772
        %p775 = scmp.eq.s32.totalorder %s35, 0
        // Predicated region
        $region85: #{decoder_forward.1} parent=83 // pred_check
          %p776 = pneg %p775
        $region86: #{decoder_forward.1} parent=83 // pred_check_branch
          %778 = sbr.rel (%p776) target = $region88
        $region87: #{decoder_forward.1} parent=83 // pred_region
          %v779 = vld [vmem:[%s713] sm:$0xff]
          %vm780 = vcmask 261120
          %781 = vst.msk [vmem:[#allocation2] sm:$0xff] %vm780, %v779
        $region88: #{decoder_forward.1} parent=83 // pred_fallthru
          _
        %v782 = vld [vmem:[#allocation2] sm:$0xff]
        %v783 = vld [vmem:[%s717] sm:$0xff]
        %v784 = vld [vmem:[%s721] sm:$0xff]
        %v785 = vld [vmem:[%s725] sm:$0xff]
        %v786 = vld [vmem:[%s773] sm:$0xff]
        %v787 = vld [vmem:[%s773 + $0x8] sm:$0x1]
        %v788 = vld [vmem:[%s730] sm:$0xf]
        %v789 = vld [vmem:[%s730 + $0x4] sm:$0xf]
        %v790 = vld [vmem:[%s730 + $0x8] sm:$0xf]
        %v791 = vld [vmem:[%s730 + $0xc] sm:$0xf]
        %v792 = vld [vmem:[%s735] sm:$0xf]
        %v793 = vld [vmem:[%s735 + $0x4] sm:$0xf]
        %v794 = vld [vmem:[%s735 + $0x8] sm:$0xf]
        %v795 = vld [vmem:[%s735 + $0xc] sm:$0xf]
        %v796 = vld [vmem:[%s740] sm:$0xf]
        %v797 = vld [vmem:[%s740 + $0x4] sm:$0xf]
        %v798 = vld [vmem:[%s740 + $0x8] sm:$0xf]
        %v799 = vld [vmem:[%s740 + $0xc] sm:$0xf]
        %v800 = vpack.c.bf16 %v782, %v782
        %v805 = vunpack.c.l.b16 %v788
        %v806 = vunpack.c.l.b16 %v789
        %v807 = vunpack.c.l.b16 %v790
        %v808 = vunpack.c.l.b16 %v791
        %v809 = vpack.c.b16 %v806, %v805
        %v810 = vpack.c.b16 %v808, %v807
        %vm813 = vcmask 261120
        %v815 = vsel %vm813, %v800, 0
        %817 = vmatprep.subr.bf16.mxu0 0
        %818 = vmatpush1.bf16.msra.mxu0 %v809
        %819 = vmatprep.subr.bf16.mxu0 0
        %820 = vmatpush1.bf16.msra.mxu0 %v810
        %821 = vmatprep.subr.bf16.mxu0 0
        %822 = vmatpush1.bf16.msra.mxu0 0
        %823 = vmatprep.subr.bf16.mxu0 0
        %824 = vmatpush1.bf16.msra.mxu0 0
        %825 = vmatprep.subr.bf16.mxu0 0
        %826 = vmatpush1.bf16.msra.mxu0 0
        %827 = vmatprep.subr.bf16.mxu0 0
        %828 = vmatpush1.bf16.msra.mxu0 0
        %829 = vmatprep.subr.bf16.mxu0 0
        %830 = vmatpush1.bf16.msra.mxu0 0
        %831 = vmatprep.subr.bf16.mxu0 0
        %832 = vmatpush1.bf16.msra.mxu0 0
        %833 = vmatprep.subr.bf16.mxu0 0
        %834 = vmatpush1.bf16.msra.mxu0 0
        %835 = vmatprep.subr.bf16.mxu0 0
        %836 = vmatpush1.bf16.msra.mxu0 0
        %837 = vmatprep.subr.bf16.mxu0 0
        %838 = vmatpush1.bf16.msra.mxu0 0
        %839 = vmatprep.subr.bf16.mxu0 0
        %840 = vmatpush1.bf16.msra.mxu0 0
        %841 = vmatprep.subr.bf16.mxu0 0
        %842 = vmatpush1.bf16.msra.mxu0 0
        %843 = vmatprep.subr.bf16.mxu0 0
        %844 = vmatpush1.bf16.msra.mxu0 0
        %845 = vmatprep.subr.bf16.mxu0 0
        %846 = vmatpush1.bf16.msra.mxu0 0
        %847 = vmatprep.subr.bf16.mxu0 0
        %848 = vmatpush1.bf16.msra.mxu0 0
        %849 = vmatprep.mubr.bf16.mxu0 0
        %850 = vmatmul.mubr.bf16.gmra.mrb[0].mxu0 %v815
        %v851 = vpop.f32.mrb[0].mxu0
        %v852 = vadd.f32 0.0, %v851
        %v853 = vpop.f32.mrb[0].mxu0
        %v854 = vpop.f32.mrb[0].mxu0
        %v855 = vpop.f32.mrb[0].mxu0
        %856 = vdwg.mxu0
        %v857 = vmul.f32 %v852, 0.17677669
        %v862 = vunpack.c.l.b16 %v792
        %v863 = vunpack.c.l.b16 %v793
        %v864 = vunpack.c.l.b16 %v794
        %v865 = vunpack.c.l.b16 %v795
        %v866 = vpack.c.b16 %v863, %v862
        %v867 = vpack.c.b16 %v865, %v864
        %870 = vmatprep.subr.bf16.mxu0 0
        %871 = vmatpush1.bf16.msra.mxu0 %v866
        %872 = vmatprep.subr.bf16.mxu0 0
        %873 = vmatpush1.bf16.msra.mxu0 %v867
        %874 = vmatprep.subr.bf16.mxu0 0
        %875 = vmatpush1.bf16.msra.mxu0 0
        %876 = vmatprep.subr.bf16.mxu0 0
        %877 = vmatpush1.bf16.msra.mxu0 0
        %878 = vmatprep.subr.bf16.mxu0 0
        %879 = vmatpush1.bf16.msra.mxu0 0
        %880 = vmatprep.subr.bf16.mxu0 0
        %881 = vmatpush1.bf16.msra.mxu0 0
        %882 = vmatprep.subr.bf16.mxu0 0
        %883 = vmatpush1.bf16.msra.mxu0 0
        %884 = vmatprep.subr.bf16.mxu0 0
        %885 = vmatpush1.bf16.msra.mxu0 0
        %886 = vmatprep.subr.bf16.mxu0 0
        %887 = vmatpush1.bf16.msra.mxu0 0
        %888 = vmatprep.subr.bf16.mxu0 0
        %889 = vmatpush1.bf16.msra.mxu0 0
        %890 = vmatprep.subr.bf16.mxu0 0
        %891 = vmatpush1.bf16.msra.mxu0 0
        %892 = vmatprep.subr.bf16.mxu0 0
        %893 = vmatpush1.bf16.msra.mxu0 0
        %894 = vmatprep.subr.bf16.mxu0 0
        %895 = vmatpush1.bf16.msra.mxu0 0
        %896 = vmatprep.subr.bf16.mxu0 0
        %897 = vmatpush1.bf16.msra.mxu0 0
        %898 = vmatprep.subr.bf16.mxu0 0
        %899 = vmatpush1.bf16.msra.mxu0 0
        %900 = vmatprep.subr.bf16.mxu0 0
        %901 = vmatpush1.bf16.msra.mxu0 0
        %902 = vmatprep.mubr.bf16.mxu0 0
        %903 = vmatmul.mubr.bf16.gmra.mrb[0].mxu0 %v815
        %v904 = vpop.f32.mrb[0].mxu0
        %v905 = vadd.f32 0.0, %v904
        %v906 = vpop.f32.mrb[0].mxu0
        %v907 = vpop.f32.mrb[0].mxu0
        %v908 = vpop.f32.mrb[0].mxu0
        %909 = vdwg.mxu0
        %v910 = vpack.c.bf16 %v857, %v857
        %v911 = vpack.c.bf16 %v905, %v905
        %vm912 = vcmask 64512
        %v914 = vsel %vm912, %v910, 0
        %v917 = vsel %vm912, %v911, 0
        %919 = vmatprep.subr.bf16.mxu0 0
        %920 = vmatpush1.bf16.xpose.msra.mxu0 %v917
        %921 = vmatprep.subr.bf16.mxu0 0
        %922 = vmatpush1.bf16.xpose.msra.mxu0 0
        %923 = vmatprep.subr.bf16.mxu0 0
        %924 = vmatpush1.bf16.xpose.msra.mxu0 0
        %925 = vmatprep.subr.bf16.mxu0 0
        %926 = vmatpush1.bf16.xpose.msra.mxu0 0
        %927 = vmatprep.subr.bf16.mxu0 0
        %928 = vmatpush1.bf16.xpose.msra.mxu0 0
        %929 = vmatprep.subr.bf16.mxu0 0
        %930 = vmatpush1.bf16.xpose.msra.mxu0 0
        %931 = vmatprep.subr.bf16.mxu0 0
        %932 = vmatpush1.bf16.xpose.msra.mxu0 0
        %933 = vmatprep.subr.bf16.mxu0 0
        %934 = vmatpush1.bf16.xpose.msra.mxu0 0
        %935 = vmatprep.subr.bf16.mxu0 0
        %936 = vmatpush1.bf16.xpose.msra.mxu0 0
        %937 = vmatprep.subr.bf16.mxu0 0
        %938 = vmatpush1.bf16.xpose.msra.mxu0 0
        %939 = vmatprep.subr.bf16.mxu0 0
        %940 = vmatpush1.bf16.xpose.msra.mxu0 0
        %941 = vmatprep.subr.bf16.mxu0 0
        %942 = vmatpush1.bf16.xpose.msra.mxu0 0
        %943 = vmatprep.subr.bf16.mxu0 0
        %944 = vmatpush1.bf16.xpose.msra.mxu0 0
        %945 = vmatprep.subr.bf16.mxu0 0
        %946 = vmatpush1.bf16.xpose.msra.mxu0 0
        %947 = vmatprep.subr.bf16.mxu0 0
        %948 = vmatpush1.bf16.xpose.msra.mxu0 0
        %949 = vmatprep.subr.bf16.mxu0 0
        %950 = vmatpush1.bf16.xpose.msra.mxu0 0
        %951 = vmatprep.mubr.bf16.mxu0 0
        %952 = vmatmul.mubr.bf16.gmra.mrb[0].mxu0 %v914
        %v953 = vpop.f32.mrb[0].mxu0
        %v954 = vadd.f32 %v784, %v953
        %v955 = vpop.f32.mrb[0].mxu0
        %v956 = vpop.f32.mrb[0].mxu0
        %v957 = vpop.f32.mrb[0].mxu0
        %958 = vdwg.mxu0
        %v959 = vsel %vm912, %v954, -inf
        %960 = vmax.xlane.f32.xlu0 %v959
        %v961 = vpop.xlane.xlu0 %960
        %v962 = vsub.f32 %v954, %v961
        %v963 = vmul.f32 %v962, 1.442695
        %v964 = vpow.pop %v963
        %v965 = vsel %vm912, %v964, 0.0
        %966 = vadd.xlane.f32.xlu0 %v965
        %v967 = vpop.xlane.xlu0 %966
        %v968 = vrcp.pop %v967
        %v969 = vmul.f32 %v967, %v968
        %v970 = vsub.f32 2.0, %v969
        %v971 = vmul.f32 %v968, %v970
        %v972 = vmul.f32 %v964, %v971
        %v973 = vpack.c.bf16 %v972, %v972
        %975 = vrot.lane.b32.xlu0 %v911, 96
        %v976 = vpop.permute.xlu0 %975
        %v978 = vsel %vm912, %v973, 0
        %vm980 = vcmask 1043456
        %v982 = vsel %vm980, %v976, 0
        %984 = vmatprep.subr.bf16.mxu0 0
        %985 = vmatpush1.bf16.msra.mxu0 %v982
        %986 = vmatprep.subr.bf16.mxu0 0
        %987 = vmatpush1.bf16.msra.mxu0 0
        %988 = vmatprep.subr.bf16.mxu0 0
        %989 = vmatpush1.bf16.msra.mxu0 0
        %990 = vmatprep.subr.bf16.mxu0 0
        %991 = vmatpush1.bf16.msra.mxu0 0
        %992 = vmatprep.subr.bf16.mxu0 0
        %993 = vmatpush1.bf16.msra.mxu0 0
        %994 = vmatprep.subr.bf16.mxu0 0
        %995 = vmatpush1.bf16.msra.mxu0 0
        %996 = vmatprep.subr.bf16.mxu0 0
        %997 = vmatpush1.bf16.msra.mxu0 0
        %998 = vmatprep.subr.bf16.mxu0 0
        %999 = vmatpush1.bf16.msra.mxu0 0
        %1000 = vmatprep.subr.bf16.mxu0 0
        %1001 = vmatpush1.bf16.msra.mxu0 0
        %1002 = vmatprep.subr.bf16.mxu0 0
        %1003 = vmatpush1.bf16.msra.mxu0 0
        %1004 = vmatprep.subr.bf16.mxu0 0
        %1005 = vmatpush1.bf16.msra.mxu0 0
        %1006 = vmatprep.subr.bf16.mxu0 0
        %1007 = vmatpush1.bf16.msra.mxu0 0
        %1008 = vmatprep.subr.bf16.mxu0 0
        %1009 = vmatpush1.bf16.msra.mxu0 0
        %1010 = vmatprep.subr.bf16.mxu0 0
        %1011 = vmatpush1.bf16.msra.mxu0 0
        %1012 = vmatprep.subr.bf16.mxu0 0
        %1013 = vmatpush1.bf16.msra.mxu0 0
        %1014 = vmatprep.subr.bf16.mxu0 0
        %1015 = vmatpush1.bf16.msra.mxu0 0
        %1016 = vmatprep.mubr.bf16.mxu0 0
        %1017 = vmatmul.mubr.bf16.gmra.mrb[0].mxu0 %v978
        %v1018 = vpop.f32.mrb[0].mxu0
        %v1019 = vadd.f32 0.0, %v1018
        %v1020 = vpop.f32.mrb[0].mxu0
        %v1021 = vpop.f32.mrb[0].mxu0
        %v1022 = vpop.f32.mrb[0].mxu0
        %1023 = vdwg.mxu0
        %v1024 = vpack.c.bf16 %v1019, %v1019
        %1026 = vrot.lane.b32.xlu0 %v910, 120
        %v1027 = vpop.permute.xlu0 %1026
        %1028 = vrot.lane.b32.xlu0 %v911, 120
        %v1029 = vpop.permute.xlu0 %1028
        %v1031 = vsel %vm912, %v1027, 0
        %v1034 = vsel %vm912, %v1029, 0
        %1036 = vmatprep.subr.bf16.mxu0 0
        %1037 = vmatpush1.bf16.xpose.msra.mxu0 %v1034
        %1038 = vmatprep.subr.bf16.mxu0 0
        %1039 = vmatpush1.bf16.xpose.msra.mxu0 0
        %1040 = vmatprep.subr.bf16.mxu0 0
        %1041 = vmatpush1.bf16.xpose.msra.mxu0 0
        %1042 = vmatprep.subr.bf16.mxu0 0
        %1043 = vmatpush1.bf16.xpose.msra.mxu0 0
        %1044 = vmatprep.subr.bf16.mxu0 0
        %1045 = vmatpush1.bf16.xpose.msra.mxu0 0
        %1046 = vmatprep.subr.bf16.mxu0 0
        %1047 = vmatpush1.bf16.xpose.msra.mxu0 0
        %1048 = vmatprep.subr.bf16.mxu0 0
        %1049 = vmatpush1.bf16.xpose.msra.mxu0 0
        %1050 = vmatprep.subr.bf16.mxu0 0
        %1051 = vmatpush1.bf16.xpose.msra.mxu0 0
        %1052 = vmatprep.subr.bf16.mxu0 0
        %1053 = vmatpush1.bf16.xpose.msra.mxu0 0
        %1054 = vmatprep.subr.bf16.mxu0 0
        %1055 = vmatpush1.bf16.xpose.msra.mxu0 0
        %1056 = vmatprep.subr.bf16.mxu0 0
        %1057 = vmatpush1.bf16.xpose.msra.mxu0 0
        %1058 = vmatprep.subr.bf16.mxu0 0
        %1059 = vmatpush1.bf16.xpose.msra.mxu0 0
        %1060 = vmatprep.subr.bf16.mxu0 0
        %1061 = vmatpush1.bf16.xpose.msra.mxu0 0
        %1062 = vmatprep.subr.bf16.mxu0 0
        %1063 = vmatpush1.bf16.xpose.msra.mxu0 0
        %1064 = vmatprep.subr.bf16.mxu0 0
        %1065 = vmatpush1.bf16.xpose.msra.mxu0 0
        %1066 = vmatprep.subr.bf16.mxu0 0
        %1067 = vmatpush1.bf16.xpose.msra.mxu0 0
        %1068 = vmatprep.mubr.bf16.mxu0 0
        %1069 = vmatmul.mubr.bf16.gmra.mrb[0].mxu0 %v1031
        %v1070 = vpop.f32.mrb[0].mxu0
        %v1071 = vadd.f32 %v784, %v1070
        %v1072 = vpop.f32.mrb[0].mxu0
        %v1073 = vpop.f32.mrb[0].mxu0
        %v1074 = vpop.f32.mrb[0].mxu0
        %1075 = vdwg.mxu0
        %v1076 = vsel %vm912, %v1071, -inf
        %1077 = vmax.xlane.f32.xlu0 %v1076
        %v1078 = vpop.xlane.xlu0 %1077
        %v1079 = vsub.f32 %v1071, %v1078
        %v1080 = vmul.f32 %v1079, 1.442695
        %v1081 = vpow.pop %v1080
        %v1082 = vsel %vm912, %v1081, 0.0
        %1083 = vadd.xlane.f32.xlu0 %v1082
        %v1084 = vpop.xlane.xlu0 %1083
        %v1085 = vrcp.pop %v1084
        %v1086 = vmul.f32 %v1084, %v1085
        %v1087 = vsub.f32 2.0, %v1086
        %v1088 = vmul.f32 %v1085, %v1087
        %v1089 = vmul.f32 %v1081, %v1088
        %v1090 = vpack.c.bf16 %v1089, %v1089
        %1091 = vrot.lane.b32.xlu0 %v911, 88
        %v1092 = vpop.permute.xlu0 %1091
        %v1094 = vsel %vm912, %v1090, 0
        %v1097 = vsel %vm980, %v1092, 0
        %1099 = vmatprep.subr.bf16.mxu0 0
        %1100 = vmatpush1.bf16.msra.mxu0 %v1097
        %1101 = vmatprep.subr.bf16.mxu0 0
        %1102 = vmatpush1.bf16.msra.mxu0 0
        %1103 = vmatprep.subr.bf16.mxu0 0
        %1104 = vmatpush1.bf16.msra.mxu0 0
        %1105 = vmatprep.subr.bf16.mxu0 0
        %1106 = vmatpush1.bf16.msra.mxu0 0
        %1107 = vmatprep.subr.bf16.mxu0 0
        %1108 = vmatpush1.bf16.msra.mxu0 0
        %1109 = vmatprep.subr.bf16.mxu0 0
        %1110 = vmatpush1.bf16.msra.mxu0 0
        %1111 = vmatprep.subr.bf16.mxu0 0
        %1112 = vmatpush1.bf16.msra.mxu0 0
        %1113 = vmatprep.subr.bf16.mxu0 0
        %1114 = vmatpush1.bf16.msra.mxu0 0
        %1115 = vmatprep.subr.bf16.mxu0 0
        %1116 = vmatpush1.bf16.msra.mxu0 0
        %1117 = vmatprep.subr.bf16.mxu0 0
        %1118 = vmatpush1.bf16.msra.mxu0 0
        %1119 = vmatprep.subr.bf16.mxu0 0
        %1120 = vmatpush1.bf16.msra.mxu0 0
        %1121 = vmatprep.subr.bf16.mxu0 0
        %1122 = vmatpush1.bf16.msra.mxu0 0
        %1123 = vmatprep.subr.bf16.mxu0 0
        %1124 = vmatpush1.bf16.msra.mxu0 0
        %1125 = vmatprep.subr.bf16.mxu0 0
        %1126 = vmatpush1.bf16.msra.mxu0 0
        %1127 = vmatprep.subr.bf16.mxu0 0
        %1128 = vmatpush1.bf16.msra.mxu0 0
        %1129 = vmatprep.subr.bf16.mxu0 0
        %1130 = vmatpush1.bf16.msra.mxu0 0
        %1131 = vmatprep.mubr.bf16.mxu0 0
        %1132 = vmatmul.mubr.bf16.gmra.mrb[0].mxu0 %v1094
        %v1133 = vpop.f32.mrb[0].mxu0
        %v1134 = vadd.f32 0.0, %v1133
        %v1135 = vpop.f32.mrb[0].mxu0
        %v1136 = vpop.f32.mrb[0].mxu0
        %v1137 = vpop.f32.mrb[0].mxu0
        %1138 = vdwg.mxu0
        %v1139 = vpack.c.bf16 %v1134, %v1134
        %v1141 = vsel %vm912, %v1139, 0
        %v1144 = vsel %vm980, %v797, 0
        %1146 = vmatprep.subr.bf16.mxu0 0
        %1147 = vmatpush1.bf16.msra.mxu0 %v1144
        %1148 = vmatprep.subr.bf16.mxu0 0
        %1149 = vmatpush1.bf16.msra.mxu0 0
        %1150 = vmatprep.subr.bf16.mxu0 0
        %1151 = vmatpush1.bf16.msra.mxu0 0
        %1152 = vmatprep.subr.bf16.mxu0 0
        %1153 = vmatpush1.bf16.msra.mxu0 0
        %1154 = vmatprep.subr.bf16.mxu0 0
        %1155 = vmatpush1.bf16.msra.mxu0 0
        %1156 = vmatprep.subr.bf16.mxu0 0
        %1157 = vmatpush1.bf16.msra.mxu0 0
        %1158 = vmatprep.subr.bf16.mxu0 0
        %1159 = vmatpush1.bf16.msra.mxu0 0
        %1160 = vmatprep.subr.bf16.mxu0 0
        %1161 = vmatpush1.bf16.msra.mxu0 0
        %1162 = vmatprep.subr.bf16.mxu0 0
        %1163 = vmatpush1.bf16.msra.mxu0 0
        %1164 = vmatprep.subr.bf16.mxu0 0
        %1165 = vmatpush1.bf16.msra.mxu0 0
        %1166 = vmatprep.subr.bf16.mxu0 0
        %1167 = vmatpush1.bf16.msra.mxu0 0
        %1168 = vmatprep.subr.bf16.mxu0 0
        %1169 = vmatpush1.bf16.msra.mxu0 0
        %1170 = vmatprep.subr.bf16.mxu0 0
        %1171 = vmatpush1.bf16.msra.mxu0 0
        %1172 = vmatprep.subr.bf16.mxu0 0
        %1173 = vmatpush1.bf16.msra.mxu0 0
        %1174 = vmatprep.subr.bf16.mxu0 0
        %1175 = vmatpush1.bf16.msra.mxu0 0
        %1176 = vmatprep.subr.bf16.mxu0 0
        %1177 = vmatpush1.bf16.msra.mxu0 0
        %1178 = vmatprep.mubr.bf16.mxu0 0
        %1179 = vmatmul.mubr.bf16.gmra.mrb[0].mxu0 %v1141
        %v1180 = vpop.f32.mrb[0].mxu0
        %v1181 = vadd.f32 0.0, %v1180
        %v1182 = vpop.f32.mrb[0].mxu0
        %v1183 = vpop.f32.mrb[0].mxu0
        %v1184 = vpop.f32.mrb[0].mxu0
        %1185 = vdwg.mxu0
        %v1187 = vsel %vm912, %v1024, 0
        %v1190 = vsel %vm980, %v796, 0
        %1192 = vmatprep.subr.bf16.mxu0 0
        %1193 = vmatpush1.bf16.msra.mxu0 %v1190
        %1194 = vmatprep.subr.bf16.mxu0 0
        %1195 = vmatpush1.bf16.msra.mxu0 0
        %1196 = vmatprep.subr.bf16.mxu0 0
        %1197 = vmatpush1.bf16.msra.mxu0 0
        %1198 = vmatprep.subr.bf16.mxu0 0
        %1199 = vmatpush1.bf16.msra.mxu0 0
        %1200 = vmatprep.subr.bf16.mxu0 0
        %1201 = vmatpush1.bf16.msra.mxu0 0
        %1202 = vmatprep.subr.bf16.mxu0 0
        %1203 = vmatpush1.bf16.msra.mxu0 0
        %1204 = vmatprep.subr.bf16.mxu0 0
        %1205 = vmatpush1.bf16.msra.mxu0 0
        %1206 = vmatprep.subr.bf16.mxu0 0
        %1207 = vmatpush1.bf16.msra.mxu0 0
        %1208 = vmatprep.subr.bf16.mxu0 0
        %1209 = vmatpush1.bf16.msra.mxu0 0
        %1210 = vmatprep.subr.bf16.mxu0 0
        %1211 = vmatpush1.bf16.msra.mxu0 0
        %1212 = vmatprep.subr.bf16.mxu0 0
        %1213 = vmatpush1.bf16.msra.mxu0 0
        %1214 = vmatprep.subr.bf16.mxu0 0
        %1215 = vmatpush1.bf16.msra.mxu0 0
        %1216 = vmatprep.subr.bf16.mxu0 0
        %1217 = vmatpush1.bf16.msra.mxu0 0
        %1218 = vmatprep.subr.bf16.mxu0 0
        %1219 = vmatpush1.bf16.msra.mxu0 0
        %1220 = vmatprep.subr.bf16.mxu0 0
        %1221 = vmatpush1.bf16.msra.mxu0 0
        %1222 = vmatprep.subr.bf16.mxu0 0
        %1223 = vmatpush1.bf16.msra.mxu0 0
        %1224 = vmatprep.mubr.bf16.mxu0 0
        %1225 = vmatmul.mubr.bf16.gmra.mrb[0].mxu0 %v1187
        %v1226 = vpop.f32.mrb[0].mxu0
        %v1227 = vadd.f32 %v1181, %v1226
        %v1228 = vpop.f32.mrb[0].mxu0
        %v1229 = vpop.f32.mrb[0].mxu0
        %v1230 = vpop.f32.mrb[0].mxu0
        %1231 = vdwg.mxu0
        %1232 = vrot.lane.b32.xlu0 %v910, 112
        %v1233 = vpop.permute.xlu0 %1232
        %1234 = vrot.lane.b32.xlu0 %v911, 112
        %v1235 = vpop.permute.xlu0 %1234
        %v1237 = vsel %vm912, %v1233, 0
        %v1240 = vsel %vm912, %v1235, 0
        %1242 = vmatprep.subr.bf16.mxu0 0
        %1243 = vmatpush1.bf16.xpose.msra.mxu0 %v1240
        %1244 = vmatprep.subr.bf16.mxu0 0
        %1245 = vmatpush1.bf16.xpose.msra.mxu0 0
        %1246 = vmatprep.subr.bf16.mxu0 0
        %1247 = vmatpush1.bf16.xpose.msra.mxu0 0
        %1248 = vmatprep.subr.bf16.mxu0 0
        %1249 = vmatpush1.bf16.xpose.msra.mxu0 0
        %1250 = vmatprep.subr.bf16.mxu0 0
        %1251 = vmatpush1.bf16.xpose.msra.mxu0 0
        %1252 = vmatprep.subr.bf16.mxu0 0
        %1253 = vmatpush1.bf16.xpose.msra.mxu0 0
        %1254 = vmatprep.subr.bf16.mxu0 0
        %1255 = vmatpush1.bf16.xpose.msra.mxu0 0
        %1256 = vmatprep.subr.bf16.mxu0 0
        %1257 = vmatpush1.bf16.xpose.msra.mxu0 0
        %1258 = vmatprep.subr.bf16.mxu0 0
        %1259 = vmatpush1.bf16.xpose.msra.mxu0 0
        %1260 = vmatprep.subr.bf16.mxu0 0
        %1261 = vmatpush1.bf16.xpose.msra.mxu0 0
        %1262 = vmatprep.subr.bf16.mxu0 0
        %1263 = vmatpush1.bf16.xpose.msra.mxu0 0
        %1264 = vmatprep.subr.bf16.mxu0 0
        %1265 = vmatpush1.bf16.xpose.msra.mxu0 0
        %1266 = vmatprep.subr.bf16.mxu0 0
        %1267 = vmatpush1.bf16.xpose.msra.mxu0 0
        %1268 = vmatprep.subr.bf16.mxu0 0
        %1269 = vmatpush1.bf16.xpose.msra.mxu0 0
        %1270 = vmatprep.subr.bf16.mxu0 0
        %1271 = vmatpush1.bf16.xpose.msra.mxu0 0
        %1272 = vmatprep.subr.bf16.mxu0 0
        %1273 = vmatpush1.bf16.xpose.msra.mxu0 0
        %1274 = vmatprep.mubr.bf16.mxu0 0
        %1275 = vmatmul.mubr.bf16.gmra.mrb[0].mxu0 %v1237
        %v1276 = vpop.f32.mrb[0].mxu0
        %v1277 = vadd.f32 %v784, %v1276
        %v1278 = vpop.f32.mrb[0].mxu0
        %v1279 = vpop.f32.mrb[0].mxu0
        %v1280 = vpop.f32.mrb[0].mxu0
        %1281 = vdwg.mxu0
        %v1282 = vsel %vm912, %v1277, -inf
        %1283 = vmax.xlane.f32.xlu0 %v1282
        %v1284 = vpop.xlane.xlu0 %1283
        %v1285 = vsub.f32 %v1277, %v1284
        %v1286 = vmul.f32 %v1285, 1.442695
        %v1287 = vpow.pop %v1286
        %v1288 = vsel %vm912, %v1287, 0.0
        %1289 = vadd.xlane.f32.xlu0 %v1288
        %v1290 = vpop.xlane.xlu0 %1289
        %v1291 = vrcp.pop %v1290
        %v1292 = vmul.f32 %v1290, %v1291
        %v1293 = vsub.f32 2.0, %v1292
        %v1294 = vmul.f32 %v1291, %v1293
        %v1295 = vmul.f32 %v1287, %v1294
        %v1296 = vpack.c.bf16 %v1295, %v1295
        %1297 = vrot.lane.b32.xlu0 %v911, 80
        %v1298 = vpop.permute.xlu0 %1297
        %v1300 = vsel %vm912, %v1296, 0
        %v1303 = vsel %vm980, %v1298, 0
        %1305 = vmatprep.subr.bf16.mxu0 0
        %1306 = vmatpush1.bf16.msra.mxu0 %v1303
        %1307 = vmatprep.subr.bf16.mxu0 0
        %1308 = vmatpush1.bf16.msra.mxu0 0
        %1309 = vmatprep.subr.bf16.mxu0 0
        %1310 = vmatpush1.bf16.msra.mxu0 0
        %1311 = vmatprep.subr.bf16.mxu0 0
        %1312 = vmatpush1.bf16.msra.mxu0 0
        %1313 = vmatprep.subr.bf16.mxu0 0
        %1314 = vmatpush1.bf16.msra.mxu0 0
        %1315 = vmatprep.subr.bf16.mxu0 0
        %1316 = vmatpush1.bf16.msra.mxu0 0
        %1317 = vmatprep.subr.bf16.mxu0 0
        %1318 = vmatpush1.bf16.msra.mxu0 0
        %1319 = vmatprep.subr.bf16.mxu0 0
        %1320 = vmatpush1.bf16.msra.mxu0 0
        %1321 = vmatprep.subr.bf16.mxu0 0
        %1322 = vmatpush1.bf16.msra.mxu0 0
        %1323 = vmatprep.subr.bf16.mxu0 0
        %1324 = vmatpush1.bf16.msra.mxu0 0
        %1325 = vmatprep.subr.bf16.mxu0 0
        %1326 = vmatpush1.bf16.msra.mxu0 0
        %1327 = vmatprep.subr.bf16.mxu0 0
        %1328 = vmatpush1.bf16.msra.mxu0 0
        %1329 = vmatprep.subr.bf16.mxu0 0
        %1330 = vmatpush1.bf16.msra.mxu0 0
        %1331 = vmatprep.subr.bf16.mxu0 0
        %1332 = vmatpush1.bf16.msra.mxu0 0
        %1333 = vmatprep.subr.bf16.mxu0 0
        %1334 = vmatpush1.bf16.msra.mxu0 0
        %1335 = vmatprep.subr.bf16.mxu0 0
        %1336 = vmatpush1.bf16.msra.mxu0 0
        %1337 = vmatprep.mubr.bf16.mxu0 0
        %1338 = vmatmul.mubr.bf16.gmra.mrb[0].mxu0 %v1300
        %v1339 = vpop.f32.mrb[0].mxu0
        %v1340 = vadd.f32 0.0, %v1339
        %v1341 = vpop.f32.mrb[0].mxu0
        %v1342 = vpop.f32.mrb[0].mxu0
        %v1343 = vpop.f32.mrb[0].mxu0
        %1344 = vdwg.mxu0
        %v1345 = vpack.c.bf16 %v1340, %v1340
        %v1347 = vsel %vm912, %v1345, 0
        %v1350 = vsel %vm980, %v798, 0
        %1352 = vmatprep.subr.bf16.mxu0 0
        %1353 = vmatpush1.bf16.msra.mxu0 %v1350
        %1354 = vmatprep.subr.bf16.mxu0 0
        %1355 = vmatpush1.bf16.msra.mxu0 0
        %1356 = vmatprep.subr.bf16.mxu0 0
        %1357 = vmatpush1.bf16.msra.mxu0 0
        %1358 = vmatprep.subr.bf16.mxu0 0
        %1359 = vmatpush1.bf16.msra.mxu0 0
        %1360 = vmatprep.subr.bf16.mxu0 0
        %1361 = vmatpush1.bf16.msra.mxu0 0
        %1362 = vmatprep.subr.bf16.mxu0 0
        %1363 = vmatpush1.bf16.msra.mxu0 0
        %1364 = vmatprep.subr.bf16.mxu0 0
        %1365 = vmatpush1.bf16.msra.mxu0 0
        %1366 = vmatprep.subr.bf16.mxu0 0
        %1367 = vmatpush1.bf16.msra.mxu0 0
        %1368 = vmatprep.subr.bf16.mxu0 0
        %1369 = vmatpush1.bf16.msra.mxu0 0
        %1370 = vmatprep.subr.bf16.mxu0 0
        %1371 = vmatpush1.bf16.msra.mxu0 0
        %1372 = vmatprep.subr.bf16.mxu0 0
        %1373 = vmatpush1.bf16.msra.mxu0 0
        %1374 = vmatprep.subr.bf16.mxu0 0
        %1375 = vmatpush1.bf16.msra.mxu0 0
        %1376 = vmatprep.subr.bf16.mxu0 0
        %1377 = vmatpush1.bf16.msra.mxu0 0
        %1378 = vmatprep.subr.bf16.mxu0 0
        %1379 = vmatpush1.bf16.msra.mxu0 0
        %1380 = vmatprep.subr.bf16.mxu0 0
        %1381 = vmatpush1.bf16.msra.mxu0 0
        %1382 = vmatprep.subr.bf16.mxu0 0
        %1383 = vmatpush1.bf16.msra.mxu0 0
        %1384 = vmatprep.mubr.bf16.mxu0 0
        %1385 = vmatmul.mubr.bf16.gmra.mrb[0].mxu0 %v1347
        %v1386 = vpop.f32.mrb[0].mxu0
        %v1387 = vadd.f32 0.0, %v1386
        %v1388 = vpop.f32.mrb[0].mxu0
        %v1389 = vpop.f32.mrb[0].mxu0
        %v1390 = vpop.f32.mrb[0].mxu0
        %1391 = vdwg.mxu0
        %v1392 = vadd.f32 %v1227, %v1387
        %1393 = vrot.lane.b32.xlu0 %v910, 104
        %v1394 = vpop.permute.xlu0 %1393
        %1395 = vrot.lane.b32.xlu0 %v911, 104
        %v1396 = vpop.permute.xlu0 %1395
        %v1398 = vsel %vm912, %v1394, 0
        %v1401 = vsel %vm912, %v1396, 0
        %1403 = vmatprep.subr.bf16.mxu0 0
        %1404 = vmatpush1.bf16.xpose.msra.mxu0 %v1401
        %1405 = vmatprep.subr.bf16.mxu0 0
        %1406 = vmatpush1.bf16.xpose.msra.mxu0 0
        %1407 = vmatprep.subr.bf16.mxu0 0
        %1408 = vmatpush1.bf16.xpose.msra.mxu0 0
        %1409 = vmatprep.subr.bf16.mxu0 0
        %1410 = vmatpush1.bf16.xpose.msra.mxu0 0
        %1411 = vmatprep.subr.bf16.mxu0 0
        %1412 = vmatpush1.bf16.xpose.msra.mxu0 0
        %1413 = vmatprep.subr.bf16.mxu0 0
        %1414 = vmatpush1.bf16.xpose.msra.mxu0 0
        %1415 = vmatprep.subr.bf16.mxu0 0
        %1416 = vmatpush1.bf16.xpose.msra.mxu0 0
        %1417 = vmatprep.subr.bf16.mxu0 0
        %1418 = vmatpush1.bf16.xpose.msra.mxu0 0
        %1419 = vmatprep.subr.bf16.mxu0 0
        %1420 = vmatpush1.bf16.xpose.msra.mxu0 0
        %1421 = vmatprep.subr.bf16.mxu0 0
        %1422 = vmatpush1.bf16.xpose.msra.mxu0 0
        %1423 = vmatprep.subr.bf16.mxu0 0
        %1424 = vmatpush1.bf16.xpose.msra.mxu0 0
        %1425 = vmatprep.subr.bf16.mxu0 0
        %1426 = vmatpush1.bf16.xpose.msra.mxu0 0
        %1427 = vmatprep.subr.bf16.mxu0 0
        %1428 = vmatpush1.bf16.xpose.msra.mxu0 0
        %1429 = vmatprep.subr.bf16.mxu0 0
        %1430 = vmatpush1.bf16.xpose.msra.mxu0 0
        %1431 = vmatprep.subr.bf16.mxu0 0
        %1432 = vmatpush1.bf16.xpose.msra.mxu0 0
        %1433 = vmatprep.subr.bf16.mxu0 0
        %1434 = vmatpush1.bf16.xpose.msra.mxu0 0
        %1435 = vmatprep.mubr.bf16.mxu0 0
        %1436 = vmatmul.mubr.bf16.gmra.mrb[0].mxu0 %v1398
        %v1437 = vpop.f32.mrb[0].mxu0
        %v1438 = vadd.f32 %v784, %v1437
        %v1439 = vpop.f32.mrb[0].mxu0
        %v1440 = vpop.f32.mrb[0].mxu0
        %v1441 = vpop.f32.mrb[0].mxu0
        %1442 = vdwg.mxu0
        %v1443 = vsel %vm912, %v1438, -inf
        %1444 = vmax.xlane.f32.xlu0 %v1443
        %v1445 = vpop.xlane.xlu0 %1444
        %v1446 = vsub.f32 %v1438, %v1445
        %v1447 = vmul.f32 %v1446, 1.442695
        %v1448 = vpow.pop %v1447
        %v1449 = vsel %vm912, %v1448, 0.0
        %1450 = vadd.xlane.f32.xlu0 %v1449
        %v1451 = vpop.xlane.xlu0 %1450
        %v1452 = vrcp.pop %v1451
        %v1453 = vmul.f32 %v1451, %v1452
        %v1454 = vsub.f32 2.0, %v1453
        %v1455 = vmul.f32 %v1452, %v1454
        %v1456 = vmul.f32 %v1448, %v1455
        %v1457 = vpack.c.bf16 %v1456, %v1456
        %1458 = vrot.lane.b32.xlu0 %v911, 72
        %v1459 = vpop.permute.xlu0 %1458
        %v1461 = vsel %vm912, %v1457, 0
        %v1464 = vsel %vm980, %v1459, 0
        %1466 = vmatprep.subr.bf16.mxu0 0
        %1467 = vmatpush1.bf16.msra.mxu0 %v1464
        %1468 = vmatprep.subr.bf16.mxu0 0
        %1469 = vmatpush1.bf16.msra.mxu0 0
        %1470 = vmatprep.subr.bf16.mxu0 0
        %1471 = vmatpush1.bf16.msra.mxu0 0
        %1472 = vmatprep.subr.bf16.mxu0 0
        %1473 = vmatpush1.bf16.msra.mxu0 0
        %1474 = vmatprep.subr.bf16.mxu0 0
        %1475 = vmatpush1.bf16.msra.mxu0 0
        %1476 = vmatprep.subr.bf16.mxu0 0
        %1477 = vmatpush1.bf16.msra.mxu0 0
        %1478 = vmatprep.subr.bf16.mxu0 0
        %1479 = vmatpush1.bf16.msra.mxu0 0
        %1480 = vmatprep.subr.bf16.mxu0 0
        %1481 = vmatpush1.bf16.msra.mxu0 0
        %1482 = vmatprep.subr.bf16.mxu0 0
        %1483 = vmatpush1.bf16.msra.mxu0 0
        %1484 = vmatprep.subr.bf16.mxu0 0
        %1485 = vmatpush1.bf16.msra.mxu0 0
        %1486 = vmatprep.subr.bf16.mxu0 0
        %1487 = vmatpush1.bf16.msra.mxu0 0
        %1488 = vmatprep.subr.bf16.mxu0 0
        %1489 = vmatpush1.bf16.msra.mxu0 0
        %1490 = vmatprep.subr.bf16.mxu0 0
        %1491 = vmatpush1.bf16.msra.mxu0 0
        %1492 = vmatprep.subr.bf16.mxu0 0
        %1493 = vmatpush1.bf16.msra.mxu0 0
        %1494 = vmatprep.subr.bf16.mxu0 0
        %1495 = vmatpush1.bf16.msra.mxu0 0
        %1496 = vmatprep.subr.bf16.mxu0 0
        %1497 = vmatpush1.bf16.msra.mxu0 0
        %1498 = vmatprep.mubr.bf16.mxu0 0
        %1499 = vmatmul.mubr.bf16.gmra.mrb[0].mxu0 %v1461
        %v1500 = vpop.f32.mrb[0].mxu0
        %v1501 = vadd.f32 0.0, %v1500
        %v1502 = vpop.f32.mrb[0].mxu0
        %v1503 = vpop.f32.mrb[0].mxu0
        %v1504 = vpop.f32.mrb[0].mxu0
        %1505 = vdwg.mxu0
        %v1506 = vpack.c.bf16 %v1501, %v1501
        %v1508 = vsel %vm912, %v1506, 0
        %v1511 = vsel %vm980, %v799, 0
        %1513 = vmatprep.subr.bf16.mxu0 0
        %1514 = vmatpush1.bf16.msra.mxu0 %v1511
        %1515 = vmatprep.subr.bf16.mxu0 0
        %1516 = vmatpush1.bf16.msra.mxu0 0
        %1517 = vmatprep.subr.bf16.mxu0 0
        %1518 = vmatpush1.bf16.msra.mxu0 0
        %1519 = vmatprep.subr.bf16.mxu0 0
        %1520 = vmatpush1.bf16.msra.mxu0 0
        %1521 = vmatprep.subr.bf16.mxu0 0
        %1522 = vmatpush1.bf16.msra.mxu0 0
        %1523 = vmatprep.subr.bf16.mxu0 0
        %1524 = vmatpush1.bf16.msra.mxu0 0
        %1525 = vmatprep.subr.bf16.mxu0 0
        %1526 = vmatpush1.bf16.msra.mxu0 0
        %1527 = vmatprep.subr.bf16.mxu0 0
        %1528 = vmatpush1.bf16.msra.mxu0 0
        %1529 = vmatprep.subr.bf16.mxu0 0
        %1530 = vmatpush1.bf16.msra.mxu0 0
        %1531 = vmatprep.subr.bf16.mxu0 0
        %1532 = vmatpush1.bf16.msra.mxu0 0
        %1533 = vmatprep.subr.bf16.mxu0 0
        %1534 = vmatpush1.bf16.msra.mxu0 0
        %1535 = vmatprep.subr.bf16.mxu0 0
        %1536 = vmatpush1.bf16.msra.mxu0 0
        %1537 = vmatprep.subr.bf16.mxu0 0
        %1538 = vmatpush1.bf16.msra.mxu0 0
        %1539 = vmatprep.subr.bf16.mxu0 0
        %1540 = vmatpush1.bf16.msra.mxu0 0
        %1541 = vmatprep.subr.bf16.mxu0 0
        %1542 = vmatpush1.bf16.msra.mxu0 0
        %1543 = vmatprep.subr.bf16.mxu0 0
        %1544 = vmatpush1.bf16.msra.mxu0 0
        %1545 = vmatprep.mubr.bf16.mxu0 0
        %1546 = vmatmul.mubr.bf16.gmra.mrb[0].mxu0 %v1508
        %v1547 = vpop.f32.mrb[0].mxu0
        %v1548 = vadd.f32 0.0, %v1547
        %v1549 = vpop.f32.mrb[0].mxu0
        %v1550 = vpop.f32.mrb[0].mxu0
        %v1551 = vpop.f32.mrb[0].mxu0
        %1552 = vdwg.mxu0
        %v1553 = vadd.f32 %v1392, %v1548
        %v1554 = vlaneseq
        %v1555 = vshrl.u32 %v1554, 7
        %v1556 = vsub.s32 0, %v1555
        %v1557 = vrot.slane %v786, %v1556
        %v1558 = vadd.f32 %v1553, %v1557
        %v1559 = vadd.f32 %v1558, %v782
        %v1560 = vsel %vm813, %v1559, 0.0
        %1561 = vadd.xlane.f32.xlu0 %v1560
        %v1562 = vpop.xlane.xlu0 %1561
        %v1563 = vrcp.pop 32.0
        %v1564 = vmul.f32 %v1562, %v1563
        %v1565 = vsub.f32 %v1559, %v1564
        %v1566 = vmul.f32 %v1565, %v1565
        %v1567 = vsel %vm813, %v1566, 0.0
        %1568 = vadd.xlane.f32.xlu0 %v1567
        %v1569 = vpop.xlane.xlu0 %1568
        %v1570 = vmul.f32 %v1569, %v1563
        %v1571 = vadd.f32 %v1570, 1e-05
        %v1572 = vrsqrt.pop %v1571
        %v1573 = vmul.f32 %v1565, %v1572
        %v1574 = vlaneseq
        %v1575 = vshrl.u32 %v1574, 7
        %v1576 = vsub.s32 1, %v1575
        %v1577 = vrot.slane %v786, %v1576
        %v1578 = vmul.f32 %v1573, %v1577
        %v1579 = vlaneseq
        %v1580 = vshrl.u32 %v1579, 7
        %v1581 = vsub.s32 2, %v1580
        %v1582 = vrot.slane %v786, %v1581
        %v1583 = vadd.f32 %v1578, %v1582
        %v1584 = vld [vmem:[%s745] sm:$0xf]
        %v1585 = vld [vmem:[%s745 + $0x4] sm:$0xf]
        %v1586 = vld [vmem:[%s745 + $0x8] sm:$0xf]
        %v1587 = vld [vmem:[%s745 + $0xc] sm:$0xf]
        %v1588 = vld [vmem:[%s750] sm:$0xf]
        %v1589 = vld [vmem:[%s750 + $0x4] sm:$0xf]
        %v1590 = vld [vmem:[%s750 + $0x8] sm:$0xf]
        %v1591 = vld [vmem:[%s750 + $0xc] sm:$0xf]
        %v1592 = vld [vmem:[%s755] sm:$0xf]
        %v1593 = vld [vmem:[%s755 + $0x4] sm:$0xf]
        %v1594 = vld [vmem:[%s755 + $0x8] sm:$0xf]
        %v1595 = vld [vmem:[%s755 + $0xc] sm:$0xf]
        %v1596 = vpack.c.bf16 %v1583, %v1583
        %v1601 = vunpack.c.l.b16 %v1584
        %v1602 = vunpack.c.l.b16 %v1585
        %v1603 = vunpack.c.l.b16 %v1586
        %v1604 = vunpack.c.l.b16 %v1587
        %v1605 = vpack.c.b16 %v1602, %v1601
        %v1606 = vpack.c.b16 %v1604, %v1603
        %v1610 = vsel %vm813, %v1596, 0
        %1612 = vmatprep.subr.bf16.mxu0 0
        %1613 = vmatpush1.bf16.msra.mxu0 %v1605
        %1614 = vmatprep.subr.bf16.mxu0 0
        %1615 = vmatpush1.bf16.msra.mxu0 %v1606
        %1616 = vmatprep.subr.bf16.mxu0 0
        %1617 = vmatpush1.bf16.msra.mxu0 0
        %1618 = vmatprep.subr.bf16.mxu0 0
        %1619 = vmatpush1.bf16.msra.mxu0 0
        %1620 = vmatprep.subr.bf16.mxu0 0
        %1621 = vmatpush1.bf16.msra.mxu0 0
        %1622 = vmatprep.subr.bf16.mxu0 0
        %1623 = vmatpush1.bf16.msra.mxu0 0
        %1624 = vmatprep.subr.bf16.mxu0 0
        %1625 = vmatpush1.bf16.msra.mxu0 0
        %1626 = vmatprep.subr.bf16.mxu0 0
        %1627 = vmatpush1.bf16.msra.mxu0 0
        %1628 = vmatprep.subr.bf16.mxu0 0
        %1629 = vmatpush1.bf16.msra.mxu0 0
        %1630 = vmatprep.subr.bf16.mxu0 0
        %1631 = vmatpush1.bf16.msra.mxu0 0
        %1632 = vmatprep.subr.bf16.mxu0 0
        %1633 = vmatpush1.bf16.msra.mxu0 0
        %1634 = vmatprep.subr.bf16.mxu0 0
        %1635 = vmatpush1.bf16.msra.mxu0 0
        %1636 = vmatprep.subr.bf16.mxu0 0
        %1637 = vmatpush1.bf16.msra.mxu0 0
        %1638 = vmatprep.subr.bf16.mxu0 0
        %1639 = vmatpush1.bf16.msra.mxu0 0
        %1640 = vmatprep.subr.bf16.mxu0 0
        %1641 = vmatpush1.bf16.msra.mxu0 0
        %1642 = vmatprep.subr.bf16.mxu0 0
        %1643 = vmatpush1.bf16.msra.mxu0 0
        %1644 = vmatprep.mubr.bf16.mxu0 0
        %1645 = vmatmul.mubr.bf16.gmra.mrb[0].mxu0 %v1610
        %v1646 = vpop.f32.mrb[0].mxu0
        %v1647 = vadd.f32 0.0, %v1646
        %v1648 = vpop.f32.mrb[0].mxu0
        %v1649 = vpop.f32.mrb[0].mxu0
        %v1650 = vpop.f32.mrb[0].mxu0
        %1651 = vdwg.mxu0
        %v1652 = vmul.f32 %v1647, 0.17677669
        %v1653 = vpack.c.bf16 %v783, %v783
        %v1658 = vunpack.c.l.b16 %v1588
        %v1659 = vunpack.c.l.b16 %v1589
        %v1660 = vunpack.c.l.b16 %v1590
        %v1661 = vunpack.c.l.b16 %v1591
        %v1662 = vpack.c.b16 %v1659, %v1658
        %v1663 = vpack.c.b16 %v1661, %v1660
        %v1667 = vsel %vm813, %v1653, 0
        %1669 = vmatprep.subr.bf16.mxu0 0
        %1670 = vmatpush1.bf16.msra.mxu0 %v1662
        %1671 = vmatprep.subr.bf16.mxu0 0
        %1672 = vmatpush1.bf16.msra.mxu0 %v1663
        %1673 = vmatprep.subr.bf16.mxu0 0
        %1674 = vmatpush1.bf16.msra.mxu0 0
        %1675 = vmatprep.subr.bf16.mxu0 0
        %1676 = vmatpush1.bf16.msra.mxu0 0
        %1677 = vmatprep.subr.bf16.mxu0 0
        %1678 = vmatpush1.bf16.msra.mxu0 0
        %1679 = vmatprep.subr.bf16.mxu0 0
        %1680 = vmatpush1.bf16.msra.mxu0 0
        %1681 = vmatprep.subr.bf16.mxu0 0
        %1682 = vmatpush1.bf16.msra.mxu0 0
        %1683 = vmatprep.subr.bf16.mxu0 0
        %1684 = vmatpush1.bf16.msra.mxu0 0
        %1685 = vmatprep.subr.bf16.mxu0 0
        %1686 = vmatpush1.bf16.msra.mxu0 0
        %1687 = vmatprep.subr.bf16.mxu0 0
        %1688 = vmatpush1.bf16.msra.mxu0 0
        %1689 = vmatprep.subr.bf16.mxu0 0
        %1690 = vmatpush1.bf16.msra.mxu0 0
        %1691 = vmatprep.subr.bf16.mxu0 0
        %1692 = vmatpush1.bf16.msra.mxu0 0
        %1693 = vmatprep.subr.bf16.mxu0 0
        %1694 = vmatpush1.bf16.msra.mxu0 0
        %1695 = vmatprep.subr.bf16.mxu0 0
        %1696 = vmatpush1.bf16.msra.mxu0 0
        %1697 = vmatprep.subr.bf16.mxu0 0
        %1698 = vmatpush1.bf16.msra.mxu0 0
        %1699 = vmatprep.subr.bf16.mxu0 0
        %1700 = vmatpush1.bf16.msra.mxu0 0
        %1701 = vmatprep.mubr.bf16.mxu0 0
        %1702 = vmatmul.mubr.bf16.gmra.mrb[0].mxu0 %v1667
        %v1703 = vpop.f32.mrb[0].mxu0
        %v1704 = vadd.f32 0.0, %v1703
        %v1705 = vpop.f32.mrb[0].mxu0
        %v1706 = vpop.f32.mrb[0].mxu0
        %v1707 = vpop.f32.mrb[0].mxu0
        %1708 = vdwg.mxu0
        %v1709 = vpack.c.bf16 %v1652, %v1652
        %v1710 = vpack.c.bf16 %v1704, %v1704
        %v1712 = vsel %vm912, %v1709, 0
        %v1715 = vsel %vm912, %v1710, 0
        %1717 = vmatprep.subr.bf16.mxu0 0
        %1718 = vmatpush1.bf16.xpose.msra.mxu0 %v1715
        %1719 = vmatprep.subr.bf16.mxu0 0
        %1720 = vmatpush1.bf16.xpose.msra.mxu0 0
        %1721 = vmatprep.subr.bf16.mxu0 0
        %1722 = vmatpush1.bf16.xpose.msra.mxu0 0
        %1723 = vmatprep.subr.bf16.mxu0 0
        %1724 = vmatpush1.bf16.xpose.msra.mxu0 0
        %1725 = vmatprep.subr.bf16.mxu0 0
        %1726 = vmatpush1.bf16.xpose.msra.mxu0 0
        %1727 = vmatprep.subr.bf16.mxu0 0
        %1728 = vmatpush1.bf16.xpose.msra.mxu0 0
        %1729 = vmatprep.subr.bf16.mxu0 0
        %1730 = vmatpush1.bf16.xpose.msra.mxu0 0
        %1731 = vmatprep.subr.bf16.mxu0 0
        %1732 = vmatpush1.bf16.xpose.msra.mxu0 0
        %1733 = vmatprep.subr.bf16.mxu0 0
        %1734 = vmatpush1.bf16.xpose.msra.mxu0 0
        %1735 = vmatprep.subr.bf16.mxu0 0
        %1736 = vmatpush1.bf16.xpose.msra.mxu0 0
        %1737 = vmatprep.subr.bf16.mxu0 0
        %1738 = vmatpush1.bf16.xpose.msra.mxu0 0
        %1739 = vmatprep.subr.bf16.mxu0 0
        %1740 = vmatpush1.bf16.xpose.msra.mxu0 0
        %1741 = vmatprep.subr.bf16.mxu0 0
        %1742 = vmatpush1.bf16.xpose.msra.mxu0 0
        %1743 = vmatprep.subr.bf16.mxu0 0
        %1744 = vmatpush1.bf16.xpose.msra.mxu0 0
        %1745 = vmatprep.subr.bf16.mxu0 0
        %1746 = vmatpush1.bf16.xpose.msra.mxu0 0
        %1747 = vmatprep.subr.bf16.mxu0 0
        %1748 = vmatpush1.bf16.xpose.msra.mxu0 0
        %1749 = vmatprep.mubr.bf16.mxu0 0
        %1750 = vmatmul.mubr.bf16.gmra.mrb[0].mxu0 %v1712
        %v1751 = vpop.f32.mrb[0].mxu0
        %v1752 = vadd.f32 %v785, %v1751
        %v1753 = vpop.f32.mrb[0].mxu0
        %v1754 = vpop.f32.mrb[0].mxu0
        %v1755 = vpop.f32.mrb[0].mxu0
        %1756 = vdwg.mxu0
        %v1757 = vsel %vm912, %v1752, -inf
        %1758 = vmax.xlane.f32.xlu0 %v1757
        %v1759 = vpop.xlane.xlu0 %1758
        %v1760 = vsub.f32 %v1752, %v1759
        %v1761 = vmul.f32 %v1760, 1.442695
        %v1762 = vpow.pop %v1761
        %v1763 = vsel %vm912, %v1762, 0.0
        %1764 = vadd.xlane.f32.xlu0 %v1763
        %v1765 = vpop.xlane.xlu0 %1764
        %v1766 = vrcp.pop %v1765
        %v1767 = vmul.f32 %v1765, %v1766
        %v1768 = vsub.f32 2.0, %v1767
        %v1769 = vmul.f32 %v1766, %v1768
        %v1770 = vmul.f32 %v1762, %v1769
        %v1771 = vpack.c.bf16 %v1770, %v1770
        %1773 = vrot.lane.b32.xlu0 %v1710, 96
        %v1774 = vpop.permute.xlu0 %1773
        %v1776 = vsel %vm912, %v1771, 0
        %v1779 = vsel %vm980, %v1774, 0
        %1781 = vmatprep.subr.bf16.mxu0 0
        %1782 = vmatpush1.bf16.msra.mxu0 %v1779
        %1783 = vmatprep.subr.bf16.mxu0 0
        %1784 = vmatpush1.bf16.msra.mxu0 0
        %1785 = vmatprep.subr.bf16.mxu0 0
        %1786 = vmatpush1.bf16.msra.mxu0 0
        %1787 = vmatprep.subr.bf16.mxu0 0
        %1788 = vmatpush1.bf16.msra.mxu0 0
        %1789 = vmatprep.subr.bf16.mxu0 0
        %1790 = vmatpush1.bf16.msra.mxu0 0
        %1791 = vmatprep.subr.bf16.mxu0 0
        %1792 = vmatpush1.bf16.msra.mxu0 0
        %1793 = vmatprep.subr.bf16.mxu0 0
        %1794 = vmatpush1.bf16.msra.mxu0 0
        %1795 = vmatprep.subr.bf16.mxu0 0
        %1796 = vmatpush1.bf16.msra.mxu0 0
        %1797 = vmatprep.subr.bf16.mxu0 0
        %1798 = vmatpush1.bf16.msra.mxu0 0
        %1799 = vmatprep.subr.bf16.mxu0 0
        %1800 = vmatpush1.bf16.msra.mxu0 0
        %1801 = vmatprep.subr.bf16.mxu0 0
        %1802 = vmatpush1.bf16.msra.mxu0 0
        %1803 = vmatprep.subr.bf16.mxu0 0
        %1804 = vmatpush1.bf16.msra.mxu0 0
        %1805 = vmatprep.subr.bf16.mxu0 0
        %1806 = vmatpush1.bf16.msra.mxu0 0
        %1807 = vmatprep.subr.bf16.mxu0 0
        %1808 = vmatpush1.bf16.msra.mxu0 0
        %1809 = vmatprep.subr.bf16.mxu0 0
        %1810 = vmatpush1.bf16.msra.mxu0 0
        %1811 = vmatprep.subr.bf16.mxu0 0
        %1812 = vmatpush1.bf16.msra.mxu0 0
        %1813 = vmatprep.mubr.bf16.mxu0 0
        %1814 = vmatmul.mubr.bf16.gmra.mrb[0].mxu0 %v1776
        %v1815 = vpop.f32.mrb[0].mxu0
        %v1816 = vadd.f32 0.0, %v1815
        %v1817 = vpop.f32.mrb[0].mxu0
        %v1818 = vpop.f32.mrb[0].mxu0
        %v1819 = vpop.f32.mrb[0].mxu0
        %1820 = vdwg.mxu0
        %v1821 = vpack.c.bf16 %v1816, %v1816
        %1823 = vrot.lane.b32.xlu0 %v1709, 120
        %v1824 = vpop.permute.xlu0 %1823
        %1825 = vrot.lane.b32.xlu0 %v1710, 120
        %v1826 = vpop.permute.xlu0 %1825
        %v1828 = vsel %vm912, %v1824, 0
        %v1831 = vsel %vm912, %v1826, 0
        %1833 = vmatprep.subr.bf16.mxu0 0
        %1834 = vmatpush1.bf16.xpose.msra.mxu0 %v1831
        %1835 = vmatprep.subr.bf16.mxu0 0
        %1836 = vmatpush1.bf16.xpose.msra.mxu0 0
        %1837 = vmatprep.subr.bf16.mxu0 0
        %1838 = vmatpush1.bf16.xpose.msra.mxu0 0
        %1839 = vmatprep.subr.bf16.mxu0 0
        %1840 = vmatpush1.bf16.xpose.msra.mxu0 0
        %1841 = vmatprep.subr.bf16.mxu0 0
        %1842 = vmatpush1.bf16.xpose.msra.mxu0 0
        %1843 = vmatprep.subr.bf16.mxu0 0
        %1844 = vmatpush1.bf16.xpose.msra.mxu0 0
        %1845 = vmatprep.subr.bf16.mxu0 0
        %1846 = vmatpush1.bf16.xpose.msra.mxu0 0
        %1847 = vmatprep.subr.bf16.mxu0 0
        %1848 = vmatpush1.bf16.xpose.msra.mxu0 0
        %1849 = vmatprep.subr.bf16.mxu0 0
        %1850 = vmatpush1.bf16.xpose.msra.mxu0 0
        %1851 = vmatprep.subr.bf16.mxu0 0
        %1852 = vmatpush1.bf16.xpose.msra.mxu0 0
        %1853 = vmatprep.subr.bf16.mxu0 0
        %1854 = vmatpush1.bf16.xpose.msra.mxu0 0
        %1855 = vmatprep.subr.bf16.mxu0 0
        %1856 = vmatpush1.bf16.xpose.msra.mxu0 0
        %1857 = vmatprep.subr.bf16.mxu0 0
        %1858 = vmatpush1.bf16.xpose.msra.mxu0 0
        %1859 = vmatprep.subr.bf16.mxu0 0
        %1860 = vmatpush1.bf16.xpose.msra.mxu0 0
        %1861 = vmatprep.subr.bf16.mxu0 0
        %1862 = vmatpush1.bf16.xpose.msra.mxu0 0
        %1863 = vmatprep.subr.bf16.mxu0 0
        %1864 = vmatpush1.bf16.xpose.msra.mxu0 0
        %1865 = vmatprep.mubr.bf16.mxu0 0
        %1866 = vmatmul.mubr.bf16.gmra.mrb[0].mxu0 %v1828
        %v1867 = vpop.f32.mrb[0].mxu0
        %v1868 = vadd.f32 %v785, %v1867
        %v1869 = vpop.f32.mrb[0].mxu0
        %v1870 = vpop.f32.mrb[0].mxu0
        %v1871 = vpop.f32.mrb[0].mxu0
        %1872 = vdwg.mxu0
        %v1873 = vsel %vm912, %v1868, -inf
        %1874 = vmax.xlane.f32.xlu0 %v1873
        %v1875 = vpop.xlane.xlu0 %1874
        %v1876 = vsub.f32 %v1868, %v1875
        %v1877 = vmul.f32 %v1876, 1.442695
        %v1878 = vpow.pop %v1877
        %v1879 = vsel %vm912, %v1878, 0.0
        %1880 = vadd.xlane.f32.xlu0 %v1879
        %v1881 = vpop.xlane.xlu0 %1880
        %v1882 = vrcp.pop %v1881
        %v1883 = vmul.f32 %v1881, %v1882
        %v1884 = vsub.f32 2.0, %v1883
        %v1885 = vmul.f32 %v1882, %v1884
        %v1886 = vmul.f32 %v1878, %v1885
        %v1887 = vpack.c.bf16 %v1886, %v1886
        %1888 = vrot.lane.b32.xlu0 %v1710, 88
        %v1889 = vpop.permute.xlu0 %1888
        %v1891 = vsel %vm912, %v1887, 0
        %v1894 = vsel %vm980, %v1889, 0
        %1896 = vmatprep.subr.bf16.mxu0 0
        %1897 = vmatpush1.bf16.msra.mxu0 %v1894
        %1898 = vmatprep.subr.bf16.mxu0 0
        %1899 = vmatpush1.bf16.msra.mxu0 0
        %1900 = vmatprep.subr.bf16.mxu0 0
        %1901 = vmatpush1.bf16.msra.mxu0 0
        %1902 = vmatprep.subr.bf16.mxu0 0
        %1903 = vmatpush1.bf16.msra.mxu0 0
        %1904 = vmatprep.subr.bf16.mxu0 0
        %1905 = vmatpush1.bf16.msra.mxu0 0
        %1906 = vmatprep.subr.bf16.mxu0 0
        %1907 = vmatpush1.bf16.msra.mxu0 0
        %1908 = vmatprep.subr.bf16.mxu0 0
        %1909 = vmatpush1.bf16.msra.mxu0 0
        %1910 = vmatprep.subr.bf16.mxu0 0
        %1911 = vmatpush1.bf16.msra.mxu0 0
        %1912 = vmatprep.subr.bf16.mxu0 0
        %1913 = vmatpush1.bf16.msra.mxu0 0
        %1914 = vmatprep.subr.bf16.mxu0 0
        %1915 = vmatpush1.bf16.msra.mxu0 0
        %1916 = vmatprep.subr.bf16.mxu0 0
        %1917 = vmatpush1.bf16.msra.mxu0 0
        %1918 = vmatprep.subr.bf16.mxu0 0
        %1919 = vmatpush1.bf16.msra.mxu0 0
        %1920 = vmatprep.subr.bf16.mxu0 0
        %1921 = vmatpush1.bf16.msra.mxu0 0
        %1922 = vmatprep.subr.bf16.mxu0 0
        %1923 = vmatpush1.bf16.msra.mxu0 0
        %1924 = vmatprep.subr.bf16.mxu0 0
        %1925 = vmatpush1.bf16.msra.mxu0 0
        %1926 = vmatprep.subr.bf16.mxu0 0
        %1927 = vmatpush1.bf16.msra.mxu0 0
        %1928 = vmatprep.mubr.bf16.mxu0 0
        %1929 = vmatmul.mubr.bf16.gmra.mrb[0].mxu0 %v1891
        %v1930 = vpop.f32.mrb[0].mxu0
        %v1931 = vadd.f32 0.0, %v1930
        %v1932 = vpop.f32.mrb[0].mxu0
        %v1933 = vpop.f32.mrb[0].mxu0
        %v1934 = vpop.f32.mrb[0].mxu0
        %1935 = vdwg.mxu0
        %v1936 = vpack.c.bf16 %v1931, %v1931
        %v1938 = vsel %vm912, %v1936, 0
        %v1941 = vsel %vm980, %v1593, 0
        %1943 = vmatprep.subr.bf16.mxu0 0
        %1944 = vmatpush1.bf16.msra.mxu0 %v1941
        %1945 = vmatprep.subr.bf16.mxu0 0
        %1946 = vmatpush1.bf16.msra.mxu0 0
        %1947 = vmatprep.subr.bf16.mxu0 0
        %1948 = vmatpush1.bf16.msra.mxu0 0
        %1949 = vmatprep.subr.bf16.mxu0 0
        %1950 = vmatpush1.bf16.msra.mxu0 0
        %1951 = vmatprep.subr.bf16.mxu0 0
        %1952 = vmatpush1.bf16.msra.mxu0 0
        %1953 = vmatprep.subr.bf16.mxu0 0
        %1954 = vmatpush1.bf16.msra.mxu0 0
        %1955 = vmatprep.subr.bf16.mxu0 0
        %1956 = vmatpush1.bf16.msra.mxu0 0
        %1957 = vmatprep.subr.bf16.mxu0 0
        %1958 = vmatpush1.bf16.msra.mxu0 0
        %1959 = vmatprep.subr.bf16.mxu0 0
        %1960 = vmatpush1.bf16.msra.mxu0 0
        %1961 = vmatprep.subr.bf16.mxu0 0
        %1962 = vmatpush1.bf16.msra.mxu0 0
        %1963 = vmatprep.subr.bf16.mxu0 0
        %1964 = vmatpush1.bf16.msra.mxu0 0
        %1965 = vmatprep.subr.bf16.mxu0 0
        %1966 = vmatpush1.bf16.msra.mxu0 0
        %1967 = vmatprep.subr.bf16.mxu0 0
        %1968 = vmatpush1.bf16.msra.mxu0 0
        %1969 = vmatprep.subr.bf16.mxu0 0
        %1970 = vmatpush1.bf16.msra.mxu0 0
        %1971 = vmatprep.subr.bf16.mxu0 0
        %1972 = vmatpush1.bf16.msra.mxu0 0
        %1973 = vmatprep.subr.bf16.mxu0 0
        %1974 = vmatpush1.bf16.msra.mxu0 0
        %1975 = vmatprep.mubr.bf16.mxu0 0
        %1976 = vmatmul.mubr.bf16.gmra.mrb[0].mxu0 %v1938
        %v1977 = vpop.f32.mrb[0].mxu0
        %v1978 = vadd.f32 0.0, %v1977
        %v1979 = vpop.f32.mrb[0].mxu0
        %v1980 = vpop.f32.mrb[0].mxu0
        %v1981 = vpop.f32.mrb[0].mxu0
        %1982 = vdwg.mxu0
        %v1984 = vsel %vm912, %v1821, 0
        %v1987 = vsel %vm980, %v1592, 0
        %1989 = vmatprep.subr.bf16.mxu0 0
        %1990 = vmatpush1.bf16.msra.mxu0 %v1987
        %1991 = vmatprep.subr.bf16.mxu0 0
        %1992 = vmatpush1.bf16.msra.mxu0 0
        %1993 = vmatprep.subr.bf16.mxu0 0
        %1994 = vmatpush1.bf16.msra.mxu0 0
        %1995 = vmatprep.subr.bf16.mxu0 0
        %1996 = vmatpush1.bf16.msra.mxu0 0
        %1997 = vmatprep.subr.bf16.mxu0 0
        %1998 = vmatpush1.bf16.msra.mxu0 0
        %1999 = vmatprep.subr.bf16.mxu0 0
        %2000 = vmatpush1.bf16.msra.mxu0 0
        %2001 = vmatprep.subr.bf16.mxu0 0
        %2002 = vmatpush1.bf16.msra.mxu0 0
        %2003 = vmatprep.subr.bf16.mxu0 0
        %2004 = vmatpush1.bf16.msra.mxu0 0
        %2005 = vmatprep.subr.bf16.mxu0 0
        %2006 = vmatpush1.bf16.msra.mxu0 0
        %2007 = vmatprep.subr.bf16.mxu0 0
        %2008 = vmatpush1.bf16.msra.mxu0 0
        %2009 = vmatprep.subr.bf16.mxu0 0
        %2010 = vmatpush1.bf16.msra.mxu0 0
        %2011 = vmatprep.subr.bf16.mxu0 0
        %2012 = vmatpush1.bf16.msra.mxu0 0
        %2013 = vmatprep.subr.bf16.mxu0 0
        %2014 = vmatpush1.bf16.msra.mxu0 0
        %2015 = vmatprep.subr.bf16.mxu0 0
        %2016 = vmatpush1.bf16.msra.mxu0 0
        %2017 = vmatprep.subr.bf16.mxu0 0
        %2018 = vmatpush1.bf16.msra.mxu0 0
        %2019 = vmatprep.subr.bf16.mxu0 0
        %2020 = vmatpush1.bf16.msra.mxu0 0
        %2021 = vmatprep.mubr.bf16.mxu0 0
        %2022 = vmatmul.mubr.bf16.gmra.mrb[0].mxu0 %v1984
        %v2023 = vpop.f32.mrb[0].mxu0
        %v2024 = vadd.f32 %v1978, %v2023
        %v2025 = vpop.f32.mrb[0].mxu0
        %v2026 = vpop.f32.mrb[0].mxu0
        %v2027 = vpop.f32.mrb[0].mxu0
        %2028 = vdwg.mxu0
        %2029 = vrot.lane.b32.xlu0 %v1709, 112
        %v2030 = vpop.permute.xlu0 %2029
        %2031 = vrot.lane.b32.xlu0 %v1710, 112
        %v2032 = vpop.permute.xlu0 %2031
        %v2034 = vsel %vm912, %v2030, 0
        %v2037 = vsel %vm912, %v2032, 0
        %2039 = vmatprep.subr.bf16.mxu0 0
        %2040 = vmatpush1.bf16.xpose.msra.mxu0 %v2037
        %2041 = vmatprep.subr.bf16.mxu0 0
        %2042 = vmatpush1.bf16.xpose.msra.mxu0 0
        %2043 = vmatprep.subr.bf16.mxu0 0
        %2044 = vmatpush1.bf16.xpose.msra.mxu0 0
        %2045 = vmatprep.subr.bf16.mxu0 0
        %2046 = vmatpush1.bf16.xpose.msra.mxu0 0
        %2047 = vmatprep.subr.bf16.mxu0 0
        %2048 = vmatpush1.bf16.xpose.msra.mxu0 0
        %2049 = vmatprep.subr.bf16.mxu0 0
        %2050 = vmatpush1.bf16.xpose.msra.mxu0 0
        %2051 = vmatprep.subr.bf16.mxu0 0
        %2052 = vmatpush1.bf16.xpose.msra.mxu0 0
        %2053 = vmatprep.subr.bf16.mxu0 0
        %2054 = vmatpush1.bf16.xpose.msra.mxu0 0
        %2055 = vmatprep.subr.bf16.mxu0 0
        %2056 = vmatpush1.bf16.xpose.msra.mxu0 0
        %2057 = vmatprep.subr.bf16.mxu0 0
        %2058 = vmatpush1.bf16.xpose.msra.mxu0 0
        %2059 = vmatprep.subr.bf16.mxu0 0
        %2060 = vmatpush1.bf16.xpose.msra.mxu0 0
        %2061 = vmatprep.subr.bf16.mxu0 0
        %2062 = vmatpush1.bf16.xpose.msra.mxu0 0
        %2063 = vmatprep.subr.bf16.mxu0 0
        %2064 = vmatpush1.bf16.xpose.msra.mxu0 0
        %2065 = vmatprep.subr.bf16.mxu0 0
        %2066 = vmatpush1.bf16.xpose.msra.mxu0 0
        %2067 = vmatprep.subr.bf16.mxu0 0
        %2068 = vmatpush1.bf16.xpose.msra.mxu0 0
        %2069 = vmatprep.subr.bf16.mxu0 0
        %2070 = vmatpush1.bf16.xpose.msra.mxu0 0
        %2071 = vmatprep.mubr.bf16.mxu0 0
        %2072 = vmatmul.mubr.bf16.gmra.mrb[0].mxu0 %v2034
        %v2073 = vpop.f32.mrb[0].mxu0
        %v2074 = vadd.f32 %v785, %v2073
        %v2075 = vpop.f32.mrb[0].mxu0
        %v2076 = vpop.f32.mrb[0].mxu0
        %v2077 = vpop.f32.mrb[0].mxu0
        %2078 = vdwg.mxu0
        %v2079 = vsel %vm912, %v2074, -inf
        %2080 = vmax.xlane.f32.xlu0 %v2079
        %v2081 = vpop.xlane.xlu0 %2080
        %v2082 = vsub.f32 %v2074, %v2081
        %v2083 = vmul.f32 %v2082, 1.442695
        %v2084 = vpow.pop %v2083
        %v2085 = vsel %vm912, %v2084, 0.0
        %2086 = vadd.xlane.f32.xlu0 %v2085
        %v2087 = vpop.xlane.xlu0 %2086
        %v2088 = vrcp.pop %v2087
        %v2089 = vmul.f32 %v2087, %v2088
        %v2090 = vsub.f32 2.0, %v2089
        %v2091 = vmul.f32 %v2088, %v2090
        %v2092 = vmul.f32 %v2084, %v2091
        %v2093 = vpack.c.bf16 %v2092, %v2092
        %2094 = vrot.lane.b32.xlu0 %v1710, 80
        %v2095 = vpop.permute.xlu0 %2094
        %v2097 = vsel %vm912, %v2093, 0
        %v2100 = vsel %vm980, %v2095, 0
        %2102 = vmatprep.subr.bf16.mxu0 0
        %2103 = vmatpush1.bf16.msra.mxu0 %v2100
        %2104 = vmatprep.subr.bf16.mxu0 0
        %2105 = vmatpush1.bf16.msra.mxu0 0
        %2106 = vmatprep.subr.bf16.mxu0 0
        %2107 = vmatpush1.bf16.msra.mxu0 0
        %2108 = vmatprep.subr.bf16.mxu0 0
        %2109 = vmatpush1.bf16.msra.mxu0 0
        %2110 = vmatprep.subr.bf16.mxu0 0
        %2111 = vmatpush1.bf16.msra.mxu0 0
        %2112 = vmatprep.subr.bf16.mxu0 0
        %2113 = vmatpush1.bf16.msra.mxu0 0
        %2114 = vmatprep.subr.bf16.mxu0 0
        %2115 = vmatpush1.bf16.msra.mxu0 0
        %2116 = vmatprep.subr.bf16.mxu0 0
        %2117 = vmatpush1.bf16.msra.mxu0 0
        %2118 = vmatprep.subr.bf16.mxu0 0
        %2119 = vmatpush1.bf16.msra.mxu0 0
        %2120 = vmatprep.subr.bf16.mxu0 0
        %2121 = vmatpush1.bf16.msra.mxu0 0
        %2122 = vmatprep.subr.bf16.mxu0 0
        %2123 = vmatpush1.bf16.msra.mxu0 0
        %2124 = vmatprep.subr.bf16.mxu0 0
        %2125 = vmatpush1.bf16.msra.mxu0 0
        %2126 = vmatprep.subr.bf16.mxu0 0
        %2127 = vmatpush1.bf16.msra.mxu0 0
        %2128 = vmatprep.subr.bf16.mxu0 0
        %2129 = vmatpush1.bf16.msra.mxu0 0
        %2130 = vmatprep.subr.bf16.mxu0 0
        %2131 = vmatpush1.bf16.msra.mxu0 0
        %2132 = vmatprep.subr.bf16.mxu0 0
        %2133 = vmatpush1.bf16.msra.mxu0 0
        %2134 = vmatprep.mubr.bf16.mxu0 0
        %2135 = vmatmul.mubr.bf16.gmra.mrb[0].mxu0 %v2097
        %v2136 = vpop.f32.mrb[0].mxu0
        %v2137 = vadd.f32 0.0, %v2136
        %v2138 = vpop.f32.mrb[0].mxu0
        %v2139 = vpop.f32.mrb[0].mxu0
        %v2140 = vpop.f32.mrb[0].mxu0
        %2141 = vdwg.mxu0
        %v2142 = vpack.c.bf16 %v2137, %v2137
        %v2144 = vsel %vm912, %v2142, 0
        %v2147 = vsel %vm980, %v1594, 0
        %2149 = vmatprep.subr.bf16.mxu0 0
        %2150 = vmatpush1.bf16.msra.mxu0 %v2147
        %2151 = vmatprep.subr.bf16.mxu0 0
        %2152 = vmatpush1.bf16.msra.mxu0 0
        %2153 = vmatprep.subr.bf16.mxu0 0
        %2154 = vmatpush1.bf16.msra.mxu0 0
        %2155 = vmatprep.subr.bf16.mxu0 0
        %2156 = vmatpush1.bf16.msra.mxu0 0
        %2157 = vmatprep.subr.bf16.mxu0 0
        %2158 = vmatpush1.bf16.msra.mxu0 0
        %2159 = vmatprep.subr.bf16.mxu0 0
        %2160 = vmatpush1.bf16.msra.mxu0 0
        %2161 = vmatprep.subr.bf16.mxu0 0
        %2162 = vmatpush1.bf16.msra.mxu0 0
        %2163 = vmatprep.subr.bf16.mxu0 0
        %2164 = vmatpush1.bf16.msra.mxu0 0
        %2165 = vmatprep.subr.bf16.mxu0 0
        %2166 = vmatpush1.bf16.msra.mxu0 0
        %2167 = vmatprep.subr.bf16.mxu0 0
        %2168 = vmatpush1.bf16.msra.mxu0 0
        %2169 = vmatprep.subr.bf16.mxu0 0
        %2170 = vmatpush1.bf16.msra.mxu0 0
        %2171 = vmatprep.subr.bf16.mxu0 0
        %2172 = vmatpush1.bf16.msra.mxu0 0
        %2173 = vmatprep.subr.bf16.mxu0 0
        %2174 = vmatpush1.bf16.msra.mxu0 0
        %2175 = vmatprep.subr.bf16.mxu0 0
        %2176 = vmatpush1.bf16.msra.mxu0 0
        %2177 = vmatprep.subr.bf16.mxu0 0
        %2178 = vmatpush1.bf16.msra.mxu0 0
        %2179 = vmatprep.subr.bf16.mxu0 0
        %2180 = vmatpush1.bf16.msra.mxu0 0
        %2181 = vmatprep.mubr.bf16.mxu0 0
        %2182 = vmatmul.mubr.bf16.gmra.mrb[0].mxu0 %v2144
        %v2183 = vpop.f32.mrb[0].mxu0
        %v2184 = vadd.f32 0.0, %v2183
        %v2185 = vpop.f32.mrb[0].mxu0
        %v2186 = vpop.f32.mrb[0].mxu0
        %v2187 = vpop.f32.mrb[0].mxu0
        %2188 = vdwg.mxu0
        %v2189 = vadd.f32 %v2024, %v2184
        %2190 = vrot.lane.b32.xlu0 %v1709, 104
        %v2191 = vpop.permute.xlu0 %2190
        %2192 = vrot.lane.b32.xlu0 %v1710, 104
        %v2193 = vpop.permute.xlu0 %2192
        %v2195 = vsel %vm912, %v2191, 0
        %v2198 = vsel %vm912, %v2193, 0
        %2200 = vmatprep.subr.bf16.mxu0 0
        %2201 = vmatpush1.bf16.xpose.msra.mxu0 %v2198
        %2202 = vmatprep.subr.bf16.mxu0 0
        %2203 = vmatpush1.bf16.xpose.msra.mxu0 0
        %2204 = vmatprep.subr.bf16.mxu0 0
        %2205 = vmatpush1.bf16.xpose.msra.mxu0 0
        %2206 = vmatprep.subr.bf16.mxu0 0
        %2207 = vmatpush1.bf16.xpose.msra.mxu0 0
        %2208 = vmatprep.subr.bf16.mxu0 0
        %2209 = vmatpush1.bf16.xpose.msra.mxu0 0
        %2210 = vmatprep.subr.bf16.mxu0 0
        %2211 = vmatpush1.bf16.xpose.msra.mxu0 0
        %2212 = vmatprep.subr.bf16.mxu0 0
        %2213 = vmatpush1.bf16.xpose.msra.mxu0 0
        %2214 = vmatprep.subr.bf16.mxu0 0
        %2215 = vmatpush1.bf16.xpose.msra.mxu0 0
        %2216 = vmatprep.subr.bf16.mxu0 0
        %2217 = vmatpush1.bf16.xpose.msra.mxu0 0
        %2218 = vmatprep.subr.bf16.mxu0 0
        %2219 = vmatpush1.bf16.xpose.msra.mxu0 0
        %2220 = vmatprep.subr.bf16.mxu0 0
        %2221 = vmatpush1.bf16.xpose.msra.mxu0 0
        %2222 = vmatprep.subr.bf16.mxu0 0
        %2223 = vmatpush1.bf16.xpose.msra.mxu0 0
        %2224 = vmatprep.subr.bf16.mxu0 0
        %2225 = vmatpush1.bf16.xpose.msra.mxu0 0
        %2226 = vmatprep.subr.bf16.mxu0 0
        %2227 = vmatpush1.bf16.xpose.msra.mxu0 0
        %2228 = vmatprep.subr.bf16.mxu0 0
        %2229 = vmatpush1.bf16.xpose.msra.mxu0 0
        %2230 = vmatprep.subr.bf16.mxu0 0
        %2231 = vmatpush1.bf16.xpose.msra.mxu0 0
        %2232 = vmatprep.mubr.bf16.mxu0 0
        %2233 = vmatmul.mubr.bf16.gmra.mrb[0].mxu0 %v2195
        %v2234 = vpop.f32.mrb[0].mxu0
        %v2235 = vadd.f32 %v785, %v2234
        %v2236 = vpop.f32.mrb[0].mxu0
        %v2237 = vpop.f32.mrb[0].mxu0
        %v2238 = vpop.f32.mrb[0].mxu0
        %2239 = vdwg.mxu0
        %v2240 = vsel %vm912, %v2235, -inf
        %2241 = vmax.xlane.f32.xlu0 %v2240
        %v2242 = vpop.xlane.xlu0 %2241
        %v2243 = vsub.f32 %v2235, %v2242
        %v2244 = vmul.f32 %v2243, 1.442695
        %v2245 = vpow.pop %v2244
        %v2246 = vsel %vm912, %v2245, 0.0
        %2247 = vadd.xlane.f32.xlu0 %v2246
        %v2248 = vpop.xlane.xlu0 %2247
        %v2249 = vrcp.pop %v2248
        %v2250 = vmul.f32 %v2248, %v2249
        %v2251 = vsub.f32 2.0, %v2250
        %v2252 = vmul.f32 %v2249, %v2251
        %v2253 = vmul.f32 %v2245, %v2252
        %v2254 = vpack.c.bf16 %v2253, %v2253
        %2255 = vrot.lane.b32.xlu0 %v1710, 72
        %v2256 = vpop.permute.xlu0 %2255
        %v2258 = vsel %vm912, %v2254, 0
        %v2261 = vsel %vm980, %v2256, 0
        %2263 = vmatprep.subr.bf16.mxu0 0
        %2264 = vmatpush1.bf16.msra.mxu0 %v2261
        %2265 = vmatprep.subr.bf16.mxu0 0
        %2266 = vmatpush1.bf16.msra.mxu0 0
        %2267 = vmatprep.subr.bf16.mxu0 0
        %2268 = vmatpush1.bf16.msra.mxu0 0
        %2269 = vmatprep.subr.bf16.mxu0 0
        %2270 = vmatpush1.bf16.msra.mxu0 0
        %2271 = vmatprep.subr.bf16.mxu0 0
        %2272 = vmatpush1.bf16.msra.mxu0 0
        %2273 = vmatprep.subr.bf16.mxu0 0
        %2274 = vmatpush1.bf16.msra.mxu0 0
        %2275 = vmatprep.subr.bf16.mxu0 0
        %2276 = vmatpush1.bf16.msra.mxu0 0
        %2277 = vmatprep.subr.bf16.mxu0 0
        %2278 = vmatpush1.bf16.msra.mxu0 0
        %2279 = vmatprep.subr.bf16.mxu0 0
        %2280 = vmatpush1.bf16.msra.mxu0 0
        %2281 = vmatprep.subr.bf16.mxu0 0
        %2282 = vmatpush1.bf16.msra.mxu0 0
        %2283 = vmatprep.subr.bf16.mxu0 0
        %2284 = vmatpush1.bf16.msra.mxu0 0
        %2285 = vmatprep.subr.bf16.mxu0 0
        %2286 = vmatpush1.bf16.msra.mxu0 0
        %2287 = vmatprep.subr.bf16.mxu0 0
        %2288 = vmatpush1.bf16.msra.mxu0 0
        %2289 = vmatprep.subr.bf16.mxu0 0
        %2290 = vmatpush1.bf16.msra.mxu0 0
        %2291 = vmatprep.subr.bf16.mxu0 0
        %2292 = vmatpush1.bf16.msra.mxu0 0
        %2293 = vmatprep.subr.bf16.mxu0 0
        %2294 = vmatpush1.bf16.msra.mxu0 0
        %2295 = vmatprep.mubr.bf16.mxu0 0
        %2296 = vmatmul.mubr.bf16.gmra.mrb[0].mxu0 %v2258
        %v2297 = vpop.f32.mrb[0].mxu0
        %v2298 = vadd.f32 0.0, %v2297
        %v2299 = vpop.f32.mrb[0].mxu0
        %v2300 = vpop.f32.mrb[0].mxu0
        %v2301 = vpop.f32.mrb[0].mxu0
        %2302 = vdwg.mxu0
        %v2303 = vpack.c.bf16 %v2298, %v2298
        %v2305 = vsel %vm912, %v2303, 0
        %v2308 = vsel %vm980, %v1595, 0
        %2310 = vmatprep.subr.bf16.mxu0 0
        %2311 = vmatpush1.bf16.msra.mxu0 %v2308
        %2312 = vmatprep.subr.bf16.mxu0 0
        %2313 = vmatpush1.bf16.msra.mxu0 0
        %2314 = vmatprep.subr.bf16.mxu0 0
        %2315 = vmatpush1.bf16.msra.mxu0 0
        %2316 = vmatprep.subr.bf16.mxu0 0
        %2317 = vmatpush1.bf16.msra.mxu0 0
        %2318 = vmatprep.subr.bf16.mxu0 0
        %2319 = vmatpush1.bf16.msra.mxu0 0
        %2320 = vmatprep.subr.bf16.mxu0 0
        %2321 = vmatpush1.bf16.msra.mxu0 0
        %2322 = vmatprep.subr.bf16.mxu0 0
        %2323 = vmatpush1.bf16.msra.mxu0 0
        %2324 = vmatprep.subr.bf16.mxu0 0
        %2325 = vmatpush1.bf16.msra.mxu0 0
        %2326 = vmatprep.subr.bf16.mxu0 0
        %2327 = vmatpush1.bf16.msra.mxu0 0
        %2328 = vmatprep.subr.bf16.mxu0 0
        %2329 = vmatpush1.bf16.msra.mxu0 0
        %2330 = vmatprep.subr.bf16.mxu0 0
        %2331 = vmatpush1.bf16.msra.mxu0 0
        %2332 = vmatprep.subr.bf16.mxu0 0
        %2333 = vmatpush1.bf16.msra.mxu0 0
        %2334 = vmatprep.subr.bf16.mxu0 0
        %2335 = vmatpush1.bf16.msra.mxu0 0
        %2336 = vmatprep.subr.bf16.mxu0 0
        %2337 = vmatpush1.bf16.msra.mxu0 0
        %2338 = vmatprep.subr.bf16.mxu0 0
        %2339 = vmatpush1.bf16.msra.mxu0 0
        %2340 = vmatprep.subr.bf16.mxu0 0
        %2341 = vmatpush1.bf16.msra.mxu0 0
        %2342 = vmatprep.mubr.bf16.mxu0 0
        %2343 = vmatmul.mubr.bf16.gmra.mrb[0].mxu0 %v2305
        %v2344 = vpop.f32.mrb[0].mxu0
        %v2345 = vadd.f32 0.0, %v2344
        %v2346 = vpop.f32.mrb[0].mxu0
        %v2347 = vpop.f32.mrb[0].mxu0
        %v2348 = vpop.f32.mrb[0].mxu0
        %2349 = vdwg.mxu0
        %v2350 = vadd.f32 %v2189, %v2345
        %v2351 = vlaneseq
        %v2352 = vshrl.u32 %v2351, 7
        %v2353 = vsub.s32 3, %v2352
        %v2354 = vrot.slane %v786, %v2353
        %v2355 = vadd.f32 %v2350, %v2354
        %v2356 = vadd.f32 %v2355, %v1583
        %v2357 = vsel %vm813, %v2356, 0.0
        %2358 = vadd.xlane.f32.xlu0 %v2357
        %v2359 = vpop.xlane.xlu0 %2358
        %v2360 = vmul.f32 %v2359, %v1563
        %v2361 = vsub.f32 %v2356, %v2360
        %v2362 = vmul.f32 %v2361, %v2361
        %v2363 = vsel %vm813, %v2362, 0.0
        %2364 = vadd.xlane.f32.xlu0 %v2363
        %v2365 = vpop.xlane.xlu0 %2364
        %v2366 = vmul.f32 %v2365, %v1563
        %v2367 = vadd.f32 %v2366, 1e-05
        %v2368 = vrsqrt.pop %v2367
        %v2369 = vmul.f32 %v2361, %v2368
        %v2370 = vlaneseq
        %v2371 = vshrl.u32 %v2370, 7
        %v2372 = vsub.s32 4, %v2371
        %v2373 = vrot.slane %v786, %v2372
        %v2374 = vmul.f32 %v2369, %v2373
        %v2375 = vlaneseq
        %v2376 = vshrl.u32 %v2375, 7
        %v2377 = vsub.s32 5, %v2376
        %v2378 = vrot.slane %v786, %v2377
        %v2379 = vadd.f32 %v2374, %v2378
        %v2380 = vpack.c.bf16 %v2379, %v2379
        %v2381 = vld [vmem:[%s760] sm:$0xf]
        %v2382 = vld [vmem:[%s760 + $0x4] sm:$0xf]
        %v2383 = vld [vmem:[%s760 + $0x8] sm:$0xf]
        %v2384 = vld [vmem:[%s760 + $0xc] sm:$0xf]
        %v2385 = vld [vmem:[%s768] sm:$0x1]
        %v2387 = vlaneseq
        %v2388 = vshrl.u32 %v2387, 7
        %v2389 = vsub.s32 0, %v2388
        %v2390 = vrot.slane %v2385, %v2389
        %v2396 = vunpack.c.l.b16 %v2381
        %v2397 = vunpack.c.l.b16 %v2382
        %v2398 = vunpack.c.l.b16 %v2383
        %v2399 = vunpack.c.l.b16 %v2384
        %v2400 = vpack.c.b16 %v2397, %v2396
        %v2401 = vpack.c.b16 %v2399, %v2398
        %v2405 = vsel %vm813, %v2380, 0
        %2407 = vmatprep.subr.bf16.mxu0 0
        %2408 = vmatpush1.bf16.msra.mxu0 %v2400
        %2409 = vmatprep.subr.bf16.mxu0 0
        %2410 = vmatpush1.bf16.msra.mxu0 %v2401
        %2411 = vmatprep.subr.bf16.mxu0 0
        %2412 = vmatpush1.bf16.msra.mxu0 0
        %2413 = vmatprep.subr.bf16.mxu0 0
        %2414 = vmatpush1.bf16.msra.mxu0 0
        %2415 = vmatprep.subr.bf16.mxu0 0
        %2416 = vmatpush1.bf16.msra.mxu0 0
        %2417 = vmatprep.subr.bf16.mxu0 0
        %2418 = vmatpush1.bf16.msra.mxu0 0
        %2419 = vmatprep.subr.bf16.mxu0 0
        %2420 = vmatpush1.bf16.msra.mxu0 0
        %2421 = vmatprep.subr.bf16.mxu0 0
        %2422 = vmatpush1.bf16.msra.mxu0 0
        %2423 = vmatprep.subr.bf16.mxu0 0
        %2424 = vmatpush1.bf16.msra.mxu0 0
        %2425 = vmatprep.subr.bf16.mxu0 0
        %2426 = vmatpush1.bf16.msra.mxu0 0
        %2427 = vmatprep.subr.bf16.mxu0 0
        %2428 = vmatpush1.bf16.msra.mxu0 0
        %2429 = vmatprep.subr.bf16.mxu0 0
        %2430 = vmatpush1.bf16.msra.mxu0 0
        %2431 = vmatprep.subr.bf16.mxu0 0
        %2432 = vmatpush1.bf16.msra.mxu0 0
        %2433 = vmatprep.subr.bf16.mxu0 0
        %2434 = vmatpush1.bf16.msra.mxu0 0
        %2435 = vmatprep.subr.bf16.mxu0 0
        %2436 = vmatpush1.bf16.msra.mxu0 0
        %2437 = vmatprep.subr.bf16.mxu0 0
        %2438 = vmatpush1.bf16.msra.mxu0 0
        %2439 = vmatprep.mubr.bf16.mxu0 0
        %2440 = vmatmul.mubr.bf16.gmra.mrb[0].mxu0 %v2405
        %v2441 = vpop.f32.mrb[0].mxu0
        %v2442 = vadd.f32 %v2390, %v2441
        %v2443 = vpop.f32.mrb[0].mxu0
        %v2444 = vpop.f32.mrb[0].mxu0
        %v2445 = vpop.f32.mrb[0].mxu0
        %2446 = vdwg.mxu0
        %v2447 = vmax.f32 %v2442, 0.0
        %v2448 = vpack.c.bf16 %v2447, %v2447
        %v2449 = vld [vmem:[%s765] sm:$0xf]
        %v2450 = vld [vmem:[%s765 + $0x4] sm:$0xf]
        %v2451 = vld [vmem:[%s765 + $0x8] sm:$0xf]
        %v2452 = vld [vmem:[%s765 + $0xc] sm:$0xf]
        %v2453 = vld [vmem:[%s765 + $0x10] sm:$0xf]
        %v2454 = vld [vmem:[%s765 + $0x14] sm:$0xf]
        %v2455 = vld [vmem:[%s765 + $0x18] sm:$0xf]
        %v2456 = vld [vmem:[%s765 + $0x1c] sm:$0xf]
        %v2457 = vlaneseq
        %v2458 = vshrl.u32 %v2457, 7
        %v2459 = vsub.s32 6, %v2458
        %v2460 = vrot.slane %v786, %v2459
        %v2469 = vunpack.c.l.b16 %v2449
        %v2470 = vunpack.c.l.b16 %v2450
        %v2471 = vunpack.c.l.b16 %v2451
        %v2472 = vunpack.c.l.b16 %v2452
        %v2473 = vunpack.c.l.b16 %v2453
        %v2474 = vunpack.c.l.b16 %v2454
        %v2475 = vunpack.c.l.b16 %v2455
        %v2476 = vunpack.c.l.b16 %v2456
        %v2477 = vpack.c.b16 %v2470, %v2469
        %v2478 = vpack.c.b16 %v2472, %v2471
        %v2479 = vpack.c.b16 %v2474, %v2473
        %v2480 = vpack.c.b16 %v2476, %v2475
        %vm2485 = vcmask 523264
        %v2487 = vsel %vm2485, %v2448, 0
        %2489 = vmatprep.subr.bf16.mxu0 0
        %2490 = vmatpush1.bf16.msra.mxu0 %v2477
        %2491 = vmatprep.subr.bf16.mxu0 0
        %2492 = vmatpush1.bf16.msra.mxu0 %v2478
        %2493 = vmatprep.subr.bf16.mxu0 0
        %2494 = vmatpush1.bf16.msra.mxu0 %v2479
        %2495 = vmatprep.subr.bf16.mxu0 0
        %2496 = vmatpush1.bf16.msra.mxu0 %v2480
        %2497 = vmatprep.subr.bf16.mxu0 0
        %2498 = vmatpush1.bf16.msra.mxu0 0
        %2499 = vmatprep.subr.bf16.mxu0 0
        %2500 = vmatpush1.bf16.msra.mxu0 0
        %2501 = vmatprep.subr.bf16.mxu0 0
        %2502 = vmatpush1.bf16.msra.mxu0 0
        %2503 = vmatprep.subr.bf16.mxu0 0
        %2504 = vmatpush1.bf16.msra.mxu0 0
        %2505 = vmatprep.subr.bf16.mxu0 0
        %2506 = vmatpush1.bf16.msra.mxu0 0
        %2507 = vmatprep.subr.bf16.mxu0 0
        %2508 = vmatpush1.bf16.msra.mxu0 0
        %2509 = vmatprep.subr.bf16.mxu0 0
        %2510 = vmatpush1.bf16.msra.mxu0 0
        %2511 = vmatprep.subr.bf16.mxu0 0
        %2512 = vmatpush1.bf16.msra.mxu0 0
        %2513 = vmatprep.subr.bf16.mxu0 0
        %2514 = vmatpush1.bf16.msra.mxu0 0
        %2515 = vmatprep.subr.bf16.mxu0 0
        %2516 = vmatpush1.bf16.msra.mxu0 0
        %2517 = vmatprep.subr.bf16.mxu0 0
        %2518 = vmatpush1.bf16.msra.mxu0 0
        %2519 = vmatprep.subr.bf16.mxu0 0
        %2520 = vmatpush1.bf16.msra.mxu0 0
        %2521 = vmatprep.mubr.bf16.mxu0 0
        %2522 = vmatmul.mubr.bf16.gmra.mrb[0].mxu0 %v2487
        %v2523 = vpop.f32.mrb[0].mxu0
        %v2524 = vadd.f32 %v2460, %v2523
        %v2525 = vpop.f32.mrb[0].mxu0
        %v2526 = vpop.f32.mrb[0].mxu0
        %v2527 = vpop.f32.mrb[0].mxu0
        %2528 = vdwg.mxu0
        %v2529 = vadd.f32 %v2524, %v2379
        %v2530 = vsel %vm813, %v2529, 0.0
        %2531 = vadd.xlane.f32.xlu0 %v2530
        %v2532 = vpop.xlane.xlu0 %2531
        %v2533 = vmul.f32 %v2532, %v1563
        %v2534 = vsub.f32 %v2529, %v2533
        %v2535 = vmul.f32 %v2534, %v2534
        %v2536 = vsel %vm813, %v2535, 0.0
        %2537 = vadd.xlane.f32.xlu0 %v2536
        %v2538 = vpop.xlane.xlu0 %2537
        %v2539 = vmul.f32 %v2538, %v1563
        %v2540 = vadd.f32 %v2539, 1e-05
        %v2541 = vrsqrt.pop %v2540
        %v2542 = vmul.f32 %v2534, %v2541
        %v2543 = vlaneseq
        %v2544 = vshrl.u32 %v2543, 7
        %v2545 = vsub.s32 7, %v2544
        %v2546 = vrot.slane %v786, %v2545
        %v2547 = vmul.f32 %v2542, %v2546
        %v2548 = vlaneseq
        %v2549 = vshrl.u32 %v2548, 7
        %v2550 = vsub.s32 0, %v2549
        %v2551 = vrot.slane %v787, %v2550
        %v2552 = vadd.f32 %v2547, %v2551
        %2553 = vst.msk [vmem:[#allocation2] sm:$0xff] %vm813, %v2552
        %p2554 = scmp.eq.s32.totalorder %s35, 1
        // Predicated region
        $region89: #{decoder_forward.1} parent=83 // pred_check
          %p2555 = pneg %p2554
        $region90: #{decoder_forward.1} parent=83 // pred_check_branch
          %2557 = sbr.rel (%p2555) target = $region92
        $region91: #{decoder_forward.1} parent=83 // pred_region
          %v2558 = vpack.c.bf16 %v2552, %v2552
          %v2559 = vld [vmem:[%s14] sm:$0xf]
          %v2560 = vld [vmem:[%s14 + $0x4] sm:$0xf]
          %v2561 = vld [vmem:[%s14 + $0x8] sm:$0xf]
          %v2562 = vld [vmem:[%s14 + $0xc] sm:$0xf]
          %v2563 = vld [vmem:[%s15] sm:$0x1]
          %v2565 = vlaneseq
          %v2566 = vshrl.u32 %v2565, 7
          %v2567 = vsub.s32 0, %v2566
          %v2568 = vrot.slane %v2563, %v2567
          %v2574 = vunpack.c.l.b16 %v2559
          %v2575 = vunpack.c.l.b16 %v2560
          %v2576 = vunpack.c.l.b16 %v2561
          %v2577 = vunpack.c.l.b16 %v2562
          %v2578 = vpack.c.b16 %v2575, %v2574
          %v2579 = vpack.c.b16 %v2577, %v2576
          %v2583 = vsel %vm813, %v2558, 0
          %2585 = vmatprep.subr.bf16.mxu0 0
          %2586 = vmatpush1.bf16.msra.mxu0 %v2578
          %2587 = vmatprep.subr.bf16.mxu0 0
          %2588 = vmatpush1.bf16.msra.mxu0 %v2579
          %2589 = vmatprep.subr.bf16.mxu0 0
          %2590 = vmatpush1.bf16.msra.mxu0 0
          %2591 = vmatprep.subr.bf16.mxu0 0
          %2592 = vmatpush1.bf16.msra.mxu0 0
          %2593 = vmatprep.subr.bf16.mxu0 0
          %2594 = vmatpush1.bf16.msra.mxu0 0
          %2595 = vmatprep.subr.bf16.mxu0 0
          %2596 = vmatpush1.bf16.msra.mxu0 0
          %2597 = vmatprep.subr.bf16.mxu0 0
          %2598 = vmatpush1.bf16.msra.mxu0 0
          %2599 = vmatprep.subr.bf16.mxu0 0
          %2600 = vmatpush1.bf16.msra.mxu0 0
          %2601 = vmatprep.subr.bf16.mxu0 0
          %2602 = vmatpush1.bf16.msra.mxu0 0
          %2603 = vmatprep.subr.bf16.mxu0 0
          %2604 = vmatpush1.bf16.msra.mxu0 0
          %2605 = vmatprep.subr.bf16.mxu0 0
          %2606 = vmatpush1.bf16.msra.mxu0 0
          %2607 = vmatprep.subr.bf16.mxu0 0
          %2608 = vmatpush1.bf16.msra.mxu0 0
          %2609 = vmatprep.subr.bf16.mxu0 0
          %2610 = vmatpush1.bf16.msra.mxu0 0
          %2611 = vmatprep.subr.bf16.mxu0 0
          %2612 = vmatpush1.bf16.msra.mxu0 0
          %2613 = vmatprep.subr.bf16.mxu0 0
          %2614 = vmatpush1.bf16.msra.mxu0 0
          %2615 = vmatprep.subr.bf16.mxu0 0
          %2616 = vmatpush1.bf16.msra.mxu0 0
          %2617 = vmatprep.mubr.bf16.mxu0 0
          %2618 = vmatmul.mubr.bf16.gmra.mrb[0].mxu0 %v2583
          %v2619 = vpop.f32.mrb[0].mxu0
          %v2620 = vadd.f32 %v2568, %v2619
          %v2621 = vpop.f32.mrb[0].mxu0
          %v2622 = vpop.f32.mrb[0].mxu0
          %v2623 = vpop.f32.mrb[0].mxu0
          %2624 = vdwg.mxu0
          %2625 = vst [vmem:[%s709] sm:$0xff] %v2620
        $region92: #{decoder_forward.1} parent=83 // pred_fallthru
          _
        %s2626 = sand.u32 %s456, 1
        %s2627 = scalar_lea.sflag [#allocation4], %s2626
        %s2628 = sand.u32 %s456, 1
        %s2629 = smul.addr %s2628, 8
        %s2630 = scalar_lea.vmem [#allocation3], %s2629
        // Predicated region
        $region93: #{decoder_forward.1} parent=83 // pred_check
          %p2631 = pneg %p466
        $region94: #{decoder_forward.1} parent=83 // pred_check_branch
          %2633 = sbr.rel (%p2631) target = $region96
        $region95: #{decoder_forward.1} parent=83 // pred_region
          %s2635 = ssub.s32 128, 128
          %2636 = vsyncadd %s2627, %s2635
          %s2637 = smul.addr %s34, 128
          %s2638 = scalar_lea.hbm %s16, %s2637
          %s2640 = sshll.u32 %s2630, 4
          %s2641 = int_to_ptr.vmem [resolvable:$true] %s2640
          %2643 = dma.vmem_to_hbm [thread:$0]  %s2641, 128, %s2638, %s2627
        $region96: #{decoder_forward.1} parent=83 // pred_fallthru
          _
      $region84: #{decoder_forward.1} parent=5 // pred_fallthru
        _
      %p2644 = scmp.le.s32.totalorder 2, %s25
      // Predicated region
      $region97: #{decoder_forward.1} parent=5 // pred_check
        %p2645 = pneg %p2644
      $region98: #{decoder_forward.1} parent=5 // pred_check_branch
        %2647 = sbr.rel (%p2645) target = $region100
      $region99: #{decoder_forward.1} parent=5 // pred_region
        %s2648 = ssub.s32 %s25, 2
        // Predicated region
        $region101: #{decoder_forward.1} parent=99 // pred_check
          %p2649 = pneg %p472
        $region102: #{decoder_forward.1} parent=99 // pred_check_branch
          %2651 = sbr.rel (%p2649) target = $region104
        $region103: #{decoder_forward.1} parent=99 // pred_region
          %s2652 = sand.u32 %s457, 1
          %s2653 = scalar_lea.sflag [#allocation4], %s2652
          %s2654 = sand.u32 %s457, 1
          %s2655 = smul.addr %s2654, 8
          %s2656 = scalar_lea.vmem [#allocation3], %s2655
          %2657 = dma.done %s2653, 128
        $region104: #{decoder_forward.1} parent=99 // pred_fallthru
          _
      $region100: #{decoder_forward.1} parent=5 // pred_fallthru
        _
    $region6: #{decoder_forward.1} parent=1 // loop_footer
      %s29 = sadd.s32 1, %s25
    $region7: #{decoder_forward.1} parent=1 // loop_footer_branch
      %24 = sbr.rel target = $region3
    $region8: #{decoder_forward.1} parent=1 // loop_exit
      _
    %2658 = vsyncpa [#allocation4], 1
    %s2659 = scalar_lea.sflag [#allocation4], 1
    %2660 = vsyncpa %s2659, 1

</llo_original>
